<compile_context>
chip_gen: v6e
topology: v6e:2x2x1
jax: 0.10.0
libtpu: 0.0.40
codegen_flags: <defaults>
</compile_context>

<pallas_src>
import numpy as np
import jax
import jax.numpy as jnp
from jax import lax
from jax.experimental import pallas as pl
from jax.experimental.pallas import tpu as pltpu

PATCH = 17
REAL_D = PATCH ** 3                       # 4913 voxels per patch
D2_REAL = 2 * REAL_D                      # 9826: [fixed | moving] packed contiguously
D2_PAD = ((D2_REAL + 127) // 128) * 128   # 9856: single lane-pad of the concat axis
HID = 32                                  # surrogate model hidden width
TILE_N_MAX = 512                          # max patches per grid step (mult of 16 for
                                          #   bf16 sublane packing).  512 keeps the
                                          #   double-buffered stream (~20 MiB) inside
                                          #   v7x's 64 MiB VMEM; v5e/v6e could go to
                                          #   1024 but gains are only ~5%.
THRESH = 0.5                              # zero_percentage_threshold


def _round_up(x, m):
    return ((x + m - 1) // m) * m


def _num_core_splits():
    # v7x has 2 TensorCores per chip; v5e/v6e have 1.  A size-2 "parallel"
    # leading axis is pure padding overhead on single-TC parts, so only use
    # it on v7x.
    # TODO(synk): on v7x, verify the "parallel" axis actually shards across
    #   both TCs; if not, switch to pltpu.CORE_PARALLEL / pl.core_map.
    try:
        kind = jax.devices()[0].device_kind.lower()
    except Exception:
        return 1
    return 2 if ("v7" in kind or "tpu7" in kind) else 1


# ----------------------------------------------------------------------------
# Host glue: exact re-implementation of mask_to_3d_bbox / extract_patches
# (data-dependent shapes -> plain numpy outside the kernel).
# ----------------------------------------------------------------------------
def mask_to_3d_bbox_np(mask):
    mask = np.squeeze(mask)
    z, y, x = np.nonzero(mask != 0)
    return (int(x.min()), int(y.min()), int(z.min()),
            int(x.max()), int(y.max()), int(z.max()))


def extract_patches_np(vol, mask, size=PATCH):
    # vol: (1, 1, D, H, W) numpy
    x_min, y_min, z_min, x_max, y_max, z_max = mask_to_3d_bbox_np(mask)
    t = vol[:, :, z_min:z_max, y_min:y_max, x_min:x_max]   # exclusive max, as in torch code
    pads = []
    for dim_size in t.shape[2:]:
        rem = dim_size % size
        p = (size - rem) if rem != 0 else 0
        # torch builds [lo, hi] per dim, reverses the flat list and calls F.pad,
        # which swaps lo/hi per dim -> effective pad per dim is (p - p//2, p//2).
        pads.append((p - p // 2, p // 2))
    padded = np.pad(t, ((0, 0), (0, 0), pads[0], pads[1], pads[2]), mode="constant")
    _, _, Dz, Dy, Dx = padded.shape
    nz, ny, nx = Dz // size, Dy // size, Dx // size
    p = padded.reshape(1, 1, nz, size, ny, size, nx, size)
    p = p.transpose(0, 1, 2, 4, 6, 3, 5, 7)                # (1,1,nz,ny,nx,s,s,s)
    return p.reshape(-1, size * size * size).astype(np.float32)  # (N, 4913)


# ----------------------------------------------------------------------------
# Pallas kernel: surrogate DMMR MLP + running sum over valid rows.
# ----------------------------------------------------------------------------
def dmmr_kernel(nk_ref, pm_ref, w1_ref, b1_ref, w2_ref, b2_ref, out_ref, sum_ref):
    c = pl.program_id(0)
    i = pl.program_id(1)

    @pl.when(i == 0)
    def _():
        sum_ref[...] = jnp.zeros_like(sum_ref)

    tile_n = pm_ref.shape[0]
    pm = pm_ref[...]                                       # (tile_n, D2_PAD) bf16

    # surrogate DMMR network: 2-layer tanh MLP on concat(fixed, moving)
    h = jnp.tanh(jnp.dot(pm, w1_ref[...],
                         preferred_element_type=jnp.float32)
                 + b1_ref[...])                            # (tile_n, HID) f32
    o = jnp.tanh(jnp.sum(h * w2_ref[...], axis=-1, keepdims=True)
                 + b2_ref[...])                            # (tile_n, 1) f32

    # rows >= n_kept are host-side padding; mask them via the global row index
    base = (c * pl.num_programs(1) + i) * tile_n
    row = base + lax.broadcasted_iota(jnp.int32, (tile_n, 1), 0)
    valid = (row < nk_ref[0]).astype(jnp.float32)

    # one cross-sublane reduce per step into a tiny (1,1) accumulator
    sum_ref[...] = sum_ref[...] + jnp.sum(o * valid)

    @pl.when(i == pl.num_programs(1) - 1)
    def _():
        out_ref[...] = jnp.full(out_ref.shape, jnp.sum(sum_ref[...]), jnp.float32)


def dmmr_pallas(pm_pad, n_kept, tile_n, num_splits, params):
    w1, b1, w2, b2 = params
    n_pad, d2 = pm_pad.shape
    assert d2 == D2_PAD
    chunk = num_splits * tile_n
    assert n_pad % chunk == 0
    n_inner = n_pad // chunk

    nk = jnp.asarray([n_kept], jnp.int32)

    partials = pl.pallas_call(
        dmmr_kernel,
        out_shape=jax.ShapeDtypeStruct((num_splits, 8, 128), jnp.float32),
        grid_spec=pltpu.PrefetchScalarGridSpec(
            num_scalar_prefetch=1,
            grid=(num_splits, n_inner),
            in_specs=[
                pl.BlockSpec((tile_n, D2_PAD),
                             lambda c, i, nk_ref: (c * n_inner + i, 0)),    # patch stream
                pl.BlockSpec((D2_PAD, HID), lambda c, i, nk_ref: (0, 0)),   # W1
                pl.BlockSpec((1, HID), lambda c, i, nk_ref: (0, 0)),        # b1
                pl.BlockSpec((1, HID), lambda c, i, nk_ref: (0, 0)),        # w2
                pl.BlockSpec((1, 1), lambda c, i, nk_ref: (0, 0)),          # b2
            ],
            out_specs=pl.BlockSpec((None, 8, 128), lambda c, i, nk_ref: (c, 0, 0)),
            scratch_shapes=[pltpu.VMEM((1, 1), jnp.float32)],               # running sum
        ),
        compiler_params=pltpu.CompilerParams(
            dimension_semantics=("parallel", "arbitrary"),
            vmem_limit_bytes=40 * 1024 * 1024),
    )(nk, pm_pad, w1, b1, w2, b2)

    total = jnp.sum(partials[:, 0, 0])
    # guard: if everything is filtered out, return 0 instead of NaN
    return total / jnp.float32(max(n_kept, 1))


# ----------------------------------------------------------------------------
# Full DMMRLoss.forward equivalent.
# ----------------------------------------------------------------------------
def dmmr_loss(source, target, params, patch_size=PATCH, threshold=THRESH):
    src = np.asarray(source, dtype=np.float32)
    tgt = np.asarray(target, dtype=np.float32)

    binary_mask = (tgt > 0).astype(np.float32)
    fixed = extract_patches_np(tgt, binary_mask, patch_size)    # (N, 4913)
    moving = extract_patches_np(src, binary_mask, patch_size)   # (N, 4913)

    # keep mask (zero-fraction of the fixed patch) computed AND applied on the
    # host: filtered patches never cost H2D / HBM bytes.
    keep = (fixed == 0).mean(axis=1) <= threshold
    fixed_kept = fixed[keep]
    moving_kept = moving[keep]
    n_kept = int(fixed_kept.shape[0])

    num_splits = _num_core_splits()
    # shrink the tile for small patch counts (avoids dead padding traffic)
    tile_n = max(16, min(TILE_N_MAX, _round_up(max(n_kept, 1), 16)))
    chunk = num_splits * tile_n
    n_pad = _round_up(max(n_kept, 1), chunk)

    # single contiguous [fixed | moving] stream, built directly in bf16 on the
    # host (half the transfer bytes, no device-side cast pass).
    pm = np.zeros((n_pad, D2_PAD), dtype=jnp.bfloat16)
    pm[:n_kept, :REAL_D] = fixed_kept.astype(jnp.bfloat16)
    pm[:n_kept, REAL_D:D2_REAL] = moving_kept.astype(jnp.bfloat16)

    loss = dmmr_pallas(jnp.asarray(pm), n_kept, tile_n, num_splits, params)
    return loss, fixed, moving


def init_dmmr_params(key):
    k1, k2, k3, k4 = jax.random.split(key, 4)
    w1 = jax.random.normal(k1, (D2_PAD, HID), jnp.float32) * 0.01
    # zero the rows corresponding to the lane padding of the concat axis
    row_mask = np.zeros((D2_PAD, 1), np.float32)
    row_mask[:D2_REAL] = 1.0
    w1 = (w1 * jnp.asarray(row_mask)).astype(jnp.bfloat16)   # bf16 for the MXU
    b1 = jax.random.normal(k2, (1, HID), jnp.float32) * 0.01
    w2 = jax.random.normal(k3, (1, HID), jnp.float32) * 0.1
    b2 = jax.random.normal(k4, (1, 1), jnp.float32) * 0.01
    return w1, b1, w2, b2


def reference_loss(fixed, moving, params, threshold=THRESH):
    w1_bf, b1, w2, b2 = params
    w1 = np.asarray(jnp.asarray(w1_bf).astype(jnp.float32))
    b1 = np.asarray(b1); w2 = np.asarray(w2); b2 = np.asarray(b2)

    keep = (fixed == 0).mean(axis=1) <= threshold
    f = fixed[keep].astype(jnp.bfloat16).astype(np.float32)
    m = moving[keep].astype(jnp.bfloat16).astype(np.float32)

    h = np.tanh(f @ w1[:REAL_D] + m @ w1[REAL_D:D2_REAL] + b1)
    o = np.tanh((h * w2).sum(-1, keepdims=True) + b2)
    return float(o.mean())


if __name__ == "__main__":
    key = jax.random.PRNGKey(0)
    k_src, k_tgt, k_w = jax.random.split(key, 3)

    # small 3D volumes in NCDHW (strictly-positive target -> bbox spans volume)
    D = 40
    source = jax.random.uniform(k_src, (1, 1, D, D, D), jnp.float32,
                                minval=-0.5, maxval=1.0)
    target = jax.random.uniform(k_tgt, (1, 1, D, D, D), jnp.float32,
                                minval=0.1, maxval=1.0)

    params = init_dmmr_params(k_w)

    loss, fixed, moving = dmmr_loss(source, target, params)
    loss = jax.block_until_ready(loss)

    ref = reference_loss(fixed, moving, params)
    np.testing.assert_allclose(float(loss), ref, rtol=1e-2, atol=1e-2)

    print("KERNEL_OK")
</pallas_src>

<mosaic_0001>
module attributes {stable_mosaic.version = 11 : i64} {
  func.func @dmmr_kernel(%arg0: i32, %arg1: i32, %arg2: memref<1xi32, #tpu.memory_space<smem>>, %arg3: memref<16x9856xbf16, #tpu.memory_space<vmem>>, %arg4: memref<9856x32xbf16, #tpu.memory_space<vmem>>, %arg5: memref<1x32xf32, #tpu.memory_space<vmem>>, %arg6: memref<1x32xf32, #tpu.memory_space<vmem>>, %arg7: memref<1x1xf32, #tpu.memory_space<vmem>>, %arg8: memref<1x8x128xf32, #tpu.memory_space<vmem>>, %arg9: memref<1x1xf32, #tpu.memory_space<vmem>>) attributes {dimension_semantics = [#tpu.dimension_semantics<parallel>, #tpu.dimension_semantics<arbitrary>], iteration_bounds = array<i64: 1, 1>, scalar_prefetch = 1 : i64, scratch_operands = 1 : i64, tpu.core_type = #tpu.core_type<tc>, window_params = [{transform_indices = @transform_0, window_bounds = array<i64: 16, 9856>}, {pipeline_mode = #tpu.pipeline_mode<synchronous>, transform_indices = @transform_1, window_bounds = array<i64: 9856, 32>}, {pipeline_mode = #tpu.pipeline_mode<synchronous>, transform_indices = @transform_2, window_bounds = array<i64: 1, 32>}, {pipeline_mode = #tpu.pipeline_mode<synchronous>, transform_indices = @transform_3, window_bounds = array<i64: 1, 32>}, {pipeline_mode = #tpu.pipeline_mode<synchronous>, transform_indices = @transform_4, window_bounds = array<i64: 1, 1>}, {transform_indices = @transform_5, window_bounds = array<i64: 1, 8, 128>}]} {
    %c0_i32 = arith.constant 0 : i32
    %0 = arith.cmpi eq, %arg1, %c0_i32 : i32
    %1 = arith.extui %0 : i1 to i32
    %c0_i32_0 = arith.constant 0 : i32
    %2 = arith.cmpi ne, %1, %c0_i32_0 : i32
    scf.if %2 {
      %cst_19 = arith.constant 0.000000e+00 : f32
      %42 = vector.broadcast %cst_19 : f32 to vector<1x1xf32>
      %c0_20 = arith.constant 0 : index
      %c0_21 = arith.constant 0 : index
      %43 = vector.load %arg9[%c0_20, %c0_21] : memref<1x1xf32, #tpu.memory_space<vmem>>, vector<1x1xf32>
      tpu.vector_store %arg9[%c0_20, %c0_21], %42 {strides = array<i32>} : memref<1x1xf32, #tpu.memory_space<vmem>>, vector<1x1xf32>,
    } else {
    }
    %c0 = arith.constant 0 : index
    %c0_1 = arith.constant 0 : index
    %3 = vector.load %arg3[%c0, %c0_1] : memref<16x9856xbf16, #tpu.memory_space<vmem>>, vector<16x9856xbf16>
    %c0_2 = arith.constant 0 : index
    %c0_3 = arith.constant 0 : index
    %4 = vector.load %arg4[%c0_2, %c0_3] : memref<9856x32xbf16, #tpu.memory_space<vmem>>, vector<9856x32xbf16>
    %cst = arith.constant dense<0.000000e+00> : vector<16x32xf32>
    %5 = tpu.matmul %3, %4, %cst {dimension_numbers = #tpu.dot_dimension_numbers<[1], [0], [0], [1], [0, 0, 1, 1], [], []>} : vector<16x9856xbf16>, vector<9856x32xbf16>, vector<16x32xf32> -> vector<16x32xf32>
    %c0_4 = arith.constant 0 : index
    %c0_5 = arith.constant 0 : index
    %6 = vector.load %arg5[%c0_4, %c0_5] : memref<1x32xf32, #tpu.memory_space<vmem>>, vector<1x32xf32>
    %7 = vector.broadcast %6 : vector<1x32xf32> to vector<16x32xf32>
    %8 = arith.addf %5, %7 : vector<16x32xf32>
    %9 = math.tanh %8 : vector<16x32xf32>
    %c0_6 = arith.constant 0 : index
    %c0_7 = arith.constant 0 : index
    %10 = vector.load %arg6[%c0_6, %c0_7] : memref<1x32xf32, #tpu.memory_space<vmem>>, vector<1x32xf32>
    %11 = vector.broadcast %10 : vector<1x32xf32> to vector<16x32xf32>
    %12 = arith.mulf %9, %11 : vector<16x32xf32>
    %cst_8 = arith.constant dense<0.000000e+00> : vector<16xf32>
    %13 = vector.multi_reduction <add>, %12, %cst_8 [1] : vector<16x32xf32> to vector<16xf32>
    %14 = vector.shape_cast %13 : vector<16xf32> to vector<16x1xf32>
    %c0_9 = arith.constant 0 : index
    %c0_10 = arith.constant 0 : index
    %15 = vector.load %arg7[%c0_9, %c0_10] : memref<1x1xf32, #tpu.memory_space<vmem>>, vector<1x1xf32>
    %16 = vector.broadcast %15 : vector<1x1xf32> to vector<16x1xf32>
    %17 = arith.addf %14, %16 : vector<16x1xf32>
    %18 = math.tanh %17 : vector<16x1xf32>
    %c1_i32 = arith.constant 1 : i32
    %19 = arith.muli %arg0, %c1_i32 : i32
    %20 = arith.addi %19, %arg1 : i32
    %c16_i32 = arith.constant 16 : i32
    %21 = arith.muli %20, %c16_i32 : i32
    %22 = tpu.iota {dimensions = array<i32: 0>} : vector<16x1xi32>
    %23 = vector.broadcast %21 : i32 to vector<16x1xi32>
    %24 = arith.addi %23, %22 : vector<16x1xi32>
    %c0_11 = arith.constant 0 : index
    %25 = memref.load %arg2[%c0_11] : memref<1xi32, #tpu.memory_space<smem>>
    %26 = vector.broadcast %25 : i32 to vector<16x1xi32>
    %27 = arith.cmpi slt, %24, %26 : vector<16x1xi32>
    %28 = arith.extui %27 : vector<16x1xi1> to vector<16x1xi32>
    %29 = arith.sitofp %28 : vector<16x1xi32> to vector<16x1xf32>
    %c0_12 = arith.constant 0 : index
    %c0_13 = arith.constant 0 : index
    %30 = vector.load %arg9[%c0_12, %c0_13] : memref<1x1xf32, #tpu.memory_space<vmem>>, vector<1x1xf32>
    %31 = arith.mulf %18, %29 : vector<16x1xf32>
    %32 = vector.shape_cast %31 : vector<16x1xf32> to vector<1x16x1xf32>
    %cst_14 = arith.constant dense<0.000000e+00> : vector<1xf32>
    %33 = vector.multi_reduction <add>, %32, %cst_14 [1, 2] : vector<1x16x1xf32> to vector<1xf32>
    %34 = vector.shape_cast %33 : vector<1xf32> to vector<1x1x1xf32>
    %35 = vector.extract %34[0, 0, 0] : f32 from vector<1x1x1xf32>
    %36 = vector.broadcast %35 : f32 to vector<1x1xf32>
    %37 = arith.addf %30, %36 : vector<1x1xf32>
    %c0_15 = arith.constant 0 : index
    %c0_16 = arith.constant 0 : index
    %38 = vector.load %arg9[%c0_15, %c0_16] : memref<1x1xf32, #tpu.memory_space<vmem>>, vector<1x1xf32>
    tpu.vector_store %arg9[%c0_15, %c0_16], %37 {strides = array<i32>} : memref<1x1xf32, #tpu.memory_space<vmem>>, vector<1x1xf32>,
    %c0_i32_17 = arith.constant 0 : i32
    %39 = arith.cmpi eq, %arg1, %c0_i32_17 : i32
    %40 = arith.extui %39 : i1 to i32
    %c0_i32_18 = arith.constant 0 : i32
    %41 = arith.cmpi ne, %40, %c0_i32_18 : i32
    scf.if %41 {
      %c0_19 = arith.constant 0 : index
      %c0_20 = arith.constant 0 : index
      %42 = vector.load %arg9[%c0_19, %c0_20] : memref<1x1xf32, #tpu.memory_space<vmem>>, vector<1x1xf32>
      %43 = vector.shape_cast %42 : vector<1x1xf32> to vector<1x1x1xf32>
      %cst_21 = arith.constant dense<0.000000e+00> : vector<1xf32>
      %44 = vector.multi_reduction <add>, %43, %cst_21 [1, 2] : vector<1x1x1xf32> to vector<1xf32>
      %45 = vector.shape_cast %44 : vector<1xf32> to vector<1x1x1xf32>
      %46 = vector.extract %45[0, 0, 0] : f32 from vector<1x1x1xf32>
      %47 = vector.broadcast %46 : f32 to vector<8x128xf32>
      %c0_22 = arith.constant 0 : index
      %c0_23 = arith.constant 0 : index
      %c0_24 = arith.constant 0 : index
      %48 = vector.load %arg8[%c0_22, %c0_23, %c0_24] : memref<1x8x128xf32, #tpu.memory_space<vmem>>, vector<1x8x128xf32>
      %49 = vector.shape_cast %48 : vector<1x8x128xf32> to vector<8x128xf32>
      %50 = vector.shape_cast %47 : vector<8x128xf32> to vector<1x8x128xf32>
      tpu.vector_store %arg8[%c0_22, %c0_23, %c0_24], %50 {strides = array<i32>} : memref<1x8x128xf32, #tpu.memory_space<vmem>>, vector<1x8x128xf32>,
    } else {
    }
    return
  }
  func.func @transform_0(%arg0: i32, %arg1: i32, %arg2: memref<1xi32, #tpu.memory_space<smem>>) -> (i32, i32) {
    %c1_i32 = arith.constant 1 : i32
    %0 = arith.muli %arg0, %c1_i32 : i32
    %1 = arith.addi %0, %arg1 : i32
    %c0_i32 = arith.constant 0 : i32
    %c0_i32_0 = arith.constant 0 : i32
    return %1, %c0_i32 : i32, i32
  }
  func.func @transform_1(%arg0: i32, %arg1: i32, %arg2: memref<1xi32, #tpu.memory_space<smem>>) -> (i32, i32) {
    %c0_i32 = arith.constant 0 : i32
    %c0_i32_0 = arith.constant 0 : i32
    %c0_i32_1 = arith.constant 0 : i32
    return %c0_i32, %c0_i32_0 : i32, i32
  }
  func.func @transform_2(%arg0: i32, %arg1: i32, %arg2: memref<1xi32, #tpu.memory_space<smem>>) -> (i32, i32) {
    %c0_i32 = arith.constant 0 : i32
    %c0_i32_0 = arith.constant 0 : i32
    %c0_i32_1 = arith.constant 0 : i32
    return %c0_i32, %c0_i32_0 : i32, i32
  }
  func.func @transform_3(%arg0: i32, %arg1: i32, %arg2: memref<1xi32, #tpu.memory_space<smem>>) -> (i32, i32) {
    %c0_i32 = arith.constant 0 : i32
    %c0_i32_0 = arith.constant 0 : i32
    %c0_i32_1 = arith.constant 0 : i32
    return %c0_i32, %c0_i32_0 : i32, i32
  }
  func.func @transform_4(%arg0: i32, %arg1: i32, %arg2: memref<1xi32, #tpu.memory_space<smem>>) -> (i32, i32) {
    %c0_i32 = arith.constant 0 : i32
    %c0_i32_0 = arith.constant 0 : i32
    %c0_i32_1 = arith.constant 0 : i32
    return %c0_i32, %c0_i32_0 : i32, i32
  }
  func.func @transform_5(%arg0: i32, %arg1: i32, %arg2: memref<1xi32, #tpu.memory_space<smem>>) -> (i32, i32, i32) {
    %c0_i32 = arith.constant 0 : i32
    %c0_i32_0 = arith.constant 0 : i32
    %c0_i32_1 = arith.constant 0 : i32
    return %arg0, %c0_i32, %c0_i32_0 : i32, i32, i32
  }
}

</mosaic_0001>

<llo_original>
// kernel: tpu_custom_call.1
$region0: #{tpu_custom_call.1}
  #allocation0 [shape = 'u32[]', space=smem, size = 0x4, offset = 0x4, fixed_abs, tag = 'smem constant byte address 0x4 - core index']
  #allocation1 [shape = 'u32[144,128]{1,0:T(1,128)}', space=vmem, size = 0x12000, scoped, tag = 'internal scratch']
  #allocation2 [shape = 'f32[1,1]{1,0:T(1,128)}', space=vmem, size = 0x200, scoped, tag = 'scratch operand']
  #allocation3 [shape = 's32[1]{0}', space=sflag, size = 0x4, scoped, tag = 'scoped memory for tpu_custom_call.1']
  #allocation4 [shape = 's32[1]{0:T(128)S(6)}', space=smem, size = 0x200, scoped, tag = 'prefetched SMEM operand 0']
  #allocation5 [shape = 'f32[1,1]{1,0:T(1,128)S(1)}', space=vmem, size = 0x200, scoped, tag = 'scoped memory for tpu_custom_call.1']
  %s0 = inlined_call_operand.<no memory space> [shape: s32[1], index: 0, kind: input, shape index: {}]
  %s1 = inlined_call_operand.vmem [shape: bf16[16,9856], index: 1, kind: input, shape index: {}]
  %s2 = inlined_call_operand.vmem [shape: bf16[9856,32], index: 2, kind: input, shape index: {}]
  %s3 = inlined_call_operand.vmem [shape: f32[1,32], index: 3, kind: input, shape index: {}]
  %s4 = inlined_call_operand.vmem [shape: f32[1,32], index: 4, kind: input, shape index: {}]
  %s5 = inlined_call_operand.<no memory space> [shape: f32[1,1], index: 5, kind: input, shape index: {}]
  %s6 = inlined_call_operand.hbm [shape: f32[1,8,128], index: 6, kind: output, shape index: {}]
  %s7 = sld [smem:[#allocation0]]
  $region38: #{tpu_custom_call.1} parent=0
    _
  %s9 = ssub.s32 1, %s7
  %s10 = scalar_select 0, %s9, %s7
  %11 = sst [smem:[#allocation4]] %s0
  %v12 = vstv %s5
  %13 = vst [vmem:[#allocation5] sm:$0x1] %v12
  $region1: #{tpu_custom_call.1} parent=0
    #allocation6 [shape = 'u8[4096]{0}', space=vmem, size = 0x1000, scoped, tag = 'output window, operand 0, single buffered']
    #allocation7 [shape = 's32[1]{0}', space=sflag, size = 0x4, scoped, tag = 'scoped memory for tpu_custom_call.1']
    %14 = vsyncpa [#allocation7], 0
    // Predicated region
    $region2: #{tpu_custom_call.1} parent=1 // pred_check
      _
    $region3: #{tpu_custom_call.1} parent=1 // pred_check_branch
      %16 = sbr.rel (0) target = $region5
    $region4: #{tpu_custom_call.1} parent=1 // pred_region
      %s17 = sadd.s32 0, 0
      %s18 = smul.u32 2, %s17
      %p19 = scmp.lt.s32.totalorder %s18, 1
      %s20 = scalar_select %p19, %s18, 1
      %s21 = smul.addr %s20, 77
      %s22 = smul.addr %s21, 4
      %s23 = scalar_lea.vmem %s1, %s22
      %s24 = sadd.s32 0, 0
      %s25 = smul.u32 2, %s24
    $region5: #{tpu_custom_call.1} parent=1 // pred_fallthru
      _
    // Predicated region
    $region6: #{tpu_custom_call.1} parent=1 // pred_check
      _
    $region7: #{tpu_custom_call.1} parent=1 // pred_check_branch
      %27 = sbr.rel (0) target = $region9
    $region8: #{tpu_custom_call.1} parent=1 // pred_region
      _
    $region9: #{tpu_custom_call.1} parent=1 // pred_fallthru
      _
    // Predicated region
    $region10: #{tpu_custom_call.1} parent=1 // pred_check
      _
    $region11: #{tpu_custom_call.1} parent=1 // pred_check_branch
      %29 = sbr.rel (0) target = $region13
    $region12: #{tpu_custom_call.1} parent=1 // pred_region
      _
    $region13: #{tpu_custom_call.1} parent=1 // pred_fallthru
      _
    // Predicated region
    $region14: #{tpu_custom_call.1} parent=1 // pred_check
      _
    $region15: #{tpu_custom_call.1} parent=1 // pred_check_branch
      %31 = sbr.rel (0) target = $region17
    $region16: #{tpu_custom_call.1} parent=1 // pred_region
      _
    $region17: #{tpu_custom_call.1} parent=1 // pred_fallthru
      _
    // Predicated region
    $region18: #{tpu_custom_call.1} parent=1 // pred_check
      _
    $region19: #{tpu_custom_call.1} parent=1 // pred_check_branch
      %33 = sbr.rel (0) target = $region21
    $region20: #{tpu_custom_call.1} parent=1 // pred_region
      _
    $region21: #{tpu_custom_call.1} parent=1 // pred_fallthru
      _
    %s34 = sadd.s32 0, 0
    %s35 = smul.u32 2, %s34
    %p36 = scmp.lt.s32.totalorder %s35, 1
    %s37 = scalar_select %p36, %s35, 1
    %s38 = smul.addr %s37, 77
    %s39 = smul.addr %s38, 4
    %s40 = scalar_lea.vmem %s1, %s39
    %s41 = sadd.s32 0, 0
    %s42 = smul.u32 2, %s41
    %p43 = scmp.lt.s32.totalorder %s42, 1
    %s44 = scalar_select %p43, %s42, 1
    %s45 = smul.addr %s44, 77
    %s46 = smul.addr %s45, 4
    %s47 = scalar_lea.vmem %s1, %s46
    %s48 = sadd.s32 0, 0
    %s49 = smul.u32 2, %s48
    %p51 = scmp.eq.s32.totalorder 0, 0
    // Predicated region
    $region22: #{tpu_custom_call.1} parent=1 // pred_check
      %p52 = pneg %p51
    $region23: #{tpu_custom_call.1} parent=1 // pred_check_branch
      %54 = sbr.rel (%p52) target = $region25
    $region24: #{tpu_custom_call.1} parent=1 // pred_region
      %vm55 = vcmask 0
      %56 = vst.msk [vmem:[#allocation2] sm:$0x1] %vm55, 0.0
    $region25: #{tpu_custom_call.1} parent=1 // pred_fallthru
      _
    %v57 = vld [vmem:[%s47] sm:$0xff]
    %v58 = vld [vmem:[%s47 + $0x8] sm:$0xff]
    %v59 = vld [vmem:[%s47 + $0x10] sm:$0xff]
    %v60 = vld [vmem:[%s47 + $0x18] sm:$0xff]
    %v61 = vld [vmem:[%s47 + $0x20] sm:$0xff]
    %v62 = vld [vmem:[%s47 + $0x28] sm:$0xff]
    %v63 = vld [vmem:[%s47 + $0x30] sm:$0xff]
    %v64 = vld [vmem:[%s47 + $0x38] sm:$0xff]
    %v65 = vld [vmem:[%s47 + $0x40] sm:$0xff]
    %v66 = vld [vmem:[%s47 + $0x48] sm:$0xff]
    %v67 = vld [vmem:[%s47 + $0x50] sm:$0xff]
    %v68 = vld [vmem:[%s47 + $0x58] sm:$0xff]
    %v69 = vld [vmem:[%s47 + $0x60] sm:$0xff]
    %v70 = vld [vmem:[%s47 + $0x68] sm:$0xff]
    %v71 = vld [vmem:[%s47 + $0x70] sm:$0xff]
    %v72 = vld [vmem:[%s47 + $0x78] sm:$0xff]
    %v73 = vld [vmem:[%s47 + $0x80] sm:$0xff]
    %v74 = vld [vmem:[%s47 + $0x88] sm:$0xff]
    %v75 = vld [vmem:[%s47 + $0x90] sm:$0xff]
    %v76 = vld [vmem:[%s47 + $0x98] sm:$0xff]
    %v77 = vld [vmem:[%s47 + $0xa0] sm:$0xff]
    %v78 = vld [vmem:[%s47 + $0xa8] sm:$0xff]
    %v79 = vld [vmem:[%s47 + $0xb0] sm:$0xff]
    %v80 = vld [vmem:[%s47 + $0xb8] sm:$0xff]
    %v81 = vld [vmem:[%s47 + $0xc0] sm:$0xff]
    %v82 = vld [vmem:[%s47 + $0xc8] sm:$0xff]
    %v83 = vld [vmem:[%s47 + $0xd0] sm:$0xff]
    %v84 = vld [vmem:[%s47 + $0xd8] sm:$0xff]
    %v85 = vld [vmem:[%s47 + $0xe0] sm:$0xff]
    %v86 = vld [vmem:[%s47 + $0xe8] sm:$0xff]
    %v87 = vld [vmem:[%s47 + $0xf0] sm:$0xff]
    %v88 = vld [vmem:[%s47 + $0xf8] sm:$0xff]
    %v89 = vld [vmem:[%s47 + $0x100] sm:$0xff]
    %v90 = vld [vmem:[%s47 + $0x108] sm:$0xff]
    %v91 = vld [vmem:[%s47 + $0x110] sm:$0xff]
    %v92 = vld [vmem:[%s47 + $0x118] sm:$0xff]
    %v93 = vld [vmem:[%s47 + $0x120] sm:$0xff]
    %v94 = vld [vmem:[%s47 + $0x128] sm:$0xff]
    %v95 = vld [vmem:[%s47 + $0x130] sm:$0xf]
    %v96 = vld [vmem:[%s47 + $0x134] sm:$0xff]
    %v97 = vld [vmem:[%s47 + $0x13c] sm:$0xff]
    %v98 = vld [vmem:[%s47 + $0x144] sm:$0xff]
    %v99 = vld [vmem:[%s47 + $0x14c] sm:$0xff]
    %v100 = vld [vmem:[%s47 + $0x154] sm:$0xff]
    %v101 = vld [vmem:[%s47 + $0x15c] sm:$0xff]
    %v102 = vld [vmem:[%s47 + $0x164] sm:$0xff]
    %v103 = vld [vmem:[%s47 + $0x16c] sm:$0xff]
    %v104 = vld [vmem:[%s47 + $0x174] sm:$0xff]
    %v105 = vld [vmem:[%s47 + $0x17c] sm:$0xff]
    %v106 = vld [vmem:[%s47 + $0x184] sm:$0xff]
    %v107 = vld [vmem:[%s47 + $0x18c] sm:$0xff]
    %v108 = vld [vmem:[%s47 + $0x194] sm:$0xff]
    %v109 = vld [vmem:[%s47 + $0x19c] sm:$0xff]
    %v110 = vld [vmem:[%s47 + $0x1a4] sm:$0xff]
    %v111 = vld [vmem:[%s47 + $0x1ac] sm:$0xff]
    %v112 = vld [vmem:[%s47 + $0x1b4] sm:$0xff]
    %v113 = vld [vmem:[%s47 + $0x1bc] sm:$0xff]
    %v114 = vld [vmem:[%s47 + $0x1c4] sm:$0xff]
    %v115 = vld [vmem:[%s47 + $0x1cc] sm:$0xff]
    %v116 = vld [vmem:[%s47 + $0x1d4] sm:$0xff]
    %v117 = vld [vmem:[%s47 + $0x1dc] sm:$0xff]
    %v118 = vld [vmem:[%s47 + $0x1e4] sm:$0xff]
    %v119 = vld [vmem:[%s47 + $0x1ec] sm:$0xff]
    %v120 = vld [vmem:[%s47 + $0x1f4] sm:$0xff]
    %v121 = vld [vmem:[%s47 + $0x1fc] sm:$0xff]
    %v122 = vld [vmem:[%s47 + $0x204] sm:$0xff]
    %v123 = vld [vmem:[%s47 + $0x20c] sm:$0xff]
    %v124 = vld [vmem:[%s47 + $0x214] sm:$0xff]
    %v125 = vld [vmem:[%s47 + $0x21c] sm:$0xff]
    %v126 = vld [vmem:[%s47 + $0x224] sm:$0xff]
    %v127 = vld [vmem:[%s47 + $0x22c] sm:$0xff]
    %v128 = vld [vmem:[%s47 + $0x234] sm:$0xff]
    %v129 = vld [vmem:[%s47 + $0x23c] sm:$0xff]
    %v130 = vld [vmem:[%s47 + $0x244] sm:$0xff]
    %v131 = vld [vmem:[%s47 + $0x24c] sm:$0xff]
    %v132 = vld [vmem:[%s47 + $0x254] sm:$0xff]
    %v133 = vld [vmem:[%s47 + $0x25c] sm:$0xff]
    %v134 = vld [vmem:[%s47 + $0x264] sm:$0xf]
    %v135 = vld [vmem:[%s2] sm:$0xf]
    %v136 = vld [vmem:[%s2 + $0x4] sm:$0xf]
    %v137 = vld [vmem:[%s2 + $0x8] sm:$0xf]
    %v138 = vld [vmem:[%s2 + $0xc] sm:$0xf]
    %v139 = vld [vmem:[%s2 + $0x10] sm:$0xf]
    %v140 = vld [vmem:[%s2 + $0x14] sm:$0xf]
    %v141 = vld [vmem:[%s2 + $0x18] sm:$0xf]
    %v142 = vld [vmem:[%s2 + $0x1c] sm:$0xf]
    %v143 = vld [vmem:[%s2 + $0x20] sm:$0xf]
    %v144 = vld [vmem:[%s2 + $0x24] sm:$0xf]
    %v145 = vld [vmem:[%s2 + $0x28] sm:$0xf]
    %v146 = vld [vmem:[%s2 + $0x2c] sm:$0xf]
    %v147 = vld [vmem:[%s2 + $0x30] sm:$0xf]
    %v148 = vld [vmem:[%s2 + $0x34] sm:$0xf]
    %v149 = vld [vmem:[%s2 + $0x38] sm:$0xf]
    %v150 = vld [vmem:[%s2 + $0x3c] sm:$0xf]
    %v151 = vld [vmem:[%s2 + $0x40] sm:$0xf]
    %v152 = vld [vmem:[%s2 + $0x44] sm:$0xf]
    %v153 = vld [vmem:[%s2 + $0x48] sm:$0xf]
    %v154 = vld [vmem:[%s2 + $0x4c] sm:$0xf]
    %v155 = vld [vmem:[%s2 + $0x50] sm:$0xf]
    %v156 = vld [vmem:[%s2 + $0x54] sm:$0xf]
    %v157 = vld [vmem:[%s2 + $0x58] sm:$0xf]
    %v158 = vld [vmem:[%s2 + $0x5c] sm:$0xf]
    %v159 = vld [vmem:[%s2 + $0x60] sm:$0xf]
    %v160 = vld [vmem:[%s2 + $0x64] sm:$0xf]
    %v161 = vld [vmem:[%s2 + $0x68] sm:$0xf]
    %v162 = vld [vmem:[%s2 + $0x6c] sm:$0xf]
    %v163 = vld [vmem:[%s2 + $0x70] sm:$0xf]
    %v164 = vld [vmem:[%s2 + $0x74] sm:$0xf]
    %v165 = vld [vmem:[%s2 + $0x78] sm:$0xf]
    %v166 = vld [vmem:[%s2 + $0x7c] sm:$0xf]
    %v167 = vld [vmem:[%s2 + $0x80] sm:$0xf]
    %v168 = vld [vmem:[%s2 + $0x84] sm:$0xf]
    %v169 = vld [vmem:[%s2 + $0x88] sm:$0xf]
    %v170 = vld [vmem:[%s2 + $0x8c] sm:$0xf]
    %v171 = vld [vmem:[%s2 + $0x90] sm:$0xf]
    %v172 = vld [vmem:[%s2 + $0x94] sm:$0xf]
    %v173 = vld [vmem:[%s2 + $0x98] sm:$0xf]
    %v174 = vld [vmem:[%s2 + $0x9c] sm:$0xf]
    %v175 = vld [vmem:[%s2 + $0xa0] sm:$0xf]
    %v176 = vld [vmem:[%s2 + $0xa4] sm:$0xf]
    %v177 = vld [vmem:[%s2 + $0xa8] sm:$0xf]
    %v178 = vld [vmem:[%s2 + $0xac] sm:$0xf]
    %v179 = vld [vmem:[%s2 + $0xb0] sm:$0xf]
    %v180 = vld [vmem:[%s2 + $0xb4] sm:$0xf]
    %v181 = vld [vmem:[%s2 + $0xb8] sm:$0xf]
    %v182 = vld [vmem:[%s2 + $0xbc] sm:$0xf]
    %v183 = vld [vmem:[%s2 + $0xc0] sm:$0xf]
    %v184 = vld [vmem:[%s2 + $0xc4] sm:$0xf]
    %v185 = vld [vmem:[%s2 + $0xc8] sm:$0xf]
    %v186 = vld [vmem:[%s2 + $0xcc] sm:$0xf]
    %v187 = vld [vmem:[%s2 + $0xd0] sm:$0xf]
    %v188 = vld [vmem:[%s2 + $0xd4] sm:$0xf]
    %v189 = vld [vmem:[%s2 + $0xd8] sm:$0xf]
    %v190 = vld [vmem:[%s2 + $0xdc] sm:$0xf]
    %v191 = vld [vmem:[%s2 + $0xe0] sm:$0xf]
    %v192 = vld [vmem:[%s2 + $0xe4] sm:$0xf]
    %v193 = vld [vmem:[%s2 + $0xe8] sm:$0xf]
    %v194 = vld [vmem:[%s2 + $0xec] sm:$0xf]
    %v195 = vld [vmem:[%s2 + $0xf0] sm:$0xf]
    %v196 = vld [vmem:[%s2 + $0xf4] sm:$0xf]
    %v197 = vld [vmem:[%s2 + $0xf8] sm:$0xf]
    %v198 = vld [vmem:[%s2 + $0xfc] sm:$0xf]
    %v199 = vld [vmem:[%s2 + $0x100] sm:$0xf]
    %v200 = vld [vmem:[%s2 + $0x104] sm:$0xf]
    %v201 = vld [vmem:[%s2 + $0x108] sm:$0xf]
    %v202 = vld [vmem:[%s2 + $0x10c] sm:$0xf]
    %v203 = vld [vmem:[%s2 + $0x110] sm:$0xf]
    %v204 = vld [vmem:[%s2 + $0x114] sm:$0xf]
    %v205 = vld [vmem:[%s2 + $0x118] sm:$0xf]
    %v206 = vld [vmem:[%s2 + $0x11c] sm:$0xf]
    %v207 = vld [vmem:[%s2 + $0x120] sm:$0xf]
    %v208 = vld [vmem:[%s2 + $0x124] sm:$0xf]
    %v209 = vld [vmem:[%s2 + $0x128] sm:$0xf]
    %v210 = vld [vmem:[%s2 + $0x12c] sm:$0xf]
    %v211 = vld [vmem:[%s2 + $0x130] sm:$0xf]
    %v212 = vld [vmem:[%s2 + $0x134] sm:$0xf]
    %v213 = vld [vmem:[%s2 + $0x138] sm:$0xf]
    %v214 = vld [vmem:[%s2 + $0x13c] sm:$0xf]
    %v215 = vld [vmem:[%s2 + $0x140] sm:$0xf]
    %v216 = vld [vmem:[%s2 + $0x144] sm:$0xf]
    %v217 = vld [vmem:[%s2 + $0x148] sm:$0xf]
    %v218 = vld [vmem:[%s2 + $0x14c] sm:$0xf]
    %v219 = vld [vmem:[%s2 + $0x150] sm:$0xf]
    %v220 = vld [vmem:[%s2 + $0x154] sm:$0xf]
    %v221 = vld [vmem:[%s2 + $0x158] sm:$0xf]
    %v222 = vld [vmem:[%s2 + $0x15c] sm:$0xf]
    %v223 = vld [vmem:[%s2 + $0x160] sm:$0xf]
    %v224 = vld [vmem:[%s2 + $0x164] sm:$0xf]
    %v225 = vld [vmem:[%s2 + $0x168] sm:$0xf]
    %v226 = vld [vmem:[%s2 + $0x16c] sm:$0xf]
    %v227 = vld [vmem:[%s2 + $0x170] sm:$0xf]
    %v228 = vld [vmem:[%s2 + $0x174] sm:$0xf]
    %v229 = vld [vmem:[%s2 + $0x178] sm:$0xf]
    %v230 = vld [vmem:[%s2 + $0x17c] sm:$0xf]
    %v231 = vld [vmem:[%s2 + $0x180] sm:$0xf]
    %v232 = vld [vmem:[%s2 + $0x184] sm:$0xf]
    %v233 = vld [vmem:[%s2 + $0x188] sm:$0xf]
    %v234 = vld [vmem:[%s2 + $0x18c] sm:$0xf]
    %v235 = vld [vmem:[%s2 + $0x190] sm:$0xf]
    %v236 = vld [vmem:[%s2 + $0x194] sm:$0xf]
    %v237 = vld [vmem:[%s2 + $0x198] sm:$0xf]
    %v238 = vld [vmem:[%s2 + $0x19c] sm:$0xf]
    %v239 = vld [vmem:[%s2 + $0x1a0] sm:$0xf]
    %v240 = vld [vmem:[%s2 + $0x1a4] sm:$0xf]
    %v241 = vld [vmem:[%s2 + $0x1a8] sm:$0xf]
    %v242 = vld [vmem:[%s2 + $0x1ac] sm:$0xf]
    %v243 = vld [vmem:[%s2 + $0x1b0] sm:$0xf]
    %v244 = vld [vmem:[%s2 + $0x1b4] sm:$0xf]
    %v245 = vld [vmem:[%s2 + $0x1b8] sm:$0xf]
    %v246 = vld [vmem:[%s2 + $0x1bc] sm:$0xf]
    %v247 = vld [vmem:[%s2 + $0x1c0] sm:$0xf]
    %v248 = vld [vmem:[%s2 + $0x1c4] sm:$0xf]
    %v249 = vld [vmem:[%s2 + $0x1c8] sm:$0xf]
    %v250 = vld [vmem:[%s2 + $0x1cc] sm:$0xf]
    %v251 = vld [vmem:[%s2 + $0x1d0] sm:$0xf]
    %v252 = vld [vmem:[%s2 + $0x1d4] sm:$0xf]
    %v253 = vld [vmem:[%s2 + $0x1d8] sm:$0xf]
    %v254 = vld [vmem:[%s2 + $0x1dc] sm:$0xf]
    %v255 = vld [vmem:[%s2 + $0x1e0] sm:$0xf]
    %v256 = vld [vmem:[%s2 + $0x1e4] sm:$0xf]
    %v257 = vld [vmem:[%s2 + $0x1e8] sm:$0xf]
    %v258 = vld [vmem:[%s2 + $0x1ec] sm:$0xf]
    %v259 = vld [vmem:[%s2 + $0x1f0] sm:$0xf]
    %v260 = vld [vmem:[%s2 + $0x1f4] sm:$0xf]
    %v261 = vld [vmem:[%s2 + $0x1f8] sm:$0xf]
    %v262 = vld [vmem:[%s2 + $0x1fc] sm:$0xf]
    %v263 = vld [vmem:[%s2 + $0x200] sm:$0xf]
    %v264 = vld [vmem:[%s2 + $0x204] sm:$0xf]
    %v265 = vld [vmem:[%s2 + $0x208] sm:$0xf]
    %v266 = vld [vmem:[%s2 + $0x20c] sm:$0xf]
    %v267 = vld [vmem:[%s2 + $0x210] sm:$0xf]
    %v268 = vld [vmem:[%s2 + $0x214] sm:$0xf]
    %v269 = vld [vmem:[%s2 + $0x218] sm:$0xf]
    %v270 = vld [vmem:[%s2 + $0x21c] sm:$0xf]
    %v271 = vld [vmem:[%s2 + $0x220] sm:$0xf]
    %v272 = vld [vmem:[%s2 + $0x224] sm:$0xf]
    %v273 = vld [vmem:[%s2 + $0x228] sm:$0xf]
    %v274 = vld [vmem:[%s2 + $0x22c] sm:$0xf]
    %v275 = vld [vmem:[%s2 + $0x230] sm:$0xf]
    %v276 = vld [vmem:[%s2 + $0x234] sm:$0xf]
    %v277 = vld [vmem:[%s2 + $0x238] sm:$0xf]
    %v278 = vld [vmem:[%s2 + $0x23c] sm:$0xf]
    %v279 = vld [vmem:[%s2 + $0x240] sm:$0xf]
    %v280 = vld [vmem:[%s2 + $0x244] sm:$0xf]
    %v281 = vld [vmem:[%s2 + $0x248] sm:$0xf]
    %v282 = vld [vmem:[%s2 + $0x24c] sm:$0xf]
    %v283 = vld [vmem:[%s2 + $0x250] sm:$0xf]
    %v284 = vld [vmem:[%s2 + $0x254] sm:$0xf]
    %v285 = vld [vmem:[%s2 + $0x258] sm:$0xf]
    %v286 = vld [vmem:[%s2 + $0x25c] sm:$0xf]
    %v287 = vld [vmem:[%s2 + $0x260] sm:$0xf]
    %v288 = vld [vmem:[%s2 + $0x264] sm:$0xf]
    %v289 = vld [vmem:[%s2 + $0x268] sm:$0xf]
    %v290 = vld [vmem:[%s2 + $0x26c] sm:$0xf]
    %v291 = vld [vmem:[%s2 + $0x270] sm:$0xf]
    %v292 = vld [vmem:[%s2 + $0x274] sm:$0xf]
    %v293 = vld [vmem:[%s2 + $0x278] sm:$0xf]
    %v294 = vld [vmem:[%s2 + $0x27c] sm:$0xf]
    %v295 = vld [vmem:[%s2 + $0x280] sm:$0xf]
    %v296 = vld [vmem:[%s2 + $0x284] sm:$0xf]
    %v297 = vld [vmem:[%s2 + $0x288] sm:$0xf]
    %v298 = vld [vmem:[%s2 + $0x28c] sm:$0xf]
    %v299 = vld [vmem:[%s2 + $0x290] sm:$0xf]
    %v300 = vld [vmem:[%s2 + $0x294] sm:$0xf]
    %v301 = vld [vmem:[%s2 + $0x298] sm:$0xf]
    %v302 = vld [vmem:[%s2 + $0x29c] sm:$0xf]
    %v303 = vld [vmem:[%s2 + $0x2a0] sm:$0xf]
    %v304 = vld [vmem:[%s2 + $0x2a4] sm:$0xf]
    %v305 = vld [vmem:[%s2 + $0x2a8] sm:$0xf]
    %v306 = vld [vmem:[%s2 + $0x2ac] sm:$0xf]
    %v307 = vld [vmem:[%s2 + $0x2b0] sm:$0xf]
    %v308 = vld [vmem:[%s2 + $0x2b4] sm:$0xf]
    %v309 = vld [vmem:[%s2 + $0x2b8] sm:$0xf]
    %v310 = vld [vmem:[%s2 + $0x2bc] sm:$0xf]
    %v311 = vld [vmem:[%s2 + $0x2c0] sm:$0xf]
    %v312 = vld [vmem:[%s2 + $0x2c4] sm:$0xf]
    %v313 = vld [vmem:[%s2 + $0x2c8] sm:$0xf]
    %v314 = vld [vmem:[%s2 + $0x2cc] sm:$0xf]
    %v315 = vld [vmem:[%s2 + $0x2d0] sm:$0xf]
    %v316 = vld [vmem:[%s2 + $0x2d4] sm:$0xf]
    %v317 = vld [vmem:[%s2 + $0x2d8] sm:$0xf]
    %v318 = vld [vmem:[%s2 + $0x2dc] sm:$0xf]
    %v319 = vld [vmem:[%s2 + $0x2e0] sm:$0xf]
    %v320 = vld [vmem:[%s2 + $0x2e4] sm:$0xf]
    %v321 = vld [vmem:[%s2 + $0x2e8] sm:$0xf]
    %v322 = vld [vmem:[%s2 + $0x2ec] sm:$0xf]
    %v323 = vld [vmem:[%s2 + $0x2f0] sm:$0xf]
    %v324 = vld [vmem:[%s2 + $0x2f4] sm:$0xf]
    %v325 = vld [vmem:[%s2 + $0x2f8] sm:$0xf]
    %v326 = vld [vmem:[%s2 + $0x2fc] sm:$0xf]
    %v327 = vld [vmem:[%s2 + $0x300] sm:$0xf]
    %v328 = vld [vmem:[%s2 + $0x304] sm:$0xf]
    %v329 = vld [vmem:[%s2 + $0x308] sm:$0xf]
    %v330 = vld [vmem:[%s2 + $0x30c] sm:$0xf]
    %v331 = vld [vmem:[%s2 + $0x310] sm:$0xf]
    %v332 = vld [vmem:[%s2 + $0x314] sm:$0xf]
    %v333 = vld [vmem:[%s2 + $0x318] sm:$0xf]
    %v334 = vld [vmem:[%s2 + $0x31c] sm:$0xf]
    %v335 = vld [vmem:[%s2 + $0x320] sm:$0xf]
    %v336 = vld [vmem:[%s2 + $0x324] sm:$0xf]
    %v337 = vld [vmem:[%s2 + $0x328] sm:$0xf]
    %v338 = vld [vmem:[%s2 + $0x32c] sm:$0xf]
    %v339 = vld [vmem:[%s2 + $0x330] sm:$0xf]
    %v340 = vld [vmem:[%s2 + $0x334] sm:$0xf]
    %v341 = vld [vmem:[%s2 + $0x338] sm:$0xf]
    %v342 = vld [vmem:[%s2 + $0x33c] sm:$0xf]
    %v343 = vld [vmem:[%s2 + $0x340] sm:$0xf]
    %v344 = vld [vmem:[%s2 + $0x344] sm:$0xf]
    %v345 = vld [vmem:[%s2 + $0x348] sm:$0xf]
    %v346 = vld [vmem:[%s2 + $0x34c] sm:$0xf]
    %v347 = vld [vmem:[%s2 + $0x350] sm:$0xf]
    %v348 = vld [vmem:[%s2 + $0x354] sm:$0xf]
    %v349 = vld [vmem:[%s2 + $0x358] sm:$0xf]
    %v350 = vld [vmem:[%s2 + $0x35c] sm:$0xf]
    %v351 = vld [vmem:[%s2 + $0x360] sm:$0xf]
    %v352 = vld [vmem:[%s2 + $0x364] sm:$0xf]
    %v353 = vld [vmem:[%s2 + $0x368] sm:$0xf]
    %v354 = vld [vmem:[%s2 + $0x36c] sm:$0xf]
    %v355 = vld [vmem:[%s2 + $0x370] sm:$0xf]
    %v356 = vld [vmem:[%s2 + $0x374] sm:$0xf]
    %v357 = vld [vmem:[%s2 + $0x378] sm:$0xf]
    %v358 = vld [vmem:[%s2 + $0x37c] sm:$0xf]
    %v359 = vld [vmem:[%s2 + $0x380] sm:$0xf]
    %v360 = vld [vmem:[%s2 + $0x384] sm:$0xf]
    %v361 = vld [vmem:[%s2 + $0x388] sm:$0xf]
    %v362 = vld [vmem:[%s2 + $0x38c] sm:$0xf]
    %v363 = vld [vmem:[%s2 + $0x390] sm:$0xf]
    %v364 = vld [vmem:[%s2 + $0x394] sm:$0xf]
    %v365 = vld [vmem:[%s2 + $0x398] sm:$0xf]
    %v366 = vld [vmem:[%s2 + $0x39c] sm:$0xf]
    %v367 = vld [vmem:[%s2 + $0x3a0] sm:$0xf]
    %v368 = vld [vmem:[%s2 + $0x3a4] sm:$0xf]
    %v369 = vld [vmem:[%s2 + $0x3a8] sm:$0xf]
    %v370 = vld [vmem:[%s2 + $0x3ac] sm:$0xf]
    %v371 = vld [vmem:[%s2 + $0x3b0] sm:$0xf]
    %v372 = vld [vmem:[%s2 + $0x3b4] sm:$0xf]
    %v373 = vld [vmem:[%s2 + $0x3b8] sm:$0xf]
    %v374 = vld [vmem:[%s2 + $0x3bc] sm:$0xf]
    %v375 = vld [vmem:[%s2 + $0x3c0] sm:$0xf]
    %v376 = vld [vmem:[%s2 + $0x3c4] sm:$0xf]
    %v377 = vld [vmem:[%s2 + $0x3c8] sm:$0xf]
    %v378 = vld [vmem:[%s2 + $0x3cc] sm:$0xf]
    %v379 = vld [vmem:[%s2 + $0x3d0] sm:$0xf]
    %v380 = vld [vmem:[%s2 + $0x3d4] sm:$0xf]
    %v381 = vld [vmem:[%s2 + $0x3d8] sm:$0xf]
    %v382 = vld [vmem:[%s2 + $0x3dc] sm:$0xf]
    %v383 = vld [vmem:[%s2 + $0x3e0] sm:$0xf]
    %v384 = vld [vmem:[%s2 + $0x3e4] sm:$0xf]
    %v385 = vld [vmem:[%s2 + $0x3e8] sm:$0xf]
    %v386 = vld [vmem:[%s2 + $0x3ec] sm:$0xf]
    %v387 = vld [vmem:[%s2 + $0x3f0] sm:$0xf]
    %v388 = vld [vmem:[%s2 + $0x3f4] sm:$0xf]
    %v389 = vld [vmem:[%s2 + $0x3f8] sm:$0xf]
    %v390 = vld [vmem:[%s2 + $0x3fc] sm:$0xf]
    %v391 = vld [vmem:[%s2 + $0x400] sm:$0xf]
    %v392 = vld [vmem:[%s2 + $0x404] sm:$0xf]
    %v393 = vld [vmem:[%s2 + $0x408] sm:$0xf]
    %v394 = vld [vmem:[%s2 + $0x40c] sm:$0xf]
    %v395 = vld [vmem:[%s2 + $0x410] sm:$0xf]
    %v396 = vld [vmem:[%s2 + $0x414] sm:$0xf]
    %v397 = vld [vmem:[%s2 + $0x418] sm:$0xf]
    %v398 = vld [vmem:[%s2 + $0x41c] sm:$0xf]
    %v399 = vld [vmem:[%s2 + $0x420] sm:$0xf]
    %v400 = vld [vmem:[%s2 + $0x424] sm:$0xf]
    %v401 = vld [vmem:[%s2 + $0x428] sm:$0xf]
    %v402 = vld [vmem:[%s2 + $0x42c] sm:$0xf]
    %v403 = vld [vmem:[%s2 + $0x430] sm:$0xf]
    %v404 = vld [vmem:[%s2 + $0x434] sm:$0xf]
    %v405 = vld [vmem:[%s2 + $0x438] sm:$0xf]
    %v406 = vld [vmem:[%s2 + $0x43c] sm:$0xf]
    %v407 = vld [vmem:[%s2 + $0x440] sm:$0xf]
    %v408 = vld [vmem:[%s2 + $0x444] sm:$0xf]
    %v409 = vld [vmem:[%s2 + $0x448] sm:$0xf]
    %v410 = vld [vmem:[%s2 + $0x44c] sm:$0xf]
    %v411 = vld [vmem:[%s2 + $0x450] sm:$0xf]
    %v412 = vld [vmem:[%s2 + $0x454] sm:$0xf]
    %v413 = vld [vmem:[%s2 + $0x458] sm:$0xf]
    %v414 = vld [vmem:[%s2 + $0x45c] sm:$0xf]
    %v415 = vld [vmem:[%s2 + $0x460] sm:$0xf]
    %v416 = vld [vmem:[%s2 + $0x464] sm:$0xf]
    %v417 = vld [vmem:[%s2 + $0x468] sm:$0xf]
    %v418 = vld [vmem:[%s2 + $0x46c] sm:$0xf]
    %v419 = vld [vmem:[%s2 + $0x470] sm:$0xf]
    %v420 = vld [vmem:[%s2 + $0x474] sm:$0xf]
    %v421 = vld [vmem:[%s2 + $0x478] sm:$0xf]
    %v422 = vld [vmem:[%s2 + $0x47c] sm:$0xf]
    %v423 = vld [vmem:[%s2 + $0x480] sm:$0xf]
    %v424 = vld [vmem:[%s2 + $0x484] sm:$0xf]
    %v425 = vld [vmem:[%s2 + $0x488] sm:$0xf]
    %v426 = vld [vmem:[%s2 + $0x48c] sm:$0xf]
    %v427 = vld [vmem:[%s2 + $0x490] sm:$0xf]
    %v428 = vld [vmem:[%s2 + $0x494] sm:$0xf]
    %v429 = vld [vmem:[%s2 + $0x498] sm:$0xf]
    %v430 = vld [vmem:[%s2 + $0x49c] sm:$0xf]
    %v431 = vld [vmem:[%s2 + $0x4a0] sm:$0xf]
    %v432 = vld [vmem:[%s2 + $0x4a4] sm:$0xf]
    %v433 = vld [vmem:[%s2 + $0x4a8] sm:$0xf]
    %v434 = vld [vmem:[%s2 + $0x4ac] sm:$0xf]
    %v435 = vld [vmem:[%s2 + $0x4b0] sm:$0xf]
    %v436 = vld [vmem:[%s2 + $0x4b4] sm:$0xf]
    %v437 = vld [vmem:[%s2 + $0x4b8] sm:$0xf]
    %v438 = vld [vmem:[%s2 + $0x4bc] sm:$0xf]
    %v439 = vld [vmem:[%s2 + $0x4c0] sm:$0xf]
    %v440 = vld [vmem:[%s2 + $0x4c4] sm:$0xf]
    %v441 = vld [vmem:[%s2 + $0x4c8] sm:$0xf]
    %v442 = vld [vmem:[%s2 + $0x4cc] sm:$0xf]
    %v443 = vld [vmem:[%s2 + $0x4d0] sm:$0xf]
    %v444 = vld [vmem:[%s2 + $0x4d4] sm:$0xf]
    %v445 = vld [vmem:[%s2 + $0x4d8] sm:$0xf]
    %v446 = vld [vmem:[%s2 + $0x4dc] sm:$0xf]
    %v447 = vld [vmem:[%s2 + $0x4e0] sm:$0xf]
    %v448 = vld [vmem:[%s2 + $0x4e4] sm:$0xf]
    %v449 = vld [vmem:[%s2 + $0x4e8] sm:$0xf]
    %v450 = vld [vmem:[%s2 + $0x4ec] sm:$0xf]
    %v451 = vld [vmem:[%s2 + $0x4f0] sm:$0xf]
    %v452 = vld [vmem:[%s2 + $0x4f4] sm:$0xf]
    %v453 = vld [vmem:[%s2 + $0x4f8] sm:$0xf]
    %v454 = vld [vmem:[%s2 + $0x4fc] sm:$0xf]
    %v455 = vld [vmem:[%s2 + $0x500] sm:$0xf]
    %v456 = vld [vmem:[%s2 + $0x504] sm:$0xf]
    %v457 = vld [vmem:[%s2 + $0x508] sm:$0xf]
    %v458 = vld [vmem:[%s2 + $0x50c] sm:$0xf]
    %v459 = vld [vmem:[%s2 + $0x510] sm:$0xf]
    %v460 = vld [vmem:[%s2 + $0x514] sm:$0xf]
    %v461 = vld [vmem:[%s2 + $0x518] sm:$0xf]
    %v462 = vld [vmem:[%s2 + $0x51c] sm:$0xf]
    %v463 = vld [vmem:[%s2 + $0x520] sm:$0xf]
    %v464 = vld [vmem:[%s2 + $0x524] sm:$0xf]
    %v465 = vld [vmem:[%s2 + $0x528] sm:$0xf]
    %v466 = vld [vmem:[%s2 + $0x52c] sm:$0xf]
    %v467 = vld [vmem:[%s2 + $0x530] sm:$0xf]
    %v468 = vld [vmem:[%s2 + $0x534] sm:$0xf]
    %v469 = vld [vmem:[%s2 + $0x538] sm:$0xf]
    %v470 = vld [vmem:[%s2 + $0x53c] sm:$0xf]
    %v471 = vld [vmem:[%s2 + $0x540] sm:$0xf]
    %v472 = vld [vmem:[%s2 + $0x544] sm:$0xf]
    %v473 = vld [vmem:[%s2 + $0x548] sm:$0xf]
    %v474 = vld [vmem:[%s2 + $0x54c] sm:$0xf]
    %v475 = vld [vmem:[%s2 + $0x550] sm:$0xf]
    %v476 = vld [vmem:[%s2 + $0x554] sm:$0xf]
    %v477 = vld [vmem:[%s2 + $0x558] sm:$0xf]
    %v478 = vld [vmem:[%s2 + $0x55c] sm:$0xf]
    %v479 = vld [vmem:[%s2 + $0x560] sm:$0xf]
    %v480 = vld [vmem:[%s2 + $0x564] sm:$0xf]
    %v481 = vld [vmem:[%s2 + $0x568] sm:$0xf]
    %v482 = vld [vmem:[%s2 + $0x56c] sm:$0xf]
    %v483 = vld [vmem:[%s2 + $0x570] sm:$0xf]
    %v484 = vld [vmem:[%s2 + $0x574] sm:$0xf]
    %v485 = vld [vmem:[%s2 + $0x578] sm:$0xf]
    %v486 = vld [vmem:[%s2 + $0x57c] sm:$0xf]
    %v487 = vld [vmem:[%s2 + $0x580] sm:$0xf]
    %v488 = vld [vmem:[%s2 + $0x584] sm:$0xf]
    %v489 = vld [vmem:[%s2 + $0x588] sm:$0xf]
    %v490 = vld [vmem:[%s2 + $0x58c] sm:$0xf]
    %v491 = vld [vmem:[%s2 + $0x590] sm:$0xf]
    %v492 = vld [vmem:[%s2 + $0x594] sm:$0xf]
    %v493 = vld [vmem:[%s2 + $0x598] sm:$0xf]
    %v494 = vld [vmem:[%s2 + $0x59c] sm:$0xf]
    %v495 = vld [vmem:[%s2 + $0x5a0] sm:$0xf]
    %v496 = vld [vmem:[%s2 + $0x5a4] sm:$0xf]
    %v497 = vld [vmem:[%s2 + $0x5a8] sm:$0xf]
    %v498 = vld [vmem:[%s2 + $0x5ac] sm:$0xf]
    %v499 = vld [vmem:[%s2 + $0x5b0] sm:$0xf]
    %v500 = vld [vmem:[%s2 + $0x5b4] sm:$0xf]
    %v501 = vld [vmem:[%s2 + $0x5b8] sm:$0xf]
    %v502 = vld [vmem:[%s2 + $0x5bc] sm:$0xf]
    %v503 = vld [vmem:[%s2 + $0x5c0] sm:$0xf]
    %v504 = vld [vmem:[%s2 + $0x5c4] sm:$0xf]
    %v505 = vld [vmem:[%s2 + $0x5c8] sm:$0xf]
    %v506 = vld [vmem:[%s2 + $0x5cc] sm:$0xf]
    %v507 = vld [vmem:[%s2 + $0x5d0] sm:$0xf]
    %v508 = vld [vmem:[%s2 + $0x5d4] sm:$0xf]
    %v509 = vld [vmem:[%s2 + $0x5d8] sm:$0xf]
    %v510 = vld [vmem:[%s2 + $0x5dc] sm:$0xf]
    %v511 = vld [vmem:[%s2 + $0x5e0] sm:$0xf]
    %v512 = vld [vmem:[%s2 + $0x5e4] sm:$0xf]
    %v513 = vld [vmem:[%s2 + $0x5e8] sm:$0xf]
    %v514 = vld [vmem:[%s2 + $0x5ec] sm:$0xf]
    %v515 = vld [vmem:[%s2 + $0x5f0] sm:$0xf]
    %v516 = vld [vmem:[%s2 + $0x5f4] sm:$0xf]
    %v517 = vld [vmem:[%s2 + $0x5f8] sm:$0xf]
    %v518 = vld [vmem:[%s2 + $0x5fc] sm:$0xf]
    %v519 = vld [vmem:[%s2 + $0x600] sm:$0xf]
    %v520 = vld [vmem:[%s2 + $0x604] sm:$0xf]
    %v521 = vld [vmem:[%s2 + $0x608] sm:$0xf]
    %v522 = vld [vmem:[%s2 + $0x60c] sm:$0xf]
    %v523 = vld [vmem:[%s2 + $0x610] sm:$0xf]
    %v524 = vld [vmem:[%s2 + $0x614] sm:$0xf]
    %v525 = vld [vmem:[%s2 + $0x618] sm:$0xf]
    %v526 = vld [vmem:[%s2 + $0x61c] sm:$0xf]
    %v527 = vld [vmem:[%s2 + $0x620] sm:$0xf]
    %v528 = vld [vmem:[%s2 + $0x624] sm:$0xf]
    %v529 = vld [vmem:[%s2 + $0x628] sm:$0xf]
    %v530 = vld [vmem:[%s2 + $0x62c] sm:$0xf]
    %v531 = vld [vmem:[%s2 + $0x630] sm:$0xf]
    %v532 = vld [vmem:[%s2 + $0x634] sm:$0xf]
    %v533 = vld [vmem:[%s2 + $0x638] sm:$0xf]
    %v534 = vld [vmem:[%s2 + $0x63c] sm:$0xf]
    %v535 = vld [vmem:[%s2 + $0x640] sm:$0xf]
    %v536 = vld [vmem:[%s2 + $0x644] sm:$0xf]
    %v537 = vld [vmem:[%s2 + $0x648] sm:$0xf]
    %v538 = vld [vmem:[%s2 + $0x64c] sm:$0xf]
    %v539 = vld [vmem:[%s2 + $0x650] sm:$0xf]
    %v540 = vld [vmem:[%s2 + $0x654] sm:$0xf]
    %v541 = vld [vmem:[%s2 + $0x658] sm:$0xf]
    %v542 = vld [vmem:[%s2 + $0x65c] sm:$0xf]
    %v543 = vld [vmem:[%s2 + $0x660] sm:$0xf]
    %v544 = vld [vmem:[%s2 + $0x664] sm:$0xf]
    %v545 = vld [vmem:[%s2 + $0x668] sm:$0xf]
    %v546 = vld [vmem:[%s2 + $0x66c] sm:$0xf]
    %v547 = vld [vmem:[%s2 + $0x670] sm:$0xf]
    %v548 = vld [vmem:[%s2 + $0x674] sm:$0xf]
    %v549 = vld [vmem:[%s2 + $0x678] sm:$0xf]
    %v550 = vld [vmem:[%s2 + $0x67c] sm:$0xf]
    %v551 = vld [vmem:[%s2 + $0x680] sm:$0xf]
    %v552 = vld [vmem:[%s2 + $0x684] sm:$0xf]
    %v553 = vld [vmem:[%s2 + $0x688] sm:$0xf]
    %v554 = vld [vmem:[%s2 + $0x68c] sm:$0xf]
    %v555 = vld [vmem:[%s2 + $0x690] sm:$0xf]
    %v556 = vld [vmem:[%s2 + $0x694] sm:$0xf]
    %v557 = vld [vmem:[%s2 + $0x698] sm:$0xf]
    %v558 = vld [vmem:[%s2 + $0x69c] sm:$0xf]
    %v559 = vld [vmem:[%s2 + $0x6a0] sm:$0xf]
    %v560 = vld [vmem:[%s2 + $0x6a4] sm:$0xf]
    %v561 = vld [vmem:[%s2 + $0x6a8] sm:$0xf]
    %v562 = vld [vmem:[%s2 + $0x6ac] sm:$0xf]
    %v563 = vld [vmem:[%s2 + $0x6b0] sm:$0xf]
    %v564 = vld [vmem:[%s2 + $0x6b4] sm:$0xf]
    %v565 = vld [vmem:[%s2 + $0x6b8] sm:$0xf]
    %v566 = vld [vmem:[%s2 + $0x6bc] sm:$0xf]
    %v567 = vld [vmem:[%s2 + $0x6c0] sm:$0xf]
    %v568 = vld [vmem:[%s2 + $0x6c4] sm:$0xf]
    %v569 = vld [vmem:[%s2 + $0x6c8] sm:$0xf]
    %v570 = vld [vmem:[%s2 + $0x6cc] sm:$0xf]
    %v571 = vld [vmem:[%s2 + $0x6d0] sm:$0xf]
    %v572 = vld [vmem:[%s2 + $0x6d4] sm:$0xf]
    %v573 = vld [vmem:[%s2 + $0x6d8] sm:$0xf]
    %v574 = vld [vmem:[%s2 + $0x6dc] sm:$0xf]
    %v575 = vld [vmem:[%s2 + $0x6e0] sm:$0xf]
    %v576 = vld [vmem:[%s2 + $0x6e4] sm:$0xf]
    %v577 = vld [vmem:[%s2 + $0x6e8] sm:$0xf]
    %v578 = vld [vmem:[%s2 + $0x6ec] sm:$0xf]
    %v579 = vld [vmem:[%s2 + $0x6f0] sm:$0xf]
    %v580 = vld [vmem:[%s2 + $0x6f4] sm:$0xf]
    %v581 = vld [vmem:[%s2 + $0x6f8] sm:$0xf]
    %v582 = vld [vmem:[%s2 + $0x6fc] sm:$0xf]
    %v583 = vld [vmem:[%s2 + $0x700] sm:$0xf]
    %v584 = vld [vmem:[%s2 + $0x704] sm:$0xf]
    %v585 = vld [vmem:[%s2 + $0x708] sm:$0xf]
    %v586 = vld [vmem:[%s2 + $0x70c] sm:$0xf]
    %v587 = vld [vmem:[%s2 + $0x710] sm:$0xf]
    %v588 = vld [vmem:[%s2 + $0x714] sm:$0xf]
    %v589 = vld [vmem:[%s2 + $0x718] sm:$0xf]
    %v590 = vld [vmem:[%s2 + $0x71c] sm:$0xf]
    %v591 = vld [vmem:[%s2 + $0x720] sm:$0xf]
    %v592 = vld [vmem:[%s2 + $0x724] sm:$0xf]
    %v593 = vld [vmem:[%s2 + $0x728] sm:$0xf]
    %v594 = vld [vmem:[%s2 + $0x72c] sm:$0xf]
    %v595 = vld [vmem:[%s2 + $0x730] sm:$0xf]
    %v596 = vld [vmem:[%s2 + $0x734] sm:$0xf]
    %v597 = vld [vmem:[%s2 + $0x738] sm:$0xf]
    %v598 = vld [vmem:[%s2 + $0x73c] sm:$0xf]
    %v599 = vld [vmem:[%s2 + $0x740] sm:$0xf]
    %v600 = vld [vmem:[%s2 + $0x744] sm:$0xf]
    %v601 = vld [vmem:[%s2 + $0x748] sm:$0xf]
    %v602 = vld [vmem:[%s2 + $0x74c] sm:$0xf]
    %v603 = vld [vmem:[%s2 + $0x750] sm:$0xf]
    %v604 = vld [vmem:[%s2 + $0x754] sm:$0xf]
    %v605 = vld [vmem:[%s2 + $0x758] sm:$0xf]
    %v606 = vld [vmem:[%s2 + $0x75c] sm:$0xf]
    %v607 = vld [vmem:[%s2 + $0x760] sm:$0xf]
    %v608 = vld [vmem:[%s2 + $0x764] sm:$0xf]
    %v609 = vld [vmem:[%s2 + $0x768] sm:$0xf]
    %v610 = vld [vmem:[%s2 + $0x76c] sm:$0xf]
    %v611 = vld [vmem:[%s2 + $0x770] sm:$0xf]
    %v612 = vld [vmem:[%s2 + $0x774] sm:$0xf]
    %v613 = vld [vmem:[%s2 + $0x778] sm:$0xf]
    %v614 = vld [vmem:[%s2 + $0x77c] sm:$0xf]
    %v615 = vld [vmem:[%s2 + $0x780] sm:$0xf]
    %v616 = vld [vmem:[%s2 + $0x784] sm:$0xf]
    %v617 = vld [vmem:[%s2 + $0x788] sm:$0xf]
    %v618 = vld [vmem:[%s2 + $0x78c] sm:$0xf]
    %v619 = vld [vmem:[%s2 + $0x790] sm:$0xf]
    %v620 = vld [vmem:[%s2 + $0x794] sm:$0xf]
    %v621 = vld [vmem:[%s2 + $0x798] sm:$0xf]
    %v622 = vld [vmem:[%s2 + $0x79c] sm:$0xf]
    %v623 = vld [vmem:[%s2 + $0x7a0] sm:$0xf]
    %v624 = vld [vmem:[%s2 + $0x7a4] sm:$0xf]
    %v625 = vld [vmem:[%s2 + $0x7a8] sm:$0xf]
    %v626 = vld [vmem:[%s2 + $0x7ac] sm:$0xf]
    %v627 = vld [vmem:[%s2 + $0x7b0] sm:$0xf]
    %v628 = vld [vmem:[%s2 + $0x7b4] sm:$0xf]
    %v629 = vld [vmem:[%s2 + $0x7b8] sm:$0xf]
    %v630 = vld [vmem:[%s2 + $0x7bc] sm:$0xf]
    %v631 = vld [vmem:[%s2 + $0x7c0] sm:$0xf]
    %v632 = vld [vmem:[%s2 + $0x7c4] sm:$0xf]
    %v633 = vld [vmem:[%s2 + $0x7c8] sm:$0xf]
    %v634 = vld [vmem:[%s2 + $0x7cc] sm:$0xf]
    %v635 = vld [vmem:[%s2 + $0x7d0] sm:$0xf]
    %v636 = vld [vmem:[%s2 + $0x7d4] sm:$0xf]
    %v637 = vld [vmem:[%s2 + $0x7d8] sm:$0xf]
    %v638 = vld [vmem:[%s2 + $0x7dc] sm:$0xf]
    %v639 = vld [vmem:[%s2 + $0x7e0] sm:$0xf]
    %v640 = vld [vmem:[%s2 + $0x7e4] sm:$0xf]
    %v641 = vld [vmem:[%s2 + $0x7e8] sm:$0xf]
    %v642 = vld [vmem:[%s2 + $0x7ec] sm:$0xf]
    %v643 = vld [vmem:[%s2 + $0x7f0] sm:$0xf]
    %v644 = vld [vmem:[%s2 + $0x7f4] sm:$0xf]
    %v645 = vld [vmem:[%s2 + $0x7f8] sm:$0xf]
    %v646 = vld [vmem:[%s2 + $0x7fc] sm:$0xf]
    %v647 = vld [vmem:[%s2 + $0x800] sm:$0xf]
    %v648 = vld [vmem:[%s2 + $0x804] sm:$0xf]
    %v649 = vld [vmem:[%s2 + $0x808] sm:$0xf]
    %v650 = vld [vmem:[%s2 + $0x80c] sm:$0xf]
    %v651 = vld [vmem:[%s2 + $0x810] sm:$0xf]
    %v652 = vld [vmem:[%s2 + $0x814] sm:$0xf]
    %v653 = vld [vmem:[%s2 + $0x818] sm:$0xf]
    %v654 = vld [vmem:[%s2 + $0x81c] sm:$0xf]
    %v655 = vld [vmem:[%s2 + $0x820] sm:$0xf]
    %v656 = vld [vmem:[%s2 + $0x824] sm:$0xf]
    %v657 = vld [vmem:[%s2 + $0x828] sm:$0xf]
    %v658 = vld [vmem:[%s2 + $0x82c] sm:$0xf]
    %v659 = vld [vmem:[%s2 + $0x830] sm:$0xf]
    %v660 = vld [vmem:[%s2 + $0x834] sm:$0xf]
    %v661 = vld [vmem:[%s2 + $0x838] sm:$0xf]
    %v662 = vld [vmem:[%s2 + $0x83c] sm:$0xf]
    %v663 = vld [vmem:[%s2 + $0x840] sm:$0xf]
    %v664 = vld [vmem:[%s2 + $0x844] sm:$0xf]
    %v665 = vld [vmem:[%s2 + $0x848] sm:$0xf]
    %v666 = vld [vmem:[%s2 + $0x84c] sm:$0xf]
    %v667 = vld [vmem:[%s2 + $0x850] sm:$0xf]
    %v668 = vld [vmem:[%s2 + $0x854] sm:$0xf]
    %v669 = vld [vmem:[%s2 + $0x858] sm:$0xf]
    %v670 = vld [vmem:[%s2 + $0x85c] sm:$0xf]
    %v671 = vld [vmem:[%s2 + $0x860] sm:$0xf]
    %v672 = vld [vmem:[%s2 + $0x864] sm:$0xf]
    %v673 = vld [vmem:[%s2 + $0x868] sm:$0xf]
    %v674 = vld [vmem:[%s2 + $0x86c] sm:$0xf]
    %v675 = vld [vmem:[%s2 + $0x870] sm:$0xf]
    %v676 = vld [vmem:[%s2 + $0x874] sm:$0xf]
    %v677 = vld [vmem:[%s2 + $0x878] sm:$0xf]
    %v678 = vld [vmem:[%s2 + $0x87c] sm:$0xf]
    %v679 = vld [vmem:[%s2 + $0x880] sm:$0xf]
    %v680 = vld [vmem:[%s2 + $0x884] sm:$0xf]
    %v681 = vld [vmem:[%s2 + $0x888] sm:$0xf]
    %v682 = vld [vmem:[%s2 + $0x88c] sm:$0xf]
    %v683 = vld [vmem:[%s2 + $0x890] sm:$0xf]
    %v684 = vld [vmem:[%s2 + $0x894] sm:$0xf]
    %v685 = vld [vmem:[%s2 + $0x898] sm:$0xf]
    %v686 = vld [vmem:[%s2 + $0x89c] sm:$0xf]
    %v687 = vld [vmem:[%s2 + $0x8a0] sm:$0xf]
    %v688 = vld [vmem:[%s2 + $0x8a4] sm:$0xf]
    %v689 = vld [vmem:[%s2 + $0x8a8] sm:$0xf]
    %v690 = vld [vmem:[%s2 + $0x8ac] sm:$0xf]
    %v691 = vld [vmem:[%s2 + $0x8b0] sm:$0xf]
    %v692 = vld [vmem:[%s2 + $0x8b4] sm:$0xf]
    %v693 = vld [vmem:[%s2 + $0x8b8] sm:$0xf]
    %v694 = vld [vmem:[%s2 + $0x8bc] sm:$0xf]
    %v695 = vld [vmem:[%s2 + $0x8c0] sm:$0xf]
    %v696 = vld [vmem:[%s2 + $0x8c4] sm:$0xf]
    %v697 = vld [vmem:[%s2 + $0x8c8] sm:$0xf]
    %v698 = vld [vmem:[%s2 + $0x8cc] sm:$0xf]
    %v699 = vld [vmem:[%s2 + $0x8d0] sm:$0xf]
    %v700 = vld [vmem:[%s2 + $0x8d4] sm:$0xf]
    %v701 = vld [vmem:[%s2 + $0x8d8] sm:$0xf]
    %v702 = vld [vmem:[%s2 + $0x8dc] sm:$0xf]
    %v703 = vld [vmem:[%s2 + $0x8e0] sm:$0xf]
    %v704 = vld [vmem:[%s2 + $0x8e4] sm:$0xf]
    %v705 = vld [vmem:[%s2 + $0x8e8] sm:$0xf]
    %v706 = vld [vmem:[%s2 + $0x8ec] sm:$0xf]
    %v707 = vld [vmem:[%s2 + $0x8f0] sm:$0xf]
    %v708 = vld [vmem:[%s2 + $0x8f4] sm:$0xf]
    %v709 = vld [vmem:[%s2 + $0x8f8] sm:$0xf]
    %v710 = vld [vmem:[%s2 + $0x8fc] sm:$0xf]
    %v711 = vld [vmem:[%s2 + $0x900] sm:$0xf]
    %v712 = vld [vmem:[%s2 + $0x904] sm:$0xf]
    %v713 = vld [vmem:[%s2 + $0x908] sm:$0xf]
    %v714 = vld [vmem:[%s2 + $0x90c] sm:$0xf]
    %v715 = vld [vmem:[%s2 + $0x910] sm:$0xf]
    %v716 = vld [vmem:[%s2 + $0x914] sm:$0xf]
    %v717 = vld [vmem:[%s2 + $0x918] sm:$0xf]
    %v718 = vld [vmem:[%s2 + $0x91c] sm:$0xf]
    %v719 = vld [vmem:[%s2 + $0x920] sm:$0xf]
    %v720 = vld [vmem:[%s2 + $0x924] sm:$0xf]
    %v721 = vld [vmem:[%s2 + $0x928] sm:$0xf]
    %v722 = vld [vmem:[%s2 + $0x92c] sm:$0xf]
    %v723 = vld [vmem:[%s2 + $0x930] sm:$0xf]
    %v724 = vld [vmem:[%s2 + $0x934] sm:$0xf]
    %v725 = vld [vmem:[%s2 + $0x938] sm:$0xf]
    %v726 = vld [vmem:[%s2 + $0x93c] sm:$0xf]
    %v727 = vld [vmem:[%s2 + $0x940] sm:$0xf]
    %v728 = vld [vmem:[%s2 + $0x944] sm:$0xf]
    %v729 = vld [vmem:[%s2 + $0x948] sm:$0xf]
    %v730 = vld [vmem:[%s2 + $0x94c] sm:$0xf]
    %v731 = vld [vmem:[%s2 + $0x950] sm:$0xf]
    %v732 = vld [vmem:[%s2 + $0x954] sm:$0xf]
    %v733 = vld [vmem:[%s2 + $0x958] sm:$0xf]
    %v734 = vld [vmem:[%s2 + $0x95c] sm:$0xf]
    %v735 = vld [vmem:[%s2 + $0x960] sm:$0xf]
    %v736 = vld [vmem:[%s2 + $0x964] sm:$0xf]
    %v737 = vld [vmem:[%s2 + $0x968] sm:$0xf]
    %v738 = vld [vmem:[%s2 + $0x96c] sm:$0xf]
    %v739 = vld [vmem:[%s2 + $0x970] sm:$0xf]
    %v740 = vld [vmem:[%s2 + $0x974] sm:$0xf]
    %v741 = vld [vmem:[%s2 + $0x978] sm:$0xf]
    %v742 = vld [vmem:[%s2 + $0x97c] sm:$0xf]
    %v743 = vld [vmem:[%s2 + $0x980] sm:$0xf]
    %v744 = vld [vmem:[%s2 + $0x984] sm:$0xf]
    %v745 = vld [vmem:[%s2 + $0x988] sm:$0xf]
    %v746 = vld [vmem:[%s2 + $0x98c] sm:$0xf]
    %v747 = vld [vmem:[%s2 + $0x990] sm:$0xf]
    %v748 = vld [vmem:[%s2 + $0x994] sm:$0xf]
    %v749 = vld [vmem:[%s2 + $0x998] sm:$0xf]
    %v750 = vld [vmem:[%s2 + $0x99c] sm:$0xf]
    %v751 = vld [vmem:[%s2 + $0x9a0] sm:$0xf]
    %v752 = vld [vmem:[%s2 + $0x9a4] sm:$0xf]
    %v753 = vld [vmem:[%s2 + $0x9a8] sm:$0xf]
    %v754 = vld [vmem:[%s2 + $0x9ac] sm:$0xf]
    %v755 = vld [vmem:[%s2 + $0x9b0] sm:$0xf]
    %v756 = vld [vmem:[%s2 + $0x9b4] sm:$0xf]
    %v757 = vld [vmem:[%s2 + $0x9b8] sm:$0xf]
    %v758 = vld [vmem:[%s2 + $0x9bc] sm:$0xf]
    %v759 = vld [vmem:[%s2 + $0x9c0] sm:$0xf]
    %v760 = vld [vmem:[%s2 + $0x9c4] sm:$0xf]
    %v761 = vld [vmem:[%s2 + $0x9c8] sm:$0xf]
    %v762 = vld [vmem:[%s2 + $0x9cc] sm:$0xf]
    %v763 = vld [vmem:[%s2 + $0x9d0] sm:$0xf]
    %v764 = vld [vmem:[%s2 + $0x9d4] sm:$0xf]
    %v765 = vld [vmem:[%s2 + $0x9d8] sm:$0xf]
    %v766 = vld [vmem:[%s2 + $0x9dc] sm:$0xf]
    %v767 = vld [vmem:[%s2 + $0x9e0] sm:$0xf]
    %v768 = vld [vmem:[%s2 + $0x9e4] sm:$0xf]
    %v769 = vld [vmem:[%s2 + $0x9e8] sm:$0xf]
    %v770 = vld [vmem:[%s2 + $0x9ec] sm:$0xf]
    %v771 = vld [vmem:[%s2 + $0x9f0] sm:$0xf]
    %v772 = vld [vmem:[%s2 + $0x9f4] sm:$0xf]
    %v773 = vld [vmem:[%s2 + $0x9f8] sm:$0xf]
    %v774 = vld [vmem:[%s2 + $0x9fc] sm:$0xf]
    %v775 = vld [vmem:[%s2 + $0xa00] sm:$0xf]
    %v776 = vld [vmem:[%s2 + $0xa04] sm:$0xf]
    %v777 = vld [vmem:[%s2 + $0xa08] sm:$0xf]
    %v778 = vld [vmem:[%s2 + $0xa0c] sm:$0xf]
    %v779 = vld [vmem:[%s2 + $0xa10] sm:$0xf]
    %v780 = vld [vmem:[%s2 + $0xa14] sm:$0xf]
    %v781 = vld [vmem:[%s2 + $0xa18] sm:$0xf]
    %v782 = vld [vmem:[%s2 + $0xa1c] sm:$0xf]
    %v783 = vld [vmem:[%s2 + $0xa20] sm:$0xf]
    %v784 = vld [vmem:[%s2 + $0xa24] sm:$0xf]
    %v785 = vld [vmem:[%s2 + $0xa28] sm:$0xf]
    %v786 = vld [vmem:[%s2 + $0xa2c] sm:$0xf]
    %v787 = vld [vmem:[%s2 + $0xa30] sm:$0xf]
    %v788 = vld [vmem:[%s2 + $0xa34] sm:$0xf]
    %v789 = vld [vmem:[%s2 + $0xa38] sm:$0xf]
    %v790 = vld [vmem:[%s2 + $0xa3c] sm:$0xf]
    %v791 = vld [vmem:[%s2 + $0xa40] sm:$0xf]
    %v792 = vld [vmem:[%s2 + $0xa44] sm:$0xf]
    %v793 = vld [vmem:[%s2 + $0xa48] sm:$0xf]
    %v794 = vld [vmem:[%s2 + $0xa4c] sm:$0xf]
    %v795 = vld [vmem:[%s2 + $0xa50] sm:$0xf]
    %v796 = vld [vmem:[%s2 + $0xa54] sm:$0xf]
    %v797 = vld [vmem:[%s2 + $0xa58] sm:$0xf]
    %v798 = vld [vmem:[%s2 + $0xa5c] sm:$0xf]
    %v799 = vld [vmem:[%s2 + $0xa60] sm:$0xf]
    %v800 = vld [vmem:[%s2 + $0xa64] sm:$0xf]
    %v801 = vld [vmem:[%s2 + $0xa68] sm:$0xf]
    %v802 = vld [vmem:[%s2 + $0xa6c] sm:$0xf]
    %v803 = vld [vmem:[%s2 + $0xa70] sm:$0xf]
    %v804 = vld [vmem:[%s2 + $0xa74] sm:$0xf]
    %v805 = vld [vmem:[%s2 + $0xa78] sm:$0xf]
    %v806 = vld [vmem:[%s2 + $0xa7c] sm:$0xf]
    %v807 = vld [vmem:[%s2 + $0xa80] sm:$0xf]
    %v808 = vld [vmem:[%s2 + $0xa84] sm:$0xf]
    %v809 = vld [vmem:[%s2 + $0xa88] sm:$0xf]
    %v810 = vld [vmem:[%s2 + $0xa8c] sm:$0xf]
    %v811 = vld [vmem:[%s2 + $0xa90] sm:$0xf]
    %v812 = vld [vmem:[%s2 + $0xa94] sm:$0xf]
    %v813 = vld [vmem:[%s2 + $0xa98] sm:$0xf]
    %v814 = vld [vmem:[%s2 + $0xa9c] sm:$0xf]
    %v815 = vld [vmem:[%s2 + $0xaa0] sm:$0xf]
    %v816 = vld [vmem:[%s2 + $0xaa4] sm:$0xf]
    %v817 = vld [vmem:[%s2 + $0xaa8] sm:$0xf]
    %v818 = vld [vmem:[%s2 + $0xaac] sm:$0xf]
    %v819 = vld [vmem:[%s2 + $0xab0] sm:$0xf]
    %v820 = vld [vmem:[%s2 + $0xab4] sm:$0xf]
    %v821 = vld [vmem:[%s2 + $0xab8] sm:$0xf]
    %v822 = vld [vmem:[%s2 + $0xabc] sm:$0xf]
    %v823 = vld [vmem:[%s2 + $0xac0] sm:$0xf]
    %v824 = vld [vmem:[%s2 + $0xac4] sm:$0xf]
    %v825 = vld [vmem:[%s2 + $0xac8] sm:$0xf]
    %v826 = vld [vmem:[%s2 + $0xacc] sm:$0xf]
    %v827 = vld [vmem:[%s2 + $0xad0] sm:$0xf]
    %v828 = vld [vmem:[%s2 + $0xad4] sm:$0xf]
    %v829 = vld [vmem:[%s2 + $0xad8] sm:$0xf]
    %v830 = vld [vmem:[%s2 + $0xadc] sm:$0xf]
    %v831 = vld [vmem:[%s2 + $0xae0] sm:$0xf]
    %v832 = vld [vmem:[%s2 + $0xae4] sm:$0xf]
    %v833 = vld [vmem:[%s2 + $0xae8] sm:$0xf]
    %v834 = vld [vmem:[%s2 + $0xaec] sm:$0xf]
    %v835 = vld [vmem:[%s2 + $0xaf0] sm:$0xf]
    %v836 = vld [vmem:[%s2 + $0xaf4] sm:$0xf]
    %v837 = vld [vmem:[%s2 + $0xaf8] sm:$0xf]
    %v838 = vld [vmem:[%s2 + $0xafc] sm:$0xf]
    %v839 = vld [vmem:[%s2 + $0xb00] sm:$0xf]
    %v840 = vld [vmem:[%s2 + $0xb04] sm:$0xf]
    %v841 = vld [vmem:[%s2 + $0xb08] sm:$0xf]
    %v842 = vld [vmem:[%s2 + $0xb0c] sm:$0xf]
    %v843 = vld [vmem:[%s2 + $0xb10] sm:$0xf]
    %v844 = vld [vmem:[%s2 + $0xb14] sm:$0xf]
    %v845 = vld [vmem:[%s2 + $0xb18] sm:$0xf]
    %v846 = vld [vmem:[%s2 + $0xb1c] sm:$0xf]
    %v847 = vld [vmem:[%s2 + $0xb20] sm:$0xf]
    %v848 = vld [vmem:[%s2 + $0xb24] sm:$0xf]
    %v849 = vld [vmem:[%s2 + $0xb28] sm:$0xf]
    %v850 = vld [vmem:[%s2 + $0xb2c] sm:$0xf]
    %v851 = vld [vmem:[%s2 + $0xb30] sm:$0xf]
    %v852 = vld [vmem:[%s2 + $0xb34] sm:$0xf]
    %v853 = vld [vmem:[%s2 + $0xb38] sm:$0xf]
    %v854 = vld [vmem:[%s2 + $0xb3c] sm:$0xf]
    %v855 = vld [vmem:[%s2 + $0xb40] sm:$0xf]
    %v856 = vld [vmem:[%s2 + $0xb44] sm:$0xf]
    %v857 = vld [vmem:[%s2 + $0xb48] sm:$0xf]
    %v858 = vld [vmem:[%s2 + $0xb4c] sm:$0xf]
    %v859 = vld [vmem:[%s2 + $0xb50] sm:$0xf]
    %v860 = vld [vmem:[%s2 + $0xb54] sm:$0xf]
    %v861 = vld [vmem:[%s2 + $0xb58] sm:$0xf]
    %v862 = vld [vmem:[%s2 + $0xb5c] sm:$0xf]
    %v863 = vld [vmem:[%s2 + $0xb60] sm:$0xf]
    %v864 = vld [vmem:[%s2 + $0xb64] sm:$0xf]
    %v865 = vld [vmem:[%s2 + $0xb68] sm:$0xf]
    %v866 = vld [vmem:[%s2 + $0xb6c] sm:$0xf]
    %v867 = vld [vmem:[%s2 + $0xb70] sm:$0xf]
    %v868 = vld [vmem:[%s2 + $0xb74] sm:$0xf]
    %v869 = vld [vmem:[%s2 + $0xb78] sm:$0xf]
    %v870 = vld [vmem:[%s2 + $0xb7c] sm:$0xf]
    %v871 = vld [vmem:[%s2 + $0xb80] sm:$0xf]
    %v872 = vld [vmem:[%s2 + $0xb84] sm:$0xf]
    %v873 = vld [vmem:[%s2 + $0xb88] sm:$0xf]
    %v874 = vld [vmem:[%s2 + $0xb8c] sm:$0xf]
    %v875 = vld [vmem:[%s2 + $0xb90] sm:$0xf]
    %v876 = vld [vmem:[%s2 + $0xb94] sm:$0xf]
    %v877 = vld [vmem:[%s2 + $0xb98] sm:$0xf]
    %v878 = vld [vmem:[%s2 + $0xb9c] sm:$0xf]
    %v879 = vld [vmem:[%s2 + $0xba0] sm:$0xf]
    %v880 = vld [vmem:[%s2 + $0xba4] sm:$0xf]
    %v881 = vld [vmem:[%s2 + $0xba8] sm:$0xf]
    %v882 = vld [vmem:[%s2 + $0xbac] sm:$0xf]
    %v883 = vld [vmem:[%s2 + $0xbb0] sm:$0xf]
    %v884 = vld [vmem:[%s2 + $0xbb4] sm:$0xf]
    %v885 = vld [vmem:[%s2 + $0xbb8] sm:$0xf]
    %v886 = vld [vmem:[%s2 + $0xbbc] sm:$0xf]
    %v887 = vld [vmem:[%s2 + $0xbc0] sm:$0xf]
    %v888 = vld [vmem:[%s2 + $0xbc4] sm:$0xf]
    %v889 = vld [vmem:[%s2 + $0xbc8] sm:$0xf]
    %v890 = vld [vmem:[%s2 + $0xbcc] sm:$0xf]
    %v891 = vld [vmem:[%s2 + $0xbd0] sm:$0xf]
    %v892 = vld [vmem:[%s2 + $0xbd4] sm:$0xf]
    %v893 = vld [vmem:[%s2 + $0xbd8] sm:$0xf]
    %v894 = vld [vmem:[%s2 + $0xbdc] sm:$0xf]
    %v895 = vld [vmem:[%s2 + $0xbe0] sm:$0xf]
    %v896 = vld [vmem:[%s2 + $0xbe4] sm:$0xf]
    %v897 = vld [vmem:[%s2 + $0xbe8] sm:$0xf]
    %v898 = vld [vmem:[%s2 + $0xbec] sm:$0xf]
    %v899 = vld [vmem:[%s2 + $0xbf0] sm:$0xf]
    %v900 = vld [vmem:[%s2 + $0xbf4] sm:$0xf]
    %v901 = vld [vmem:[%s2 + $0xbf8] sm:$0xf]
    %v902 = vld [vmem:[%s2 + $0xbfc] sm:$0xf]
    %v903 = vld [vmem:[%s2 + $0xc00] sm:$0xf]
    %v904 = vld [vmem:[%s2 + $0xc04] sm:$0xf]
    %v905 = vld [vmem:[%s2 + $0xc08] sm:$0xf]
    %v906 = vld [vmem:[%s2 + $0xc0c] sm:$0xf]
    %v907 = vld [vmem:[%s2 + $0xc10] sm:$0xf]
    %v908 = vld [vmem:[%s2 + $0xc14] sm:$0xf]
    %v909 = vld [vmem:[%s2 + $0xc18] sm:$0xf]
    %v910 = vld [vmem:[%s2 + $0xc1c] sm:$0xf]
    %v911 = vld [vmem:[%s2 + $0xc20] sm:$0xf]
    %v912 = vld [vmem:[%s2 + $0xc24] sm:$0xf]
    %v913 = vld [vmem:[%s2 + $0xc28] sm:$0xf]
    %v914 = vld [vmem:[%s2 + $0xc2c] sm:$0xf]
    %v915 = vld [vmem:[%s2 + $0xc30] sm:$0xf]
    %v916 = vld [vmem:[%s2 + $0xc34] sm:$0xf]
    %v917 = vld [vmem:[%s2 + $0xc38] sm:$0xf]
    %v918 = vld [vmem:[%s2 + $0xc3c] sm:$0xf]
    %v919 = vld [vmem:[%s2 + $0xc40] sm:$0xf]
    %v920 = vld [vmem:[%s2 + $0xc44] sm:$0xf]
    %v921 = vld [vmem:[%s2 + $0xc48] sm:$0xf]
    %v922 = vld [vmem:[%s2 + $0xc4c] sm:$0xf]
    %v923 = vld [vmem:[%s2 + $0xc50] sm:$0xf]
    %v924 = vld [vmem:[%s2 + $0xc54] sm:$0xf]
    %v925 = vld [vmem:[%s2 + $0xc58] sm:$0xf]
    %v926 = vld [vmem:[%s2 + $0xc5c] sm:$0xf]
    %v927 = vld [vmem:[%s2 + $0xc60] sm:$0xf]
    %v928 = vld [vmem:[%s2 + $0xc64] sm:$0xf]
    %v929 = vld [vmem:[%s2 + $0xc68] sm:$0xf]
    %v930 = vld [vmem:[%s2 + $0xc6c] sm:$0xf]
    %v931 = vld [vmem:[%s2 + $0xc70] sm:$0xf]
    %v932 = vld [vmem:[%s2 + $0xc74] sm:$0xf]
    %v933 = vld [vmem:[%s2 + $0xc78] sm:$0xf]
    %v934 = vld [vmem:[%s2 + $0xc7c] sm:$0xf]
    %v935 = vld [vmem:[%s2 + $0xc80] sm:$0xf]
    %v936 = vld [vmem:[%s2 + $0xc84] sm:$0xf]
    %v937 = vld [vmem:[%s2 + $0xc88] sm:$0xf]
    %v938 = vld [vmem:[%s2 + $0xc8c] sm:$0xf]
    %v939 = vld [vmem:[%s2 + $0xc90] sm:$0xf]
    %v940 = vld [vmem:[%s2 + $0xc94] sm:$0xf]
    %v941 = vld [vmem:[%s2 + $0xc98] sm:$0xf]
    %v942 = vld [vmem:[%s2 + $0xc9c] sm:$0xf]
    %v943 = vld [vmem:[%s2 + $0xca0] sm:$0xf]
    %v944 = vld [vmem:[%s2 + $0xca4] sm:$0xf]
    %v945 = vld [vmem:[%s2 + $0xca8] sm:$0xf]
    %v946 = vld [vmem:[%s2 + $0xcac] sm:$0xf]
    %v947 = vld [vmem:[%s2 + $0xcb0] sm:$0xf]
    %v948 = vld [vmem:[%s2 + $0xcb4] sm:$0xf]
    %v949 = vld [vmem:[%s2 + $0xcb8] sm:$0xf]
    %v950 = vld [vmem:[%s2 + $0xcbc] sm:$0xf]
    %v951 = vld [vmem:[%s2 + $0xcc0] sm:$0xf]
    %v952 = vld [vmem:[%s2 + $0xcc4] sm:$0xf]
    %v953 = vld [vmem:[%s2 + $0xcc8] sm:$0xf]
    %v954 = vld [vmem:[%s2 + $0xccc] sm:$0xf]
    %v955 = vld [vmem:[%s2 + $0xcd0] sm:$0xf]
    %v956 = vld [vmem:[%s2 + $0xcd4] sm:$0xf]
    %v957 = vld [vmem:[%s2 + $0xcd8] sm:$0xf]
    %v958 = vld [vmem:[%s2 + $0xcdc] sm:$0xf]
    %v959 = vld [vmem:[%s2 + $0xce0] sm:$0xf]
    %v960 = vld [vmem:[%s2 + $0xce4] sm:$0xf]
    %v961 = vld [vmem:[%s2 + $0xce8] sm:$0xf]
    %v962 = vld [vmem:[%s2 + $0xcec] sm:$0xf]
    %v963 = vld [vmem:[%s2 + $0xcf0] sm:$0xf]
    %v964 = vld [vmem:[%s2 + $0xcf4] sm:$0xf]
    %v965 = vld [vmem:[%s2 + $0xcf8] sm:$0xf]
    %v966 = vld [vmem:[%s2 + $0xcfc] sm:$0xf]
    %v967 = vld [vmem:[%s2 + $0xd00] sm:$0xf]
    %v968 = vld [vmem:[%s2 + $0xd04] sm:$0xf]
    %v969 = vld [vmem:[%s2 + $0xd08] sm:$0xf]
    %v970 = vld [vmem:[%s2 + $0xd0c] sm:$0xf]
    %v971 = vld [vmem:[%s2 + $0xd10] sm:$0xf]
    %v972 = vld [vmem:[%s2 + $0xd14] sm:$0xf]
    %v973 = vld [vmem:[%s2 + $0xd18] sm:$0xf]
    %v974 = vld [vmem:[%s2 + $0xd1c] sm:$0xf]
    %v975 = vld [vmem:[%s2 + $0xd20] sm:$0xf]
    %v976 = vld [vmem:[%s2 + $0xd24] sm:$0xf]
    %v977 = vld [vmem:[%s2 + $0xd28] sm:$0xf]
    %v978 = vld [vmem:[%s2 + $0xd2c] sm:$0xf]
    %v979 = vld [vmem:[%s2 + $0xd30] sm:$0xf]
    %v980 = vld [vmem:[%s2 + $0xd34] sm:$0xf]
    %v981 = vld [vmem:[%s2 + $0xd38] sm:$0xf]
    %v982 = vld [vmem:[%s2 + $0xd3c] sm:$0xf]
    %v983 = vld [vmem:[%s2 + $0xd40] sm:$0xf]
    %v984 = vld [vmem:[%s2 + $0xd44] sm:$0xf]
    %v985 = vld [vmem:[%s2 + $0xd48] sm:$0xf]
    %v986 = vld [vmem:[%s2 + $0xd4c] sm:$0xf]
    %v987 = vld [vmem:[%s2 + $0xd50] sm:$0xf]
    %v988 = vld [vmem:[%s2 + $0xd54] sm:$0xf]
    %v989 = vld [vmem:[%s2 + $0xd58] sm:$0xf]
    %v990 = vld [vmem:[%s2 + $0xd5c] sm:$0xf]
    %v991 = vld [vmem:[%s2 + $0xd60] sm:$0xf]
    %v992 = vld [vmem:[%s2 + $0xd64] sm:$0xf]
    %v993 = vld [vmem:[%s2 + $0xd68] sm:$0xf]
    %v994 = vld [vmem:[%s2 + $0xd6c] sm:$0xf]
    %v995 = vld [vmem:[%s2 + $0xd70] sm:$0xf]
    %v996 = vld [vmem:[%s2 + $0xd74] sm:$0xf]
    %v997 = vld [vmem:[%s2 + $0xd78] sm:$0xf]
    %v998 = vld [vmem:[%s2 + $0xd7c] sm:$0xf]
    %v999 = vld [vmem:[%s2 + $0xd80] sm:$0xf]
    %v1000 = vld [vmem:[%s2 + $0xd84] sm:$0xf]
    %v1001 = vld [vmem:[%s2 + $0xd88] sm:$0xf]
    %v1002 = vld [vmem:[%s2 + $0xd8c] sm:$0xf]
    %v1003 = vld [vmem:[%s2 + $0xd90] sm:$0xf]
    %v1004 = vld [vmem:[%s2 + $0xd94] sm:$0xf]
    %v1005 = vld [vmem:[%s2 + $0xd98] sm:$0xf]
    %v1006 = vld [vmem:[%s2 + $0xd9c] sm:$0xf]
    %v1007 = vld [vmem:[%s2 + $0xda0] sm:$0xf]
    %v1008 = vld [vmem:[%s2 + $0xda4] sm:$0xf]
    %v1009 = vld [vmem:[%s2 + $0xda8] sm:$0xf]
    %v1010 = vld [vmem:[%s2 + $0xdac] sm:$0xf]
    %v1011 = vld [vmem:[%s2 + $0xdb0] sm:$0xf]
    %v1012 = vld [vmem:[%s2 + $0xdb4] sm:$0xf]
    %v1013 = vld [vmem:[%s2 + $0xdb8] sm:$0xf]
    %v1014 = vld [vmem:[%s2 + $0xdbc] sm:$0xf]
    %v1015 = vld [vmem:[%s2 + $0xdc0] sm:$0xf]
    %v1016 = vld [vmem:[%s2 + $0xdc4] sm:$0xf]
    %v1017 = vld [vmem:[%s2 + $0xdc8] sm:$0xf]
    %v1018 = vld [vmem:[%s2 + $0xdcc] sm:$0xf]
    %v1019 = vld [vmem:[%s2 + $0xdd0] sm:$0xf]
    %v1020 = vld [vmem:[%s2 + $0xdd4] sm:$0xf]
    %v1021 = vld [vmem:[%s2 + $0xdd8] sm:$0xf]
    %v1022 = vld [vmem:[%s2 + $0xddc] sm:$0xf]
    %v1023 = vld [vmem:[%s2 + $0xde0] sm:$0xf]
    %v1024 = vld [vmem:[%s2 + $0xde4] sm:$0xf]
    %v1025 = vld [vmem:[%s2 + $0xde8] sm:$0xf]
    %v1026 = vld [vmem:[%s2 + $0xdec] sm:$0xf]
    %v1027 = vld [vmem:[%s2 + $0xdf0] sm:$0xf]
    %v1028 = vld [vmem:[%s2 + $0xdf4] sm:$0xf]
    %v1029 = vld [vmem:[%s2 + $0xdf8] sm:$0xf]
    %v1030 = vld [vmem:[%s2 + $0xdfc] sm:$0xf]
    %v1031 = vld [vmem:[%s2 + $0xe00] sm:$0xf]
    %v1032 = vld [vmem:[%s2 + $0xe04] sm:$0xf]
    %v1033 = vld [vmem:[%s2 + $0xe08] sm:$0xf]
    %v1034 = vld [vmem:[%s2 + $0xe0c] sm:$0xf]
    %v1035 = vld [vmem:[%s2 + $0xe10] sm:$0xf]
    %v1036 = vld [vmem:[%s2 + $0xe14] sm:$0xf]
    %v1037 = vld [vmem:[%s2 + $0xe18] sm:$0xf]
    %v1038 = vld [vmem:[%s2 + $0xe1c] sm:$0xf]
    %v1039 = vld [vmem:[%s2 + $0xe20] sm:$0xf]
    %v1040 = vld [vmem:[%s2 + $0xe24] sm:$0xf]
    %v1041 = vld [vmem:[%s2 + $0xe28] sm:$0xf]
    %v1042 = vld [vmem:[%s2 + $0xe2c] sm:$0xf]
    %v1043 = vld [vmem:[%s2 + $0xe30] sm:$0xf]
    %v1044 = vld [vmem:[%s2 + $0xe34] sm:$0xf]
    %v1045 = vld [vmem:[%s2 + $0xe38] sm:$0xf]
    %v1046 = vld [vmem:[%s2 + $0xe3c] sm:$0xf]
    %v1047 = vld [vmem:[%s2 + $0xe40] sm:$0xf]
    %v1048 = vld [vmem:[%s2 + $0xe44] sm:$0xf]
    %v1049 = vld [vmem:[%s2 + $0xe48] sm:$0xf]
    %v1050 = vld [vmem:[%s2 + $0xe4c] sm:$0xf]
    %v1051 = vld [vmem:[%s2 + $0xe50] sm:$0xf]
    %v1052 = vld [vmem:[%s2 + $0xe54] sm:$0xf]
    %v1053 = vld [vmem:[%s2 + $0xe58] sm:$0xf]
    %v1054 = vld [vmem:[%s2 + $0xe5c] sm:$0xf]
    %v1055 = vld [vmem:[%s2 + $0xe60] sm:$0xf]
    %v1056 = vld [vmem:[%s2 + $0xe64] sm:$0xf]
    %v1057 = vld [vmem:[%s2 + $0xe68] sm:$0xf]
    %v1058 = vld [vmem:[%s2 + $0xe6c] sm:$0xf]
    %v1059 = vld [vmem:[%s2 + $0xe70] sm:$0xf]
    %v1060 = vld [vmem:[%s2 + $0xe74] sm:$0xf]
    %v1061 = vld [vmem:[%s2 + $0xe78] sm:$0xf]
    %v1062 = vld [vmem:[%s2 + $0xe7c] sm:$0xf]
    %v1063 = vld [vmem:[%s2 + $0xe80] sm:$0xf]
    %v1064 = vld [vmem:[%s2 + $0xe84] sm:$0xf]
    %v1065 = vld [vmem:[%s2 + $0xe88] sm:$0xf]
    %v1066 = vld [vmem:[%s2 + $0xe8c] sm:$0xf]
    %v1067 = vld [vmem:[%s2 + $0xe90] sm:$0xf]
    %v1068 = vld [vmem:[%s2 + $0xe94] sm:$0xf]
    %v1069 = vld [vmem:[%s2 + $0xe98] sm:$0xf]
    %v1070 = vld [vmem:[%s2 + $0xe9c] sm:$0xf]
    %v1071 = vld [vmem:[%s2 + $0xea0] sm:$0xf]
    %v1072 = vld [vmem:[%s2 + $0xea4] sm:$0xf]
    %v1073 = vld [vmem:[%s2 + $0xea8] sm:$0xf]
    %v1074 = vld [vmem:[%s2 + $0xeac] sm:$0xf]
    %v1075 = vld [vmem:[%s2 + $0xeb0] sm:$0xf]
    %v1076 = vld [vmem:[%s2 + $0xeb4] sm:$0xf]
    %v1077 = vld [vmem:[%s2 + $0xeb8] sm:$0xf]
    %v1078 = vld [vmem:[%s2 + $0xebc] sm:$0xf]
    %v1079 = vld [vmem:[%s2 + $0xec0] sm:$0xf]
    %v1080 = vld [vmem:[%s2 + $0xec4] sm:$0xf]
    %v1081 = vld [vmem:[%s2 + $0xec8] sm:$0xf]
    %v1082 = vld [vmem:[%s2 + $0xecc] sm:$0xf]
    %v1083 = vld [vmem:[%s2 + $0xed0] sm:$0xf]
    %v1084 = vld [vmem:[%s2 + $0xed4] sm:$0xf]
    %v1085 = vld [vmem:[%s2 + $0xed8] sm:$0xf]
    %v1086 = vld [vmem:[%s2 + $0xedc] sm:$0xf]
    %v1087 = vld [vmem:[%s2 + $0xee0] sm:$0xf]
    %v1088 = vld [vmem:[%s2 + $0xee4] sm:$0xf]
    %v1089 = vld [vmem:[%s2 + $0xee8] sm:$0xf]
    %v1090 = vld [vmem:[%s2 + $0xeec] sm:$0xf]
    %v1091 = vld [vmem:[%s2 + $0xef0] sm:$0xf]
    %v1092 = vld [vmem:[%s2 + $0xef4] sm:$0xf]
    %v1093 = vld [vmem:[%s2 + $0xef8] sm:$0xf]
    %v1094 = vld [vmem:[%s2 + $0xefc] sm:$0xf]
    %v1095 = vld [vmem:[%s2 + $0xf00] sm:$0xf]
    %v1096 = vld [vmem:[%s2 + $0xf04] sm:$0xf]
    %v1097 = vld [vmem:[%s2 + $0xf08] sm:$0xf]
    %v1098 = vld [vmem:[%s2 + $0xf0c] sm:$0xf]
    %v1099 = vld [vmem:[%s2 + $0xf10] sm:$0xf]
    %v1100 = vld [vmem:[%s2 + $0xf14] sm:$0xf]
    %v1101 = vld [vmem:[%s2 + $0xf18] sm:$0xf]
    %v1102 = vld [vmem:[%s2 + $0xf1c] sm:$0xf]
    %v1103 = vld [vmem:[%s2 + $0xf20] sm:$0xf]
    %v1104 = vld [vmem:[%s2 + $0xf24] sm:$0xf]
    %v1105 = vld [vmem:[%s2 + $0xf28] sm:$0xf]
    %v1106 = vld [vmem:[%s2 + $0xf2c] sm:$0xf]
    %v1107 = vld [vmem:[%s2 + $0xf30] sm:$0xf]
    %v1108 = vld [vmem:[%s2 + $0xf34] sm:$0xf]
    %v1109 = vld [vmem:[%s2 + $0xf38] sm:$0xf]
    %v1110 = vld [vmem:[%s2 + $0xf3c] sm:$0xf]
    %v1111 = vld [vmem:[%s2 + $0xf40] sm:$0xf]
    %v1112 = vld [vmem:[%s2 + $0xf44] sm:$0xf]
    %v1113 = vld [vmem:[%s2 + $0xf48] sm:$0xf]
    %v1114 = vld [vmem:[%s2 + $0xf4c] sm:$0xf]
    %v1115 = vld [vmem:[%s2 + $0xf50] sm:$0xf]
    %v1116 = vld [vmem:[%s2 + $0xf54] sm:$0xf]
    %v1117 = vld [vmem:[%s2 + $0xf58] sm:$0xf]
    %v1118 = vld [vmem:[%s2 + $0xf5c] sm:$0xf]
    %v1119 = vld [vmem:[%s2 + $0xf60] sm:$0xf]
    %v1120 = vld [vmem:[%s2 + $0xf64] sm:$0xf]
    %v1121 = vld [vmem:[%s2 + $0xf68] sm:$0xf]
    %v1122 = vld [vmem:[%s2 + $0xf6c] sm:$0xf]
    %v1123 = vld [vmem:[%s2 + $0xf70] sm:$0xf]
    %v1124 = vld [vmem:[%s2 + $0xf74] sm:$0xf]
    %v1125 = vld [vmem:[%s2 + $0xf78] sm:$0xf]
    %v1126 = vld [vmem:[%s2 + $0xf7c] sm:$0xf]
    %v1127 = vld [vmem:[%s2 + $0xf80] sm:$0xf]
    %v1128 = vld [vmem:[%s2 + $0xf84] sm:$0xf]
    %v1129 = vld [vmem:[%s2 + $0xf88] sm:$0xf]
    %v1130 = vld [vmem:[%s2 + $0xf8c] sm:$0xf]
    %v1131 = vld [vmem:[%s2 + $0xf90] sm:$0xf]
    %v1132 = vld [vmem:[%s2 + $0xf94] sm:$0xf]
    %v1133 = vld [vmem:[%s2 + $0xf98] sm:$0xf]
    %v1134 = vld [vmem:[%s2 + $0xf9c] sm:$0xf]
    %v1135 = vld [vmem:[%s2 + $0xfa0] sm:$0xf]
    %v1136 = vld [vmem:[%s2 + $0xfa4] sm:$0xf]
    %v1137 = vld [vmem:[%s2 + $0xfa8] sm:$0xf]
    %v1138 = vld [vmem:[%s2 + $0xfac] sm:$0xf]
    %v1139 = vld [vmem:[%s2 + $0xfb0] sm:$0xf]
    %v1140 = vld [vmem:[%s2 + $0xfb4] sm:$0xf]
    %v1141 = vld [vmem:[%s2 + $0xfb8] sm:$0xf]
    %v1142 = vld [vmem:[%s2 + $0xfbc] sm:$0xf]
    %v1143 = vld [vmem:[%s2 + $0xfc0] sm:$0xf]
    %v1144 = vld [vmem:[%s2 + $0xfc4] sm:$0xf]
    %v1145 = vld [vmem:[%s2 + $0xfc8] sm:$0xf]
    %v1146 = vld [vmem:[%s2 + $0xfcc] sm:$0xf]
    %v1147 = vld [vmem:[%s2 + $0xfd0] sm:$0xf]
    %v1148 = vld [vmem:[%s2 + $0xfd4] sm:$0xf]
    %v1149 = vld [vmem:[%s2 + $0xfd8] sm:$0xf]
    %v1150 = vld [vmem:[%s2 + $0xfdc] sm:$0xf]
    %v1151 = vld [vmem:[%s2 + $0xfe0] sm:$0xf]
    %v1152 = vld [vmem:[%s2 + $0xfe4] sm:$0xf]
    %v1153 = vld [vmem:[%s2 + $0xfe8] sm:$0xf]
    %v1154 = vld [vmem:[%s2 + $0xfec] sm:$0xf]
    %v1155 = vld [vmem:[%s2 + $0xff0] sm:$0xf]
    %v1156 = vld [vmem:[%s2 + $0xff4] sm:$0xf]
    %v1157 = vld [vmem:[%s2 + $0xff8] sm:$0xf]
    %v1158 = vld [vmem:[%s2 + $0xffc] sm:$0xf]
    %v1159 = vld [vmem:[%s2 + $0x1000] sm:$0xf]
    %v1160 = vld [vmem:[%s2 + $0x1004] sm:$0xf]
    %v1161 = vld [vmem:[%s2 + $0x1008] sm:$0xf]
    %v1162 = vld [vmem:[%s2 + $0x100c] sm:$0xf]
    %v1163 = vld [vmem:[%s2 + $0x1010] sm:$0xf]
    %v1164 = vld [vmem:[%s2 + $0x1014] sm:$0xf]
    %v1165 = vld [vmem:[%s2 + $0x1018] sm:$0xf]
    %v1166 = vld [vmem:[%s2 + $0x101c] sm:$0xf]
    %v1167 = vld [vmem:[%s2 + $0x1020] sm:$0xf]
    %v1168 = vld [vmem:[%s2 + $0x1024] sm:$0xf]
    %v1169 = vld [vmem:[%s2 + $0x1028] sm:$0xf]
    %v1170 = vld [vmem:[%s2 + $0x102c] sm:$0xf]
    %v1171 = vld [vmem:[%s2 + $0x1030] sm:$0xf]
    %v1172 = vld [vmem:[%s2 + $0x1034] sm:$0xf]
    %v1173 = vld [vmem:[%s2 + $0x1038] sm:$0xf]
    %v1174 = vld [vmem:[%s2 + $0x103c] sm:$0xf]
    %v1175 = vld [vmem:[%s2 + $0x1040] sm:$0xf]
    %v1176 = vld [vmem:[%s2 + $0x1044] sm:$0xf]
    %v1177 = vld [vmem:[%s2 + $0x1048] sm:$0xf]
    %v1178 = vld [vmem:[%s2 + $0x104c] sm:$0xf]
    %v1179 = vld [vmem:[%s2 + $0x1050] sm:$0xf]
    %v1180 = vld [vmem:[%s2 + $0x1054] sm:$0xf]
    %v1181 = vld [vmem:[%s2 + $0x1058] sm:$0xf]
    %v1182 = vld [vmem:[%s2 + $0x105c] sm:$0xf]
    %v1183 = vld [vmem:[%s2 + $0x1060] sm:$0xf]
    %v1184 = vld [vmem:[%s2 + $0x1064] sm:$0xf]
    %v1185 = vld [vmem:[%s2 + $0x1068] sm:$0xf]
    %v1186 = vld [vmem:[%s2 + $0x106c] sm:$0xf]
    %v1187 = vld [vmem:[%s2 + $0x1070] sm:$0xf]
    %v1188 = vld [vmem:[%s2 + $0x1074] sm:$0xf]
    %v1189 = vld [vmem:[%s2 + $0x1078] sm:$0xf]
    %v1190 = vld [vmem:[%s2 + $0x107c] sm:$0xf]
    %v1191 = vld [vmem:[%s2 + $0x1080] sm:$0xf]
    %v1192 = vld [vmem:[%s2 + $0x1084] sm:$0xf]
    %v1193 = vld [vmem:[%s2 + $0x1088] sm:$0xf]
    %v1194 = vld [vmem:[%s2 + $0x108c] sm:$0xf]
    %v1195 = vld [vmem:[%s2 + $0x1090] sm:$0xf]
    %v1196 = vld [vmem:[%s2 + $0x1094] sm:$0xf]
    %v1197 = vld [vmem:[%s2 + $0x1098] sm:$0xf]
    %v1198 = vld [vmem:[%s2 + $0x109c] sm:$0xf]
    %v1199 = vld [vmem:[%s2 + $0x10a0] sm:$0xf]
    %v1200 = vld [vmem:[%s2 + $0x10a4] sm:$0xf]
    %v1201 = vld [vmem:[%s2 + $0x10a8] sm:$0xf]
    %v1202 = vld [vmem:[%s2 + $0x10ac] sm:$0xf]
    %v1203 = vld [vmem:[%s2 + $0x10b0] sm:$0xf]
    %v1204 = vld [vmem:[%s2 + $0x10b4] sm:$0xf]
    %v1205 = vld [vmem:[%s2 + $0x10b8] sm:$0xf]
    %v1206 = vld [vmem:[%s2 + $0x10bc] sm:$0xf]
    %v1207 = vld [vmem:[%s2 + $0x10c0] sm:$0xf]
    %v1208 = vld [vmem:[%s2 + $0x10c4] sm:$0xf]
    %v1209 = vld [vmem:[%s2 + $0x10c8] sm:$0xf]
    %v1210 = vld [vmem:[%s2 + $0x10cc] sm:$0xf]
    %v1211 = vld [vmem:[%s2 + $0x10d0] sm:$0xf]
    %v1212 = vld [vmem:[%s2 + $0x10d4] sm:$0xf]
    %v1213 = vld [vmem:[%s2 + $0x10d8] sm:$0xf]
    %v1214 = vld [vmem:[%s2 + $0x10dc] sm:$0xf]
    %v1215 = vld [vmem:[%s2 + $0x10e0] sm:$0xf]
    %v1216 = vld [vmem:[%s2 + $0x10e4] sm:$0xf]
    %v1217 = vld [vmem:[%s2 + $0x10e8] sm:$0xf]
    %v1218 = vld [vmem:[%s2 + $0x10ec] sm:$0xf]
    %v1219 = vld [vmem:[%s2 + $0x10f0] sm:$0xf]
    %v1220 = vld [vmem:[%s2 + $0x10f4] sm:$0xf]
    %v1221 = vld [vmem:[%s2 + $0x10f8] sm:$0xf]
    %v1222 = vld [vmem:[%s2 + $0x10fc] sm:$0xf]
    %v1223 = vld [vmem:[%s2 + $0x1100] sm:$0xf]
    %v1224 = vld [vmem:[%s2 + $0x1104] sm:$0xf]
    %v1225 = vld [vmem:[%s2 + $0x1108] sm:$0xf]
    %v1226 = vld [vmem:[%s2 + $0x110c] sm:$0xf]
    %v1227 = vld [vmem:[%s2 + $0x1110] sm:$0xf]
    %v1228 = vld [vmem:[%s2 + $0x1114] sm:$0xf]
    %v1229 = vld [vmem:[%s2 + $0x1118] sm:$0xf]
    %v1230 = vld [vmem:[%s2 + $0x111c] sm:$0xf]
    %v1231 = vld [vmem:[%s2 + $0x1120] sm:$0xf]
    %v1232 = vld [vmem:[%s2 + $0x1124] sm:$0xf]
    %v1233 = vld [vmem:[%s2 + $0x1128] sm:$0xf]
    %v1234 = vld [vmem:[%s2 + $0x112c] sm:$0xf]
    %v1235 = vld [vmem:[%s2 + $0x1130] sm:$0xf]
    %v1236 = vld [vmem:[%s2 + $0x1134] sm:$0xf]
    %v1237 = vld [vmem:[%s2 + $0x1138] sm:$0xf]
    %v1238 = vld [vmem:[%s2 + $0x113c] sm:$0xf]
    %v1239 = vld [vmem:[%s2 + $0x1140] sm:$0xf]
    %v1240 = vld [vmem:[%s2 + $0x1144] sm:$0xf]
    %v1241 = vld [vmem:[%s2 + $0x1148] sm:$0xf]
    %v1242 = vld [vmem:[%s2 + $0x114c] sm:$0xf]
    %v1243 = vld [vmem:[%s2 + $0x1150] sm:$0xf]
    %v1244 = vld [vmem:[%s2 + $0x1154] sm:$0xf]
    %v1245 = vld [vmem:[%s2 + $0x1158] sm:$0xf]
    %v1246 = vld [vmem:[%s2 + $0x115c] sm:$0xf]
    %v1247 = vld [vmem:[%s2 + $0x1160] sm:$0xf]
    %v1248 = vld [vmem:[%s2 + $0x1164] sm:$0xf]
    %v1249 = vld [vmem:[%s2 + $0x1168] sm:$0xf]
    %v1250 = vld [vmem:[%s2 + $0x116c] sm:$0xf]
    %v1251 = vld [vmem:[%s2 + $0x1170] sm:$0xf]
    %v1252 = vld [vmem:[%s2 + $0x1174] sm:$0xf]
    %v1253 = vld [vmem:[%s2 + $0x1178] sm:$0xf]
    %v1254 = vld [vmem:[%s2 + $0x117c] sm:$0xf]
    %v1255 = vld [vmem:[%s2 + $0x1180] sm:$0xf]
    %v1256 = vld [vmem:[%s2 + $0x1184] sm:$0xf]
    %v1257 = vld [vmem:[%s2 + $0x1188] sm:$0xf]
    %v1258 = vld [vmem:[%s2 + $0x118c] sm:$0xf]
    %v1259 = vld [vmem:[%s2 + $0x1190] sm:$0xf]
    %v1260 = vld [vmem:[%s2 + $0x1194] sm:$0xf]
    %v1261 = vld [vmem:[%s2 + $0x1198] sm:$0xf]
    %v1262 = vld [vmem:[%s2 + $0x119c] sm:$0xf]
    %v1263 = vld [vmem:[%s2 + $0x11a0] sm:$0xf]
    %v1264 = vld [vmem:[%s2 + $0x11a4] sm:$0xf]
    %v1265 = vld [vmem:[%s2 + $0x11a8] sm:$0xf]
    %v1266 = vld [vmem:[%s2 + $0x11ac] sm:$0xf]
    %v1267 = vld [vmem:[%s2 + $0x11b0] sm:$0xf]
    %v1268 = vld [vmem:[%s2 + $0x11b4] sm:$0xf]
    %v1269 = vld [vmem:[%s2 + $0x11b8] sm:$0xf]
    %v1270 = vld [vmem:[%s2 + $0x11bc] sm:$0xf]
    %v1271 = vld [vmem:[%s2 + $0x11c0] sm:$0xf]
    %v1272 = vld [vmem:[%s2 + $0x11c4] sm:$0xf]
    %v1273 = vld [vmem:[%s2 + $0x11c8] sm:$0xf]
    %v1274 = vld [vmem:[%s2 + $0x11cc] sm:$0xf]
    %v1275 = vld [vmem:[%s2 + $0x11d0] sm:$0xf]
    %v1276 = vld [vmem:[%s2 + $0x11d4] sm:$0xf]
    %v1277 = vld [vmem:[%s2 + $0x11d8] sm:$0xf]
    %v1278 = vld [vmem:[%s2 + $0x11dc] sm:$0xf]
    %v1279 = vld [vmem:[%s2 + $0x11e0] sm:$0xf]
    %v1280 = vld [vmem:[%s2 + $0x11e4] sm:$0xf]
    %v1281 = vld [vmem:[%s2 + $0x11e8] sm:$0xf]
    %v1282 = vld [vmem:[%s2 + $0x11ec] sm:$0xf]
    %v1283 = vld [vmem:[%s2 + $0x11f0] sm:$0xf]
    %v1284 = vld [vmem:[%s2 + $0x11f4] sm:$0xf]
    %v1285 = vld [vmem:[%s2 + $0x11f8] sm:$0xf]
    %v1286 = vld [vmem:[%s2 + $0x11fc] sm:$0xf]
    %v1287 = vld [vmem:[%s2 + $0x1200] sm:$0xf]
    %v1288 = vld [vmem:[%s2 + $0x1204] sm:$0xf]
    %v1289 = vld [vmem:[%s2 + $0x1208] sm:$0xf]
    %v1290 = vld [vmem:[%s2 + $0x120c] sm:$0xf]
    %v1291 = vld [vmem:[%s2 + $0x1210] sm:$0xf]
    %v1292 = vld [vmem:[%s2 + $0x1214] sm:$0xf]
    %v1293 = vld [vmem:[%s2 + $0x1218] sm:$0xf]
    %v1294 = vld [vmem:[%s2 + $0x121c] sm:$0xf]
    %v1295 = vld [vmem:[%s2 + $0x1220] sm:$0xf]
    %v1296 = vld [vmem:[%s2 + $0x1224] sm:$0xf]
    %v1297 = vld [vmem:[%s2 + $0x1228] sm:$0xf]
    %v1298 = vld [vmem:[%s2 + $0x122c] sm:$0xf]
    %v1299 = vld [vmem:[%s2 + $0x1230] sm:$0xf]
    %v1300 = vld [vmem:[%s2 + $0x1234] sm:$0xf]
    %v1301 = vld [vmem:[%s2 + $0x1238] sm:$0xf]
    %v1302 = vld [vmem:[%s2 + $0x123c] sm:$0xf]
    %v1303 = vld [vmem:[%s2 + $0x1240] sm:$0xf]
    %v1304 = vld [vmem:[%s2 + $0x1244] sm:$0xf]
    %v1305 = vld [vmem:[%s2 + $0x1248] sm:$0xf]
    %v1306 = vld [vmem:[%s2 + $0x124c] sm:$0xf]
    %v1307 = vld [vmem:[%s2 + $0x1250] sm:$0xf]
    %v1308 = vld [vmem:[%s2 + $0x1254] sm:$0xf]
    %v1309 = vld [vmem:[%s2 + $0x1258] sm:$0xf]
    %v1310 = vld [vmem:[%s2 + $0x125c] sm:$0xf]
    %v1311 = vld [vmem:[%s2 + $0x1260] sm:$0xf]
    %v1312 = vld [vmem:[%s2 + $0x1264] sm:$0xf]
    %v1313 = vld [vmem:[%s2 + $0x1268] sm:$0xf]
    %v1314 = vld [vmem:[%s2 + $0x126c] sm:$0xf]
    %v1315 = vld [vmem:[%s2 + $0x1270] sm:$0xf]
    %v1316 = vld [vmem:[%s2 + $0x1274] sm:$0xf]
    %v1317 = vld [vmem:[%s2 + $0x1278] sm:$0xf]
    %v1318 = vld [vmem:[%s2 + $0x127c] sm:$0xf]
    %v1319 = vld [vmem:[%s2 + $0x1280] sm:$0xf]
    %v1320 = vld [vmem:[%s2 + $0x1284] sm:$0xf]
    %v1321 = vld [vmem:[%s2 + $0x1288] sm:$0xf]
    %v1322 = vld [vmem:[%s2 + $0x128c] sm:$0xf]
    %v1323 = vld [vmem:[%s2 + $0x1290] sm:$0xf]
    %v1324 = vld [vmem:[%s2 + $0x1294] sm:$0xf]
    %v1325 = vld [vmem:[%s2 + $0x1298] sm:$0xf]
    %v1326 = vld [vmem:[%s2 + $0x129c] sm:$0xf]
    %v1327 = vld [vmem:[%s2 + $0x12a0] sm:$0xf]
    %v1328 = vld [vmem:[%s2 + $0x12a4] sm:$0xf]
    %v1329 = vld [vmem:[%s2 + $0x12a8] sm:$0xf]
    %v1330 = vld [vmem:[%s2 + $0x12ac] sm:$0xf]
    %v1331 = vld [vmem:[%s2 + $0x12b0] sm:$0xf]
    %v1332 = vld [vmem:[%s2 + $0x12b4] sm:$0xf]
    %v1333 = vld [vmem:[%s2 + $0x12b8] sm:$0xf]
    %v1334 = vld [vmem:[%s2 + $0x12bc] sm:$0xf]
    %v1335 = vld [vmem:[%s2 + $0x12c0] sm:$0xf]
    %v1336 = vld [vmem:[%s2 + $0x12c4] sm:$0xf]
    %v1337 = vld [vmem:[%s2 + $0x12c8] sm:$0xf]
    %v1338 = vld [vmem:[%s2 + $0x12cc] sm:$0xf]
    %v1339 = vld [vmem:[%s2 + $0x12d0] sm:$0xf]
    %v1340 = vld [vmem:[%s2 + $0x12d4] sm:$0xf]
    %v1341 = vld [vmem:[%s2 + $0x12d8] sm:$0xf]
    %v1342 = vld [vmem:[%s2 + $0x12dc] sm:$0xf]
    %v1343 = vld [vmem:[%s2 + $0x12e0] sm:$0xf]
    %v1344 = vld [vmem:[%s2 + $0x12e4] sm:$0xf]
    %v1345 = vld [vmem:[%s2 + $0x12e8] sm:$0xf]
    %v1346 = vld [vmem:[%s2 + $0x12ec] sm:$0xf]
    %v1347 = vld [vmem:[%s2 + $0x12f0] sm:$0xf]
    %v1348 = vld [vmem:[%s2 + $0x12f4] sm:$0xf]
    %v1349 = vld [vmem:[%s2 + $0x12f8] sm:$0xf]
    %v1350 = vld [vmem:[%s2 + $0x12fc] sm:$0xf]
    %v1351 = vld [vmem:[%s2 + $0x1300] sm:$0xf]
    %v1352 = vld [vmem:[%s2 + $0x1304] sm:$0xf]
    %v1353 = vld [vmem:[%s2 + $0x1308] sm:$0xf]
    %v1354 = vld [vmem:[%s2 + $0x130c] sm:$0xf]
    %v1355 = vld [vmem:[%s2 + $0x1310] sm:$0xf]
    %v1356 = vld [vmem:[%s2 + $0x1314] sm:$0xf]
    %v1357 = vld [vmem:[%s2 + $0x1318] sm:$0xf]
    %v1358 = vld [vmem:[%s2 + $0x131c] sm:$0xf]
    %v1359 = vld [vmem:[%s2 + $0x1320] sm:$0xf]
    %v1360 = vld [vmem:[%s2 + $0x1324] sm:$0xf]
    %v1361 = vld [vmem:[%s2 + $0x1328] sm:$0xf]
    %v1362 = vld [vmem:[%s2 + $0x132c] sm:$0xf]
    %v1363 = vld [vmem:[%s2 + $0x1330] sm:$0xf]
    %v1364 = vld [vmem:[%s2 + $0x1334] sm:$0xf]
    %v1365 = vld [vmem:[%s2 + $0x1338] sm:$0xf]
    %v1366 = vld [vmem:[%s2 + $0x133c] sm:$0xf]
    %v1367 = vld [vmem:[%s3] sm:$0x1]
    %v1369 = vlaneseq
    %v1370 = vshrl.u32 %v1369, 7
    %v1371 = vsub.s32 0, %v1370
    %v1372 = vrot.slane %v1367, %v1371
    %v1452 = vunpack.c.l.b16 %v57
    %v1453 = vunpack.c.h.b16 %v57
    %v1454 = vunpack.c.l.b16 %v58
    %v1455 = vunpack.c.h.b16 %v58
    %v1456 = vunpack.c.l.b16 %v59
    %v1457 = vunpack.c.h.b16 %v59
    %v1458 = vunpack.c.l.b16 %v60
    %v1459 = vunpack.c.h.b16 %v60
    %v1460 = vunpack.c.l.b16 %v61
    %v1461 = vunpack.c.h.b16 %v61
    %v1462 = vunpack.c.l.b16 %v62
    %v1463 = vunpack.c.h.b16 %v62
    %v1464 = vunpack.c.l.b16 %v63
    %v1465 = vunpack.c.h.b16 %v63
    %v1466 = vunpack.c.l.b16 %v64
    %v1467 = vunpack.c.h.b16 %v64
    %v1468 = vunpack.c.l.b16 %v65
    %v1469 = vunpack.c.h.b16 %v65
    %v1470 = vunpack.c.l.b16 %v66
    %v1471 = vunpack.c.h.b16 %v66
    %v1472 = vunpack.c.l.b16 %v67
    %v1473 = vunpack.c.h.b16 %v67
    %v1474 = vunpack.c.l.b16 %v68
    %v1475 = vunpack.c.h.b16 %v68
    %v1476 = vunpack.c.l.b16 %v69
    %v1477 = vunpack.c.h.b16 %v69
    %v1478 = vunpack.c.l.b16 %v70
    %v1479 = vunpack.c.h.b16 %v70
    %v1480 = vunpack.c.l.b16 %v71
    %v1481 = vunpack.c.h.b16 %v71
    %v1482 = vunpack.c.l.b16 %v72
    %v1483 = vunpack.c.h.b16 %v72
    %v1484 = vunpack.c.l.b16 %v73
    %v1485 = vunpack.c.h.b16 %v73
    %v1486 = vunpack.c.l.b16 %v74
    %v1487 = vunpack.c.h.b16 %v74
    %v1488 = vunpack.c.l.b16 %v75
    %v1489 = vunpack.c.h.b16 %v75
    %v1490 = vunpack.c.l.b16 %v76
    %v1491 = vunpack.c.h.b16 %v76
    %v1492 = vunpack.c.l.b16 %v77
    %v1493 = vunpack.c.h.b16 %v77
    %v1494 = vunpack.c.l.b16 %v78
    %v1495 = vunpack.c.h.b16 %v78
    %v1496 = vunpack.c.l.b16 %v79
    %v1497 = vunpack.c.h.b16 %v79
    %v1498 = vunpack.c.l.b16 %v80
    %v1499 = vunpack.c.h.b16 %v80
    %v1500 = vunpack.c.l.b16 %v81
    %v1501 = vunpack.c.h.b16 %v81
    %v1502 = vunpack.c.l.b16 %v82
    %v1503 = vunpack.c.h.b16 %v82
    %v1504 = vunpack.c.l.b16 %v83
    %v1505 = vunpack.c.h.b16 %v83
    %v1506 = vunpack.c.l.b16 %v84
    %v1507 = vunpack.c.h.b16 %v84
    %v1508 = vunpack.c.l.b16 %v85
    %v1509 = vunpack.c.h.b16 %v85
    %v1510 = vunpack.c.l.b16 %v86
    %v1511 = vunpack.c.h.b16 %v86
    %v1512 = vunpack.c.l.b16 %v87
    %v1513 = vunpack.c.h.b16 %v87
    %v1514 = vunpack.c.l.b16 %v88
    %v1515 = vunpack.c.h.b16 %v88
    %v1516 = vunpack.c.l.b16 %v89
    %v1517 = vunpack.c.h.b16 %v89
    %v1518 = vunpack.c.l.b16 %v90
    %v1519 = vunpack.c.h.b16 %v90
    %v1520 = vunpack.c.l.b16 %v91
    %v1521 = vunpack.c.h.b16 %v91
    %v1522 = vunpack.c.l.b16 %v92
    %v1523 = vunpack.c.h.b16 %v92
    %v1524 = vunpack.c.l.b16 %v93
    %v1525 = vunpack.c.h.b16 %v93
    %v1526 = vunpack.c.l.b16 %v94
    %v1527 = vunpack.c.h.b16 %v94
    %v1528 = vunpack.c.l.b16 %v95
    %v1529 = vunpack.c.l.b16 %v96
    %v1530 = vunpack.c.h.b16 %v96
    %v1531 = vunpack.c.l.b16 %v97
    %v1532 = vunpack.c.h.b16 %v97
    %v1533 = vunpack.c.l.b16 %v98
    %v1534 = vunpack.c.h.b16 %v98
    %v1535 = vunpack.c.l.b16 %v99
    %v1536 = vunpack.c.h.b16 %v99
    %v1537 = vunpack.c.l.b16 %v100
    %v1538 = vunpack.c.h.b16 %v100
    %v1539 = vunpack.c.l.b16 %v101
    %v1540 = vunpack.c.h.b16 %v101
    %v1541 = vunpack.c.l.b16 %v102
    %v1542 = vunpack.c.h.b16 %v102
    %v1543 = vunpack.c.l.b16 %v103
    %v1544 = vunpack.c.h.b16 %v103
    %v1545 = vunpack.c.l.b16 %v104
    %v1546 = vunpack.c.h.b16 %v104
    %v1547 = vunpack.c.l.b16 %v105
    %v1548 = vunpack.c.h.b16 %v105
    %v1549 = vunpack.c.l.b16 %v106
    %v1550 = vunpack.c.h.b16 %v106
    %v1551 = vunpack.c.l.b16 %v107
    %v1552 = vunpack.c.h.b16 %v107
    %v1553 = vunpack.c.l.b16 %v108
    %v1554 = vunpack.c.h.b16 %v108
    %v1555 = vunpack.c.l.b16 %v109
    %v1556 = vunpack.c.h.b16 %v109
    %v1557 = vunpack.c.l.b16 %v110
    %v1558 = vunpack.c.h.b16 %v110
    %v1559 = vunpack.c.l.b16 %v111
    %v1560 = vunpack.c.h.b16 %v111
    %v1561 = vunpack.c.l.b16 %v112
    %v1562 = vunpack.c.h.b16 %v112
    %v1563 = vunpack.c.l.b16 %v113
    %v1564 = vunpack.c.h.b16 %v113
    %v1565 = vunpack.c.l.b16 %v114
    %v1566 = vunpack.c.h.b16 %v114
    %v1567 = vunpack.c.l.b16 %v115
    %v1568 = vunpack.c.h.b16 %v115
    %v1569 = vunpack.c.l.b16 %v116
    %v1570 = vunpack.c.h.b16 %v116
    %v1571 = vunpack.c.l.b16 %v117
    %v1572 = vunpack.c.h.b16 %v117
    %v1573 = vunpack.c.l.b16 %v118
    %v1574 = vunpack.c.h.b16 %v118
    %v1575 = vunpack.c.l.b16 %v119
    %v1576 = vunpack.c.h.b16 %v119
    %v1577 = vunpack.c.l.b16 %v120
    %v1578 = vunpack.c.h.b16 %v120
    %v1579 = vunpack.c.l.b16 %v121
    %v1580 = vunpack.c.h.b16 %v121
    %v1581 = vunpack.c.l.b16 %v122
    %v1582 = vunpack.c.h.b16 %v122
    %v1583 = vunpack.c.l.b16 %v123
    %v1584 = vunpack.c.h.b16 %v123
    %v1585 = vunpack.c.l.b16 %v124
    %v1586 = vunpack.c.h.b16 %v124
    %v1587 = vunpack.c.l.b16 %v125
    %v1588 = vunpack.c.h.b16 %v125
    %v1589 = vunpack.c.l.b16 %v126
    %v1590 = vunpack.c.h.b16 %v126
    %v1591 = vunpack.c.l.b16 %v127
    %v1592 = vunpack.c.h.b16 %v127
    %v1593 = vunpack.c.l.b16 %v128
    %v1594 = vunpack.c.h.b16 %v128
    %v1595 = vunpack.c.l.b16 %v129
    %v1596 = vunpack.c.h.b16 %v129
    %v1597 = vunpack.c.l.b16 %v130
    %v1598 = vunpack.c.h.b16 %v130
    %v1599 = vunpack.c.l.b16 %v131
    %v1600 = vunpack.c.h.b16 %v131
    %v1601 = vunpack.c.l.b16 %v132
    %v1602 = vunpack.c.h.b16 %v132
    %v1603 = vunpack.c.l.b16 %v133
    %v1604 = vunpack.c.h.b16 %v133
    %v1605 = vunpack.c.l.b16 %v134
    %v1606 = vpack.c.b16 %v1529, %v1452
    %v1607 = vpack.c.b16 %v1530, %v1453
    %v1608 = vpack.c.b16 %v1531, %v1454
    %v1609 = vpack.c.b16 %v1532, %v1455
    %v1610 = vpack.c.b16 %v1533, %v1456
    %v1611 = vpack.c.b16 %v1534, %v1457
    %v1612 = vpack.c.b16 %v1535, %v1458
    %v1613 = vpack.c.b16 %v1536, %v1459
    %v1614 = vpack.c.b16 %v1537, %v1460
    %v1615 = vpack.c.b16 %v1538, %v1461
    %v1616 = vpack.c.b16 %v1539, %v1462
    %v1617 = vpack.c.b16 %v1540, %v1463
    %v1618 = vpack.c.b16 %v1541, %v1464
    %v1619 = vpack.c.b16 %v1542, %v1465
    %v1620 = vpack.c.b16 %v1543, %v1466
    %v1621 = vpack.c.b16 %v1544, %v1467
    %v1622 = vpack.c.b16 %v1545, %v1468
    %v1623 = vpack.c.b16 %v1546, %v1469
    %v1624 = vpack.c.b16 %v1547, %v1470
    %v1625 = vpack.c.b16 %v1548, %v1471
    %v1626 = vpack.c.b16 %v1549, %v1472
    %v1627 = vpack.c.b16 %v1550, %v1473
    %v1628 = vpack.c.b16 %v1551, %v1474
    %v1629 = vpack.c.b16 %v1552, %v1475
    %v1630 = vpack.c.b16 %v1553, %v1476
    %v1631 = vpack.c.b16 %v1554, %v1477
    %v1632 = vpack.c.b16 %v1555, %v1478
    %v1633 = vpack.c.b16 %v1556, %v1479
    %v1634 = vpack.c.b16 %v1557, %v1480
    %v1635 = vpack.c.b16 %v1558, %v1481
    %v1636 = vpack.c.b16 %v1559, %v1482
    %v1637 = vpack.c.b16 %v1560, %v1483
    %v1638 = vpack.c.b16 %v1561, %v1484
    %v1639 = vpack.c.b16 %v1562, %v1485
    %v1640 = vpack.c.b16 %v1563, %v1486
    %v1641 = vpack.c.b16 %v1564, %v1487
    %v1642 = vpack.c.b16 %v1565, %v1488
    %v1643 = vpack.c.b16 %v1566, %v1489
    %v1644 = vpack.c.b16 %v1567, %v1490
    %v1645 = vpack.c.b16 %v1568, %v1491
    %v1646 = vpack.c.b16 %v1569, %v1492
    %v1647 = vpack.c.b16 %v1570, %v1493
    %v1648 = vpack.c.b16 %v1571, %v1494
    %v1649 = vpack.c.b16 %v1572, %v1495
    %v1650 = vpack.c.b16 %v1573, %v1496
    %v1651 = vpack.c.b16 %v1574, %v1497
    %v1652 = vpack.c.b16 %v1575, %v1498
    %v1653 = vpack.c.b16 %v1576, %v1499
    %v1654 = vpack.c.b16 %v1577, %v1500
    %v1655 = vpack.c.b16 %v1578, %v1501
    %v1656 = vpack.c.b16 %v1579, %v1502
    %v1657 = vpack.c.b16 %v1580, %v1503
    %v1658 = vpack.c.b16 %v1581, %v1504
    %v1659 = vpack.c.b16 %v1582, %v1505
    %v1660 = vpack.c.b16 %v1583, %v1506
    %v1661 = vpack.c.b16 %v1584, %v1507
    %v1662 = vpack.c.b16 %v1585, %v1508
    %v1663 = vpack.c.b16 %v1586, %v1509
    %v1664 = vpack.c.b16 %v1587, %v1510
    %v1665 = vpack.c.b16 %v1588, %v1511
    %v1666 = vpack.c.b16 %v1589, %v1512
    %v1667 = vpack.c.b16 %v1590, %v1513
    %v1668 = vpack.c.b16 %v1591, %v1514
    %v1669 = vpack.c.b16 %v1592, %v1515
    %v1670 = vpack.c.b16 %v1593, %v1516
    %v1671 = vpack.c.b16 %v1594, %v1517
    %v1672 = vpack.c.b16 %v1595, %v1518
    %v1673 = vpack.c.b16 %v1596, %v1519
    %v1674 = vpack.c.b16 %v1597, %v1520
    %v1675 = vpack.c.b16 %v1598, %v1521
    %v1676 = vpack.c.b16 %v1599, %v1522
    %v1677 = vpack.c.b16 %v1600, %v1523
    %v1678 = vpack.c.b16 %v1601, %v1524
    %v1679 = vpack.c.b16 %v1602, %v1525
    %v1680 = vpack.c.b16 %v1603, %v1526
    %v1681 = vpack.c.b16 %v1604, %v1527
    %v1682 = vpack.c.b16 %v1605, %v1528
    %v2992 = vunpack.c.l.b16 %v135
    %v2993 = vunpack.c.l.b16 %v136
    %v2994 = vunpack.c.l.b16 %v137
    %v2995 = vunpack.c.l.b16 %v138
    %v2996 = vunpack.c.l.b16 %v139
    %v2997 = vunpack.c.l.b16 %v140
    %v2998 = vunpack.c.l.b16 %v141
    %v2999 = vunpack.c.l.b16 %v142
    %v3000 = vunpack.c.l.b16 %v143
    %v3001 = vunpack.c.l.b16 %v144
    %v3002 = vunpack.c.l.b16 %v145
    %v3003 = vunpack.c.l.b16 %v146
    %v3004 = vunpack.c.l.b16 %v147
    %v3005 = vunpack.c.l.b16 %v148
    %v3006 = vunpack.c.l.b16 %v149
    %v3007 = vunpack.c.l.b16 %v150
    %v3008 = vunpack.c.l.b16 %v151
    %v3009 = vunpack.c.l.b16 %v152
    %v3010 = vunpack.c.l.b16 %v153
    %v3011 = vunpack.c.l.b16 %v154
    %v3012 = vunpack.c.l.b16 %v155
    %v3013 = vunpack.c.l.b16 %v156
    %v3014 = vunpack.c.l.b16 %v157
    %v3015 = vunpack.c.l.b16 %v158
    %v3016 = vunpack.c.l.b16 %v159
    %v3017 = vunpack.c.l.b16 %v160
    %v3018 = vunpack.c.l.b16 %v161
    %v3019 = vunpack.c.l.b16 %v162
    %v3020 = vunpack.c.l.b16 %v163
    %v3021 = vunpack.c.l.b16 %v164
    %v3022 = vunpack.c.l.b16 %v165
    %v3023 = vunpack.c.l.b16 %v166
    %v3024 = vunpack.c.l.b16 %v167
    %v3025 = vunpack.c.l.b16 %v168
    %v3026 = vunpack.c.l.b16 %v169
    %v3027 = vunpack.c.l.b16 %v170
    %v3028 = vunpack.c.l.b16 %v171
    %v3029 = vunpack.c.l.b16 %v172
    %v3030 = vunpack.c.l.b16 %v173
    %v3031 = vunpack.c.l.b16 %v174
    %v3032 = vunpack.c.l.b16 %v175
    %v3033 = vunpack.c.l.b16 %v176
    %v3034 = vunpack.c.l.b16 %v177
    %v3035 = vunpack.c.l.b16 %v178
    %v3036 = vunpack.c.l.b16 %v179
    %v3037 = vunpack.c.l.b16 %v180
    %v3038 = vunpack.c.l.b16 %v181
    %v3039 = vunpack.c.l.b16 %v182
    %v3040 = vunpack.c.l.b16 %v183
    %v3041 = vunpack.c.l.b16 %v184
    %v3042 = vunpack.c.l.b16 %v185
    %v3043 = vunpack.c.l.b16 %v186
    %v3044 = vunpack.c.l.b16 %v187
    %v3045 = vunpack.c.l.b16 %v188
    %v3046 = vunpack.c.l.b16 %v189
    %v3047 = vunpack.c.l.b16 %v190
    %v3048 = vunpack.c.l.b16 %v191
    %v3049 = vunpack.c.l.b16 %v192
    %v3050 = vunpack.c.l.b16 %v193
    %v3051 = vunpack.c.l.b16 %v194
    %v3052 = vunpack.c.l.b16 %v195
    %v3053 = vunpack.c.l.b16 %v196
    %v3054 = vunpack.c.l.b16 %v197
    %v3055 = vunpack.c.l.b16 %v198
    %v3056 = vunpack.c.l.b16 %v199
    %v3057 = vunpack.c.l.b16 %v200
    %v3058 = vunpack.c.l.b16 %v201
    %v3059 = vunpack.c.l.b16 %v202
    %v3060 = vunpack.c.l.b16 %v203
    %v3061 = vunpack.c.l.b16 %v204
    %v3062 = vunpack.c.l.b16 %v205
    %v3063 = vunpack.c.l.b16 %v206
    %v3064 = vunpack.c.l.b16 %v207
    %v3065 = vunpack.c.l.b16 %v208
    %v3066 = vunpack.c.l.b16 %v209
    %v3067 = vunpack.c.l.b16 %v210
    %v3068 = vunpack.c.l.b16 %v211
    %v3069 = vunpack.c.l.b16 %v212
    %v3070 = vunpack.c.l.b16 %v213
    %v3071 = vunpack.c.l.b16 %v214
    %v3072 = vunpack.c.l.b16 %v215
    %v3073 = vunpack.c.l.b16 %v216
    %v3074 = vunpack.c.l.b16 %v217
    %v3075 = vunpack.c.l.b16 %v218
    %v3076 = vunpack.c.l.b16 %v219
    %v3077 = vunpack.c.l.b16 %v220
    %v3078 = vunpack.c.l.b16 %v221
    %v3079 = vunpack.c.l.b16 %v222
    %v3080 = vunpack.c.l.b16 %v223
    %v3081 = vunpack.c.l.b16 %v224
    %v3082 = vunpack.c.l.b16 %v225
    %v3083 = vunpack.c.l.b16 %v226
    %v3084 = vunpack.c.l.b16 %v227
    %v3085 = vunpack.c.l.b16 %v228
    %v3086 = vunpack.c.l.b16 %v229
    %v3087 = vunpack.c.l.b16 %v230
    %v3088 = vunpack.c.l.b16 %v231
    %v3089 = vunpack.c.l.b16 %v232
    %v3090 = vunpack.c.l.b16 %v233
    %v3091 = vunpack.c.l.b16 %v234
    %v3092 = vunpack.c.l.b16 %v235
    %v3093 = vunpack.c.l.b16 %v236
    %v3094 = vunpack.c.l.b16 %v237
    %v3095 = vunpack.c.l.b16 %v238
    %v3096 = vunpack.c.l.b16 %v239
    %v3097 = vunpack.c.l.b16 %v240
    %v3098 = vunpack.c.l.b16 %v241
    %v3099 = vunpack.c.l.b16 %v242
    %v3100 = vunpack.c.l.b16 %v243
    %v3101 = vunpack.c.l.b16 %v244
    %v3102 = vunpack.c.l.b16 %v245
    %v3103 = vunpack.c.l.b16 %v246
    %v3104 = vunpack.c.l.b16 %v247
    %v3105 = vunpack.c.l.b16 %v248
    %v3106 = vunpack.c.l.b16 %v249
    %v3107 = vunpack.c.l.b16 %v250
    %v3108 = vunpack.c.l.b16 %v251
    %v3109 = vunpack.c.l.b16 %v252
    %v3110 = vunpack.c.l.b16 %v253
    %v3111 = vunpack.c.l.b16 %v254
    %v3112 = vunpack.c.l.b16 %v255
    %v3113 = vunpack.c.l.b16 %v256
    %v3114 = vunpack.c.l.b16 %v257
    %v3115 = vunpack.c.l.b16 %v258
    %v3116 = vunpack.c.l.b16 %v259
    %v3117 = vunpack.c.l.b16 %v260
    %v3118 = vunpack.c.l.b16 %v261
    %v3119 = vunpack.c.l.b16 %v262
    %v3120 = vunpack.c.l.b16 %v263
    %v3121 = vunpack.c.l.b16 %v264
    %v3122 = vunpack.c.l.b16 %v265
    %v3123 = vunpack.c.l.b16 %v266
    %v3124 = vunpack.c.l.b16 %v267
    %v3125 = vunpack.c.l.b16 %v268
    %v3126 = vunpack.c.l.b16 %v269
    %v3127 = vunpack.c.l.b16 %v270
    %v3128 = vunpack.c.l.b16 %v271
    %v3129 = vunpack.c.l.b16 %v272
    %v3130 = vunpack.c.l.b16 %v273
    %v3131 = vunpack.c.l.b16 %v274
    %v3132 = vunpack.c.l.b16 %v275
    %v3133 = vunpack.c.l.b16 %v276
    %v3134 = vunpack.c.l.b16 %v277
    %v3135 = vunpack.c.l.b16 %v278
    %v3136 = vunpack.c.l.b16 %v279
    %v3137 = vunpack.c.l.b16 %v280
    %v3138 = vunpack.c.l.b16 %v281
    %v3139 = vunpack.c.l.b16 %v282
    %v3140 = vunpack.c.l.b16 %v283
    %v3141 = vunpack.c.l.b16 %v284
    %v3142 = vunpack.c.l.b16 %v285
    %v3143 = vunpack.c.l.b16 %v286
    %v3144 = vunpack.c.l.b16 %v287
    %v3145 = vunpack.c.l.b16 %v288
    %v3146 = vunpack.c.l.b16 %v289
    %v3147 = vunpack.c.l.b16 %v290
    %v3148 = vunpack.c.l.b16 %v291
    %v3149 = vunpack.c.l.b16 %v292
    %v3150 = vunpack.c.l.b16 %v293
    %v3151 = vunpack.c.l.b16 %v294
    %v3152 = vunpack.c.l.b16 %v295
    %v3153 = vunpack.c.l.b16 %v296
    %v3154 = vunpack.c.l.b16 %v297
    %v3155 = vunpack.c.l.b16 %v298
    %v3156 = vunpack.c.l.b16 %v299
    %v3157 = vunpack.c.l.b16 %v300
    %v3158 = vunpack.c.l.b16 %v301
    %v3159 = vunpack.c.l.b16 %v302
    %v3160 = vunpack.c.l.b16 %v303
    %v3161 = vunpack.c.l.b16 %v304
    %v3162 = vunpack.c.l.b16 %v305
    %v3163 = vunpack.c.l.b16 %v306
    %v3164 = vunpack.c.l.b16 %v307
    %v3165 = vunpack.c.l.b16 %v308
    %v3166 = vunpack.c.l.b16 %v309
    %v3167 = vunpack.c.l.b16 %v310
    %v3168 = vunpack.c.l.b16 %v311
    %v3169 = vunpack.c.l.b16 %v312
    %v3170 = vunpack.c.l.b16 %v313
    %v3171 = vunpack.c.l.b16 %v314
    %v3172 = vunpack.c.l.b16 %v315
    %v3173 = vunpack.c.l.b16 %v316
    %v3174 = vunpack.c.l.b16 %v317
    %v3175 = vunpack.c.l.b16 %v318
    %v3176 = vunpack.c.l.b16 %v319
    %v3177 = vunpack.c.l.b16 %v320
    %v3178 = vunpack.c.l.b16 %v321
    %v3179 = vunpack.c.l.b16 %v322
    %v3180 = vunpack.c.l.b16 %v323
    %v3181 = vunpack.c.l.b16 %v324
    %v3182 = vunpack.c.l.b16 %v325
    %v3183 = vunpack.c.l.b16 %v326
    %v3184 = vunpack.c.l.b16 %v327
    %v3185 = vunpack.c.l.b16 %v328
    %v3186 = vunpack.c.l.b16 %v329
    %v3187 = vunpack.c.l.b16 %v330
    %v3188 = vunpack.c.l.b16 %v331
    %v3189 = vunpack.c.l.b16 %v332
    %v3190 = vunpack.c.l.b16 %v333
    %v3191 = vunpack.c.l.b16 %v334
    %v3192 = vunpack.c.l.b16 %v335
    %v3193 = vunpack.c.l.b16 %v336
    %v3194 = vunpack.c.l.b16 %v337
    %v3195 = vunpack.c.l.b16 %v338
    %v3196 = vunpack.c.l.b16 %v339
    %v3197 = vunpack.c.l.b16 %v340
    %v3198 = vunpack.c.l.b16 %v341
    %v3199 = vunpack.c.l.b16 %v342
    %v3200 = vunpack.c.l.b16 %v343
    %v3201 = vunpack.c.l.b16 %v344
    %v3202 = vunpack.c.l.b16 %v345
    %v3203 = vunpack.c.l.b16 %v346
    %v3204 = vunpack.c.l.b16 %v347
    %v3205 = vunpack.c.l.b16 %v348
    %v3206 = vunpack.c.l.b16 %v349
    %v3207 = vunpack.c.l.b16 %v350
    %v3208 = vunpack.c.l.b16 %v351
    %v3209 = vunpack.c.l.b16 %v352
    %v3210 = vunpack.c.l.b16 %v353
    %v3211 = vunpack.c.l.b16 %v354
    %v3212 = vunpack.c.l.b16 %v355
    %v3213 = vunpack.c.l.b16 %v356
    %v3214 = vunpack.c.l.b16 %v357
    %v3215 = vunpack.c.l.b16 %v358
    %v3216 = vunpack.c.l.b16 %v359
    %v3217 = vunpack.c.l.b16 %v360
    %v3218 = vunpack.c.l.b16 %v361
    %v3219 = vunpack.c.l.b16 %v362
    %v3220 = vunpack.c.l.b16 %v363
    %v3221 = vunpack.c.l.b16 %v364
    %v3222 = vunpack.c.l.b16 %v365
    %v3223 = vunpack.c.l.b16 %v366
    %v3224 = vunpack.c.l.b16 %v367
    %v3225 = vunpack.c.l.b16 %v368
    %v3226 = vunpack.c.l.b16 %v369
    %v3227 = vunpack.c.l.b16 %v370
    %v3228 = vunpack.c.l.b16 %v371
    %v3229 = vunpack.c.l.b16 %v372
    %v3230 = vunpack.c.l.b16 %v373
    %v3231 = vunpack.c.l.b16 %v374
    %v3232 = vunpack.c.l.b16 %v375
    %v3233 = vunpack.c.l.b16 %v376
    %v3234 = vunpack.c.l.b16 %v377
    %v3235 = vunpack.c.l.b16 %v378
    %v3236 = vunpack.c.l.b16 %v379
    %v3237 = vunpack.c.l.b16 %v380
    %v3238 = vunpack.c.l.b16 %v381
    %v3239 = vunpack.c.l.b16 %v382
    %v3240 = vunpack.c.l.b16 %v383
    %v3241 = vunpack.c.l.b16 %v384
    %v3242 = vunpack.c.l.b16 %v385
    %v3243 = vunpack.c.l.b16 %v386
    %v3244 = vunpack.c.l.b16 %v387
    %v3245 = vunpack.c.l.b16 %v388
    %v3246 = vunpack.c.l.b16 %v389
    %v3247 = vunpack.c.l.b16 %v390
    %v3248 = vunpack.c.l.b16 %v391
    %v3249 = vunpack.c.l.b16 %v392
    %v3250 = vunpack.c.l.b16 %v393
    %v3251 = vunpack.c.l.b16 %v394
    %v3252 = vunpack.c.l.b16 %v395
    %v3253 = vunpack.c.l.b16 %v396
    %v3254 = vunpack.c.l.b16 %v397
    %v3255 = vunpack.c.l.b16 %v398
    %v3256 = vunpack.c.l.b16 %v399
    %v3257 = vunpack.c.l.b16 %v400
    %v3258 = vunpack.c.l.b16 %v401
    %v3259 = vunpack.c.l.b16 %v402
    %v3260 = vunpack.c.l.b16 %v403
    %v3261 = vunpack.c.l.b16 %v404
    %v3262 = vunpack.c.l.b16 %v405
    %v3263 = vunpack.c.l.b16 %v406
    %v3264 = vunpack.c.l.b16 %v407
    %v3265 = vunpack.c.l.b16 %v408
    %v3266 = vunpack.c.l.b16 %v409
    %v3267 = vunpack.c.l.b16 %v410
    %v3268 = vunpack.c.l.b16 %v411
    %v3269 = vunpack.c.l.b16 %v412
    %v3270 = vunpack.c.l.b16 %v413
    %v3271 = vunpack.c.l.b16 %v414
    %v3272 = vunpack.c.l.b16 %v415
    %v3273 = vunpack.c.l.b16 %v416
    %v3274 = vunpack.c.l.b16 %v417
    %v3275 = vunpack.c.l.b16 %v418
    %v3276 = vunpack.c.l.b16 %v419
    %v3277 = vunpack.c.l.b16 %v420
    %v3278 = vunpack.c.l.b16 %v421
    %v3279 = vunpack.c.l.b16 %v422
    %v3280 = vunpack.c.l.b16 %v423
    %v3281 = vunpack.c.l.b16 %v424
    %v3282 = vunpack.c.l.b16 %v425
    %v3283 = vunpack.c.l.b16 %v426
    %v3284 = vunpack.c.l.b16 %v427
    %v3285 = vunpack.c.l.b16 %v428
    %v3286 = vunpack.c.l.b16 %v429
    %v3287 = vunpack.c.l.b16 %v430
    %v3288 = vunpack.c.l.b16 %v431
    %v3289 = vunpack.c.l.b16 %v432
    %v3290 = vunpack.c.l.b16 %v433
    %v3291 = vunpack.c.l.b16 %v434
    %v3292 = vunpack.c.l.b16 %v435
    %v3293 = vunpack.c.l.b16 %v436
    %v3294 = vunpack.c.l.b16 %v437
    %v3295 = vunpack.c.l.b16 %v438
    %v3296 = vunpack.c.l.b16 %v439
    %v3297 = vunpack.c.l.b16 %v440
    %v3298 = vunpack.c.l.b16 %v441
    %v3299 = vunpack.c.l.b16 %v442
    %v3300 = vunpack.c.l.b16 %v443
    %v3301 = vunpack.c.l.b16 %v444
    %v3302 = vunpack.c.l.b16 %v445
    %v3303 = vunpack.c.l.b16 %v446
    %v3304 = vunpack.c.l.b16 %v447
    %v3305 = vunpack.c.l.b16 %v448
    %v3306 = vunpack.c.l.b16 %v449
    %v3307 = vunpack.c.l.b16 %v450
    %v3308 = vunpack.c.l.b16 %v451
    %v3309 = vunpack.c.l.b16 %v452
    %v3310 = vunpack.c.l.b16 %v453
    %v3311 = vunpack.c.l.b16 %v454
    %v3312 = vunpack.c.l.b16 %v455
    %v3313 = vunpack.c.l.b16 %v456
    %v3314 = vunpack.c.l.b16 %v457
    %v3315 = vunpack.c.l.b16 %v458
    %v3316 = vunpack.c.l.b16 %v459
    %v3317 = vunpack.c.l.b16 %v460
    %v3318 = vunpack.c.l.b16 %v461
    %v3319 = vunpack.c.l.b16 %v462
    %v3320 = vunpack.c.l.b16 %v463
    %v3321 = vunpack.c.l.b16 %v464
    %v3322 = vunpack.c.l.b16 %v465
    %v3323 = vunpack.c.l.b16 %v466
    %v3324 = vunpack.c.l.b16 %v467
    %v3325 = vunpack.c.l.b16 %v468
    %v3326 = vunpack.c.l.b16 %v469
    %v3327 = vunpack.c.l.b16 %v470
    %v3328 = vunpack.c.l.b16 %v471
    %v3329 = vunpack.c.l.b16 %v472
    %v3330 = vunpack.c.l.b16 %v473
    %v3331 = vunpack.c.l.b16 %v474
    %v3332 = vunpack.c.l.b16 %v475
    %v3333 = vunpack.c.l.b16 %v476
    %v3334 = vunpack.c.l.b16 %v477
    %v3335 = vunpack.c.l.b16 %v478
    %v3336 = vunpack.c.l.b16 %v479
    %v3337 = vunpack.c.l.b16 %v480
    %v3338 = vunpack.c.l.b16 %v481
    %v3339 = vunpack.c.l.b16 %v482
    %v3340 = vunpack.c.l.b16 %v483
    %v3341 = vunpack.c.l.b16 %v484
    %v3342 = vunpack.c.l.b16 %v485
    %v3343 = vunpack.c.l.b16 %v486
    %v3344 = vunpack.c.l.b16 %v487
    %v3345 = vunpack.c.l.b16 %v488
    %v3346 = vunpack.c.l.b16 %v489
    %v3347 = vunpack.c.l.b16 %v490
    %v3348 = vunpack.c.l.b16 %v491
    %v3349 = vunpack.c.l.b16 %v492
    %v3350 = vunpack.c.l.b16 %v493
    %v3351 = vunpack.c.l.b16 %v494
    %v3352 = vunpack.c.l.b16 %v495
    %v3353 = vunpack.c.l.b16 %v496
    %v3354 = vunpack.c.l.b16 %v497
    %v3355 = vunpack.c.l.b16 %v498
    %v3356 = vunpack.c.l.b16 %v499
    %v3357 = vunpack.c.l.b16 %v500
    %v3358 = vunpack.c.l.b16 %v501
    %v3359 = vunpack.c.l.b16 %v502
    %v3360 = vunpack.c.l.b16 %v503
    %v3361 = vunpack.c.l.b16 %v504
    %v3362 = vunpack.c.l.b16 %v505
    %v3363 = vunpack.c.l.b16 %v506
    %v3364 = vunpack.c.l.b16 %v507
    %v3365 = vunpack.c.l.b16 %v508
    %v3366 = vunpack.c.l.b16 %v509
    %v3367 = vunpack.c.l.b16 %v510
    %v3368 = vunpack.c.l.b16 %v511
    %v3369 = vunpack.c.l.b16 %v512
    %v3370 = vunpack.c.l.b16 %v513
    %v3371 = vunpack.c.l.b16 %v514
    %v3372 = vunpack.c.l.b16 %v515
    %v3373 = vunpack.c.l.b16 %v516
    %v3374 = vunpack.c.l.b16 %v517
    %v3375 = vunpack.c.l.b16 %v518
    %v3376 = vunpack.c.l.b16 %v519
    %v3377 = vunpack.c.l.b16 %v520
    %v3378 = vunpack.c.l.b16 %v521
    %v3379 = vunpack.c.l.b16 %v522
    %v3380 = vunpack.c.l.b16 %v523
    %v3381 = vunpack.c.l.b16 %v524
    %v3382 = vunpack.c.l.b16 %v525
    %v3383 = vunpack.c.l.b16 %v526
    %v3384 = vunpack.c.l.b16 %v527
    %v3385 = vunpack.c.l.b16 %v528
    %v3386 = vunpack.c.l.b16 %v529
    %v3387 = vunpack.c.l.b16 %v530
    %v3388 = vunpack.c.l.b16 %v531
    %v3389 = vunpack.c.l.b16 %v532
    %v3390 = vunpack.c.l.b16 %v533
    %v3391 = vunpack.c.l.b16 %v534
    %v3392 = vunpack.c.l.b16 %v535
    %v3393 = vunpack.c.l.b16 %v536
    %v3394 = vunpack.c.l.b16 %v537
    %v3395 = vunpack.c.l.b16 %v538
    %v3396 = vunpack.c.l.b16 %v539
    %v3397 = vunpack.c.l.b16 %v540
    %v3398 = vunpack.c.l.b16 %v541
    %v3399 = vunpack.c.l.b16 %v542
    %v3400 = vunpack.c.l.b16 %v543
    %v3401 = vunpack.c.l.b16 %v544
    %v3402 = vunpack.c.l.b16 %v545
    %v3403 = vunpack.c.l.b16 %v546
    %v3404 = vunpack.c.l.b16 %v547
    %v3405 = vunpack.c.l.b16 %v548
    %v3406 = vunpack.c.l.b16 %v549
    %v3407 = vunpack.c.l.b16 %v550
    %v3408 = vunpack.c.l.b16 %v551
    %v3409 = vunpack.c.l.b16 %v552
    %v3410 = vunpack.c.l.b16 %v553
    %v3411 = vunpack.c.l.b16 %v554
    %v3412 = vunpack.c.l.b16 %v555
    %v3413 = vunpack.c.l.b16 %v556
    %v3414 = vunpack.c.l.b16 %v557
    %v3415 = vunpack.c.l.b16 %v558
    %v3416 = vunpack.c.l.b16 %v559
    %v3417 = vunpack.c.l.b16 %v560
    %v3418 = vunpack.c.l.b16 %v561
    %v3419 = vunpack.c.l.b16 %v562
    %v3420 = vunpack.c.l.b16 %v563
    %v3421 = vunpack.c.l.b16 %v564
    %v3422 = vunpack.c.l.b16 %v565
    %v3423 = vunpack.c.l.b16 %v566
    %v3424 = vunpack.c.l.b16 %v567
    %v3425 = vunpack.c.l.b16 %v568
    %v3426 = vunpack.c.l.b16 %v569
    %v3427 = vunpack.c.l.b16 %v570
    %v3428 = vunpack.c.l.b16 %v571
    %v3429 = vunpack.c.l.b16 %v572
    %v3430 = vunpack.c.l.b16 %v573
    %v3431 = vunpack.c.l.b16 %v574
    %v3432 = vunpack.c.l.b16 %v575
    %v3433 = vunpack.c.l.b16 %v576
    %v3434 = vunpack.c.l.b16 %v577
    %v3435 = vunpack.c.l.b16 %v578
    %v3436 = vunpack.c.l.b16 %v579
    %v3437 = vunpack.c.l.b16 %v580
    %v3438 = vunpack.c.l.b16 %v581
    %v3439 = vunpack.c.l.b16 %v582
    %v3440 = vunpack.c.l.b16 %v583
    %v3441 = vunpack.c.l.b16 %v584
    %v3442 = vunpack.c.l.b16 %v585
    %v3443 = vunpack.c.l.b16 %v586
    %v3444 = vunpack.c.l.b16 %v587
    %v3445 = vunpack.c.l.b16 %v588
    %v3446 = vunpack.c.l.b16 %v589
    %v3447 = vunpack.c.l.b16 %v590
    %v3448 = vunpack.c.l.b16 %v591
    %v3449 = vunpack.c.l.b16 %v592
    %v3450 = vunpack.c.l.b16 %v593
    %v3451 = vunpack.c.l.b16 %v594
    %v3452 = vunpack.c.l.b16 %v595
    %v3453 = vunpack.c.l.b16 %v596
    %v3454 = vunpack.c.l.b16 %v597
    %v3455 = vunpack.c.l.b16 %v598
    %v3456 = vunpack.c.l.b16 %v599
    %v3457 = vunpack.c.l.b16 %v600
    %v3458 = vunpack.c.l.b16 %v601
    %v3459 = vunpack.c.l.b16 %v602
    %v3460 = vunpack.c.l.b16 %v603
    %v3461 = vunpack.c.l.b16 %v604
    %v3462 = vunpack.c.l.b16 %v605
    %v3463 = vunpack.c.l.b16 %v606
    %v3464 = vunpack.c.l.b16 %v607
    %v3465 = vunpack.c.l.b16 %v608
    %v3466 = vunpack.c.l.b16 %v609
    %v3467 = vunpack.c.l.b16 %v610
    %v3468 = vunpack.c.l.b16 %v611
    %v3469 = vunpack.c.l.b16 %v612
    %v3470 = vunpack.c.l.b16 %v613
    %v3471 = vunpack.c.l.b16 %v614
    %v3472 = vunpack.c.l.b16 %v615
    %v3473 = vunpack.c.l.b16 %v616
    %v3474 = vunpack.c.l.b16 %v617
    %v3475 = vunpack.c.l.b16 %v618
    %v3476 = vunpack.c.l.b16 %v619
    %v3477 = vunpack.c.l.b16 %v620
    %v3478 = vunpack.c.l.b16 %v621
    %v3479 = vunpack.c.l.b16 %v622
    %v3480 = vunpack.c.l.b16 %v623
    %v3481 = vunpack.c.l.b16 %v624
    %v3482 = vunpack.c.l.b16 %v625
    %v3483 = vunpack.c.l.b16 %v626
    %v3484 = vunpack.c.l.b16 %v627
    %v3485 = vunpack.c.l.b16 %v628
    %v3486 = vunpack.c.l.b16 %v629
    %v3487 = vunpack.c.l.b16 %v630
    %v3488 = vunpack.c.l.b16 %v631
    %v3489 = vunpack.c.l.b16 %v632
    %v3490 = vunpack.c.l.b16 %v633
    %v3491 = vunpack.c.l.b16 %v634
    %v3492 = vunpack.c.l.b16 %v635
    %v3493 = vunpack.c.l.b16 %v636
    %v3494 = vunpack.c.l.b16 %v637
    %v3495 = vunpack.c.l.b16 %v638
    %v3496 = vunpack.c.l.b16 %v639
    %v3497 = vunpack.c.l.b16 %v640
    %v3498 = vunpack.c.l.b16 %v641
    %v3499 = vunpack.c.l.b16 %v642
    %v3500 = vunpack.c.l.b16 %v643
    %v3501 = vunpack.c.l.b16 %v644
    %v3502 = vunpack.c.l.b16 %v645
    %v3503 = vunpack.c.l.b16 %v646
    %v3504 = vunpack.c.l.b16 %v647
    %v3505 = vunpack.c.l.b16 %v648
    %v3506 = vunpack.c.l.b16 %v649
    %v3507 = vunpack.c.l.b16 %v650
    %v3508 = vunpack.c.l.b16 %v651
    %v3509 = vunpack.c.l.b16 %v652
    %v3510 = vunpack.c.l.b16 %v653
    %v3511 = vunpack.c.l.b16 %v654
    %v3512 = vunpack.c.l.b16 %v655
    %v3513 = vunpack.c.l.b16 %v656
    %v3514 = vunpack.c.l.b16 %v657
    %v3515 = vunpack.c.l.b16 %v658
    %v3516 = vunpack.c.l.b16 %v659
    %v3517 = vunpack.c.l.b16 %v660
    %v3518 = vunpack.c.l.b16 %v661
    %v3519 = vunpack.c.l.b16 %v662
    %v3520 = vunpack.c.l.b16 %v663
    %v3521 = vunpack.c.l.b16 %v664
    %v3522 = vunpack.c.l.b16 %v665
    %v3523 = vunpack.c.l.b16 %v666
    %v3524 = vunpack.c.l.b16 %v667
    %v3525 = vunpack.c.l.b16 %v668
    %v3526 = vunpack.c.l.b16 %v669
    %v3527 = vunpack.c.l.b16 %v670
    %v3528 = vunpack.c.l.b16 %v671
    %v3529 = vunpack.c.l.b16 %v672
    %v3530 = vunpack.c.l.b16 %v673
    %v3531 = vunpack.c.l.b16 %v674
    %v3532 = vunpack.c.l.b16 %v675
    %v3533 = vunpack.c.l.b16 %v676
    %v3534 = vunpack.c.l.b16 %v677
    %v3535 = vunpack.c.l.b16 %v678
    %v3536 = vunpack.c.l.b16 %v679
    %v3537 = vunpack.c.l.b16 %v680
    %v3538 = vunpack.c.l.b16 %v681
    %v3539 = vunpack.c.l.b16 %v682
    %v3540 = vunpack.c.l.b16 %v683
    %v3541 = vunpack.c.l.b16 %v684
    %v3542 = vunpack.c.l.b16 %v685
    %v3543 = vunpack.c.l.b16 %v686
    %v3544 = vunpack.c.l.b16 %v687
    %v3545 = vunpack.c.l.b16 %v688
    %v3546 = vunpack.c.l.b16 %v689
    %v3547 = vunpack.c.l.b16 %v690
    %v3548 = vunpack.c.l.b16 %v691
    %v3549 = vunpack.c.l.b16 %v692
    %v3550 = vunpack.c.l.b16 %v693
    %v3551 = vunpack.c.l.b16 %v694
    %v3552 = vunpack.c.l.b16 %v695
    %v3553 = vunpack.c.l.b16 %v696
    %v3554 = vunpack.c.l.b16 %v697
    %v3555 = vunpack.c.l.b16 %v698
    %v3556 = vunpack.c.l.b16 %v699
    %v3557 = vunpack.c.l.b16 %v700
    %v3558 = vunpack.c.l.b16 %v701
    %v3559 = vunpack.c.l.b16 %v702
    %v3560 = vunpack.c.l.b16 %v703
    %v3561 = vunpack.c.l.b16 %v704
    %v3562 = vunpack.c.l.b16 %v705
    %v3563 = vunpack.c.l.b16 %v706
    %v3564 = vunpack.c.l.b16 %v707
    %v3565 = vunpack.c.l.b16 %v708
    %v3566 = vunpack.c.l.b16 %v709
    %v3567 = vunpack.c.l.b16 %v710
    %v3568 = vunpack.c.l.b16 %v711
    %v3569 = vunpack.c.l.b16 %v712
    %v3570 = vunpack.c.l.b16 %v713
    %v3571 = vunpack.c.l.b16 %v714
    %v3572 = vunpack.c.l.b16 %v715
    %v3573 = vunpack.c.l.b16 %v716
    %v3574 = vunpack.c.l.b16 %v717
    %v3575 = vunpack.c.l.b16 %v718
    %v3576 = vunpack.c.l.b16 %v719
    %v3577 = vunpack.c.l.b16 %v720
    %v3578 = vunpack.c.l.b16 %v721
    %v3579 = vunpack.c.l.b16 %v722
    %v3580 = vunpack.c.l.b16 %v723
    %v3581 = vunpack.c.l.b16 %v724
    %v3582 = vunpack.c.l.b16 %v725
    %v3583 = vunpack.c.l.b16 %v726
    %v3584 = vunpack.c.l.b16 %v727
    %v3585 = vunpack.c.l.b16 %v728
    %v3586 = vunpack.c.l.b16 %v729
    %v3587 = vunpack.c.l.b16 %v730
    %v3588 = vunpack.c.l.b16 %v731
    %v3589 = vunpack.c.l.b16 %v732
    %v3590 = vunpack.c.l.b16 %v733
    %v3591 = vunpack.c.l.b16 %v734
    %v3592 = vunpack.c.l.b16 %v735
    %v3593 = vunpack.c.l.b16 %v736
    %v3594 = vunpack.c.l.b16 %v737
    %v3595 = vunpack.c.l.b16 %v738
    %v3596 = vunpack.c.l.b16 %v739
    %v3597 = vunpack.c.l.b16 %v740
    %v3598 = vunpack.c.l.b16 %v741
    %v3599 = vunpack.c.l.b16 %v742
    %v3600 = vunpack.c.l.b16 %v743
    %v3601 = vunpack.c.l.b16 %v744
    %v3602 = vunpack.c.l.b16 %v745
    %v3603 = vunpack.c.l.b16 %v746
    %v3604 = vunpack.c.l.b16 %v747
    %v3605 = vunpack.c.l.b16 %v748
    %v3606 = vunpack.c.l.b16 %v749
    %v3607 = vunpack.c.l.b16 %v750
    %v3608 = vunpack.c.l.b16 %v751
    %v3609 = vunpack.c.l.b16 %v752
    %v3610 = vunpack.c.l.b16 %v753
    %v3611 = vunpack.c.l.b16 %v754
    %v3612 = vunpack.c.l.b16 %v755
    %v3613 = vunpack.c.l.b16 %v756
    %v3614 = vunpack.c.l.b16 %v757
    %v3615 = vunpack.c.l.b16 %v758
    %v3616 = vunpack.c.l.b16 %v759
    %v3617 = vunpack.c.l.b16 %v760
    %v3618 = vunpack.c.l.b16 %v761
    %v3619 = vunpack.c.l.b16 %v762
    %v3620 = vunpack.c.l.b16 %v763
    %v3621 = vunpack.c.l.b16 %v764
    %v3622 = vunpack.c.l.b16 %v765
    %v3623 = vunpack.c.l.b16 %v766
    %v3624 = vunpack.c.l.b16 %v767
    %v3625 = vunpack.c.l.b16 %v768
    %v3626 = vunpack.c.l.b16 %v769
    %v3627 = vunpack.c.l.b16 %v770
    %v3628 = vunpack.c.l.b16 %v771
    %v3629 = vunpack.c.l.b16 %v772
    %v3630 = vunpack.c.l.b16 %v773
    %v3631 = vunpack.c.l.b16 %v774
    %v3632 = vunpack.c.l.b16 %v775
    %v3633 = vunpack.c.l.b16 %v776
    %v3634 = vunpack.c.l.b16 %v777
    %v3635 = vunpack.c.l.b16 %v778
    %v3636 = vunpack.c.l.b16 %v779
    %v3637 = vunpack.c.l.b16 %v780
    %v3638 = vunpack.c.l.b16 %v781
    %v3639 = vunpack.c.l.b16 %v782
    %v3640 = vunpack.c.l.b16 %v783
    %v3641 = vunpack.c.l.b16 %v784
    %v3642 = vunpack.c.l.b16 %v785
    %v3643 = vunpack.c.l.b16 %v786
    %v3644 = vunpack.c.l.b16 %v787
    %v3645 = vunpack.c.l.b16 %v788
    %v3646 = vunpack.c.l.b16 %v789
    %v3647 = vunpack.c.l.b16 %v790
    %v3648 = vunpack.c.l.b16 %v791
    %v3649 = vunpack.c.l.b16 %v792
    %v3650 = vunpack.c.l.b16 %v793
    %v3651 = vunpack.c.l.b16 %v794
    %v3652 = vunpack.c.l.b16 %v795
    %v3653 = vunpack.c.l.b16 %v796
    %v3654 = vunpack.c.l.b16 %v797
    %v3655 = vunpack.c.l.b16 %v798
    %v3656 = vunpack.c.l.b16 %v799
    %v3657 = vunpack.c.l.b16 %v800
    %v3658 = vunpack.c.l.b16 %v801
    %v3659 = vunpack.c.l.b16 %v802
    %v3660 = vunpack.c.l.b16 %v803
    %v3661 = vunpack.c.l.b16 %v804
    %v3662 = vunpack.c.l.b16 %v805
    %v3663 = vunpack.c.l.b16 %v806
    %v3664 = vunpack.c.l.b16 %v807
    %v3665 = vunpack.c.l.b16 %v808
    %v3666 = vunpack.c.l.b16 %v809
    %v3667 = vunpack.c.l.b16 %v810
    %v3668 = vunpack.c.l.b16 %v811
    %v3669 = vunpack.c.l.b16 %v812
    %v3670 = vunpack.c.l.b16 %v813
    %v3671 = vunpack.c.l.b16 %v814
    %v3672 = vunpack.c.l.b16 %v815
    %v3673 = vunpack.c.l.b16 %v816
    %v3674 = vunpack.c.l.b16 %v817
    %v3675 = vunpack.c.l.b16 %v818
    %v3676 = vunpack.c.l.b16 %v819
    %v3677 = vunpack.c.l.b16 %v820
    %v3678 = vunpack.c.l.b16 %v821
    %v3679 = vunpack.c.l.b16 %v822
    %v3680 = vunpack.c.l.b16 %v823
    %v3681 = vunpack.c.l.b16 %v824
    %v3682 = vunpack.c.l.b16 %v825
    %v3683 = vunpack.c.l.b16 %v826
    %v3684 = vunpack.c.l.b16 %v827
    %v3685 = vunpack.c.l.b16 %v828
    %v3686 = vunpack.c.l.b16 %v829
    %v3687 = vunpack.c.l.b16 %v830
    %v3688 = vunpack.c.l.b16 %v831
    %v3689 = vunpack.c.l.b16 %v832
    %v3690 = vunpack.c.l.b16 %v833
    %v3691 = vunpack.c.l.b16 %v834
    %v3692 = vunpack.c.l.b16 %v835
    %v3693 = vunpack.c.l.b16 %v836
    %v3694 = vunpack.c.l.b16 %v837
    %v3695 = vunpack.c.l.b16 %v838
    %v3696 = vunpack.c.l.b16 %v839
    %v3697 = vunpack.c.l.b16 %v840
    %v3698 = vunpack.c.l.b16 %v841
    %v3699 = vunpack.c.l.b16 %v842
    %v3700 = vunpack.c.l.b16 %v843
    %v3701 = vunpack.c.l.b16 %v844
    %v3702 = vunpack.c.l.b16 %v845
    %v3703 = vunpack.c.l.b16 %v846
    %v3704 = vunpack.c.l.b16 %v847
    %v3705 = vunpack.c.l.b16 %v848
    %v3706 = vunpack.c.l.b16 %v849
    %v3707 = vunpack.c.l.b16 %v850
    %v3708 = vunpack.c.l.b16 %v851
    %v3709 = vunpack.c.l.b16 %v852
    %v3710 = vunpack.c.l.b16 %v853
    %v3711 = vunpack.c.l.b16 %v854
    %v3712 = vunpack.c.l.b16 %v855
    %v3713 = vunpack.c.l.b16 %v856
    %v3714 = vunpack.c.l.b16 %v857
    %v3715 = vunpack.c.l.b16 %v858
    %v3716 = vunpack.c.l.b16 %v859
    %v3717 = vunpack.c.l.b16 %v860
    %v3718 = vunpack.c.l.b16 %v861
    %v3719 = vunpack.c.l.b16 %v862
    %v3720 = vunpack.c.l.b16 %v863
    %v3721 = vunpack.c.l.b16 %v864
    %v3722 = vunpack.c.l.b16 %v865
    %v3723 = vunpack.c.l.b16 %v866
    %v3724 = vunpack.c.l.b16 %v867
    %v3725 = vunpack.c.l.b16 %v868
    %v3726 = vunpack.c.l.b16 %v869
    %v3727 = vunpack.c.l.b16 %v870
    %v3728 = vunpack.c.l.b16 %v871
    %v3729 = vunpack.c.l.b16 %v872
    %v3730 = vunpack.c.l.b16 %v873
    %v3731 = vunpack.c.l.b16 %v874
    %v3732 = vunpack.c.l.b16 %v875
    %v3733 = vunpack.c.l.b16 %v876
    %v3734 = vunpack.c.l.b16 %v877
    %v3735 = vunpack.c.l.b16 %v878
    %v3736 = vunpack.c.l.b16 %v879
    %v3737 = vunpack.c.l.b16 %v880
    %v3738 = vunpack.c.l.b16 %v881
    %v3739 = vunpack.c.l.b16 %v882
    %v3740 = vunpack.c.l.b16 %v883
    %v3741 = vunpack.c.l.b16 %v884
    %v3742 = vunpack.c.l.b16 %v885
    %v3743 = vunpack.c.l.b16 %v886
    %v3744 = vunpack.c.l.b16 %v887
    %v3745 = vunpack.c.l.b16 %v888
    %v3746 = vunpack.c.l.b16 %v889
    %v3747 = vunpack.c.l.b16 %v890
    %v3748 = vunpack.c.l.b16 %v891
    %v3749 = vunpack.c.l.b16 %v892
    %v3750 = vunpack.c.l.b16 %v893
    %v3751 = vunpack.c.l.b16 %v894
    %v3752 = vunpack.c.l.b16 %v895
    %v3753 = vunpack.c.l.b16 %v896
    %v3754 = vunpack.c.l.b16 %v897
    %v3755 = vunpack.c.l.b16 %v898
    %v3756 = vunpack.c.l.b16 %v899
    %v3757 = vunpack.c.l.b16 %v900
    %v3758 = vunpack.c.l.b16 %v901
    %v3759 = vunpack.c.l.b16 %v902
    %v3760 = vunpack.c.l.b16 %v903
    %v3761 = vunpack.c.l.b16 %v904
    %v3762 = vunpack.c.l.b16 %v905
    %v3763 = vunpack.c.l.b16 %v906
    %v3764 = vunpack.c.l.b16 %v907
    %v3765 = vunpack.c.l.b16 %v908
    %v3766 = vunpack.c.l.b16 %v909
    %v3767 = vunpack.c.l.b16 %v910
    %v3768 = vunpack.c.l.b16 %v911
    %v3769 = vunpack.c.l.b16 %v912
    %v3770 = vunpack.c.l.b16 %v913
    %v3771 = vunpack.c.l.b16 %v914
    %v3772 = vunpack.c.l.b16 %v915
    %v3773 = vunpack.c.l.b16 %v916
    %v3774 = vunpack.c.l.b16 %v917
    %v3775 = vunpack.c.l.b16 %v918
    %v3776 = vunpack.c.l.b16 %v919
    %v3777 = vunpack.c.l.b16 %v920
    %v3778 = vunpack.c.l.b16 %v921
    %v3779 = vunpack.c.l.b16 %v922
    %v3780 = vunpack.c.l.b16 %v923
    %v3781 = vunpack.c.l.b16 %v924
    %v3782 = vunpack.c.l.b16 %v925
    %v3783 = vunpack.c.l.b16 %v926
    %v3784 = vunpack.c.l.b16 %v927
    %v3785 = vunpack.c.l.b16 %v928
    %v3786 = vunpack.c.l.b16 %v929
    %v3787 = vunpack.c.l.b16 %v930
    %v3788 = vunpack.c.l.b16 %v931
    %v3789 = vunpack.c.l.b16 %v932
    %v3790 = vunpack.c.l.b16 %v933
    %v3791 = vunpack.c.l.b16 %v934
    %v3792 = vunpack.c.l.b16 %v935
    %v3793 = vunpack.c.l.b16 %v936
    %v3794 = vunpack.c.l.b16 %v937
    %v3795 = vunpack.c.l.b16 %v938
    %v3796 = vunpack.c.l.b16 %v939
    %v3797 = vunpack.c.l.b16 %v940
    %v3798 = vunpack.c.l.b16 %v941
    %v3799 = vunpack.c.l.b16 %v942
    %v3800 = vunpack.c.l.b16 %v943
    %v3801 = vunpack.c.l.b16 %v944
    %v3802 = vunpack.c.l.b16 %v945
    %v3803 = vunpack.c.l.b16 %v946
    %v3804 = vunpack.c.l.b16 %v947
    %v3805 = vunpack.c.l.b16 %v948
    %v3806 = vunpack.c.l.b16 %v949
    %v3807 = vunpack.c.l.b16 %v950
    %v3808 = vunpack.c.l.b16 %v951
    %v3809 = vunpack.c.l.b16 %v952
    %v3810 = vunpack.c.l.b16 %v953
    %v3811 = vunpack.c.l.b16 %v954
    %v3812 = vunpack.c.l.b16 %v955
    %v3813 = vunpack.c.l.b16 %v956
    %v3814 = vunpack.c.l.b16 %v957
    %v3815 = vunpack.c.l.b16 %v958
    %v3816 = vunpack.c.l.b16 %v959
    %v3817 = vunpack.c.l.b16 %v960
    %v3818 = vunpack.c.l.b16 %v961
    %v3819 = vunpack.c.l.b16 %v962
    %v3820 = vunpack.c.l.b16 %v963
    %v3821 = vunpack.c.l.b16 %v964
    %v3822 = vunpack.c.l.b16 %v965
    %v3823 = vunpack.c.l.b16 %v966
    %v3824 = vunpack.c.l.b16 %v967
    %v3825 = vunpack.c.l.b16 %v968
    %v3826 = vunpack.c.l.b16 %v969
    %v3827 = vunpack.c.l.b16 %v970
    %v3828 = vunpack.c.l.b16 %v971
    %v3829 = vunpack.c.l.b16 %v972
    %v3830 = vunpack.c.l.b16 %v973
    %v3831 = vunpack.c.l.b16 %v974
    %v3832 = vunpack.c.l.b16 %v975
    %v3833 = vunpack.c.l.b16 %v976
    %v3834 = vunpack.c.l.b16 %v977
    %v3835 = vunpack.c.l.b16 %v978
    %v3836 = vunpack.c.l.b16 %v979
    %v3837 = vunpack.c.l.b16 %v980
    %v3838 = vunpack.c.l.b16 %v981
    %v3839 = vunpack.c.l.b16 %v982
    %v3840 = vunpack.c.l.b16 %v983
    %v3841 = vunpack.c.l.b16 %v984
    %v3842 = vunpack.c.l.b16 %v985
    %v3843 = vunpack.c.l.b16 %v986
    %v3844 = vunpack.c.l.b16 %v987
    %v3845 = vunpack.c.l.b16 %v988
    %v3846 = vunpack.c.l.b16 %v989
    %v3847 = vunpack.c.l.b16 %v990
    %v3848 = vunpack.c.l.b16 %v991
    %v3849 = vunpack.c.l.b16 %v992
    %v3850 = vunpack.c.l.b16 %v993
    %v3851 = vunpack.c.l.b16 %v994
    %v3852 = vunpack.c.l.b16 %v995
    %v3853 = vunpack.c.l.b16 %v996
    %v3854 = vunpack.c.l.b16 %v997
    %v3855 = vunpack.c.l.b16 %v998
    %v3856 = vunpack.c.l.b16 %v999
    %v3857 = vunpack.c.l.b16 %v1000
    %v3858 = vunpack.c.l.b16 %v1001
    %v3859 = vunpack.c.l.b16 %v1002
    %v3860 = vunpack.c.l.b16 %v1003
    %v3861 = vunpack.c.l.b16 %v1004
    %v3862 = vunpack.c.l.b16 %v1005
    %v3863 = vunpack.c.l.b16 %v1006
    %v3864 = vunpack.c.l.b16 %v1007
    %v3865 = vunpack.c.l.b16 %v1008
    %v3866 = vunpack.c.l.b16 %v1009
    %v3867 = vunpack.c.l.b16 %v1010
    %v3868 = vunpack.c.l.b16 %v1011
    %v3869 = vunpack.c.l.b16 %v1012
    %v3870 = vunpack.c.l.b16 %v1013
    %v3871 = vunpack.c.l.b16 %v1014
    %v3872 = vunpack.c.l.b16 %v1015
    %v3873 = vunpack.c.l.b16 %v1016
    %v3874 = vunpack.c.l.b16 %v1017
    %v3875 = vunpack.c.l.b16 %v1018
    %v3876 = vunpack.c.l.b16 %v1019
    %v3877 = vunpack.c.l.b16 %v1020
    %v3878 = vunpack.c.l.b16 %v1021
    %v3879 = vunpack.c.l.b16 %v1022
    %v3880 = vunpack.c.l.b16 %v1023
    %v3881 = vunpack.c.l.b16 %v1024
    %v3882 = vunpack.c.l.b16 %v1025
    %v3883 = vunpack.c.l.b16 %v1026
    %v3884 = vunpack.c.l.b16 %v1027
    %v3885 = vunpack.c.l.b16 %v1028
    %v3886 = vunpack.c.l.b16 %v1029
    %v3887 = vunpack.c.l.b16 %v1030
    %v3888 = vunpack.c.l.b16 %v1031
    %v3889 = vunpack.c.l.b16 %v1032
    %v3890 = vunpack.c.l.b16 %v1033
    %v3891 = vunpack.c.l.b16 %v1034
    %v3892 = vunpack.c.l.b16 %v1035
    %v3893 = vunpack.c.l.b16 %v1036
    %v3894 = vunpack.c.l.b16 %v1037
    %v3895 = vunpack.c.l.b16 %v1038
    %v3896 = vunpack.c.l.b16 %v1039
    %v3897 = vunpack.c.l.b16 %v1040
    %v3898 = vunpack.c.l.b16 %v1041
    %v3899 = vunpack.c.l.b16 %v1042
    %v3900 = vunpack.c.l.b16 %v1043
    %v3901 = vunpack.c.l.b16 %v1044
    %v3902 = vunpack.c.l.b16 %v1045
    %v3903 = vunpack.c.l.b16 %v1046
    %v3904 = vunpack.c.l.b16 %v1047
    %v3905 = vunpack.c.l.b16 %v1048
    %v3906 = vunpack.c.l.b16 %v1049
    %v3907 = vunpack.c.l.b16 %v1050
    %v3908 = vunpack.c.l.b16 %v1051
    %v3909 = vunpack.c.l.b16 %v1052
    %v3910 = vunpack.c.l.b16 %v1053
    %v3911 = vunpack.c.l.b16 %v1054
    %v3912 = vunpack.c.l.b16 %v1055
    %v3913 = vunpack.c.l.b16 %v1056
    %v3914 = vunpack.c.l.b16 %v1057
    %v3915 = vunpack.c.l.b16 %v1058
    %v3916 = vunpack.c.l.b16 %v1059
    %v3917 = vunpack.c.l.b16 %v1060
    %v3918 = vunpack.c.l.b16 %v1061
    %v3919 = vunpack.c.l.b16 %v1062
    %v3920 = vunpack.c.l.b16 %v1063
    %v3921 = vunpack.c.l.b16 %v1064
    %v3922 = vunpack.c.l.b16 %v1065
    %v3923 = vunpack.c.l.b16 %v1066
    %v3924 = vunpack.c.l.b16 %v1067
    %v3925 = vunpack.c.l.b16 %v1068
    %v3926 = vunpack.c.l.b16 %v1069
    %v3927 = vunpack.c.l.b16 %v1070
    %v3928 = vunpack.c.l.b16 %v1071
    %v3929 = vunpack.c.l.b16 %v1072
    %v3930 = vunpack.c.l.b16 %v1073
    %v3931 = vunpack.c.l.b16 %v1074
    %v3932 = vunpack.c.l.b16 %v1075
    %v3933 = vunpack.c.l.b16 %v1076
    %v3934 = vunpack.c.l.b16 %v1077
    %v3935 = vunpack.c.l.b16 %v1078
    %v3936 = vunpack.c.l.b16 %v1079
    %v3937 = vunpack.c.l.b16 %v1080
    %v3938 = vunpack.c.l.b16 %v1081
    %v3939 = vunpack.c.l.b16 %v1082
    %v3940 = vunpack.c.l.b16 %v1083
    %v3941 = vunpack.c.l.b16 %v1084
    %v3942 = vunpack.c.l.b16 %v1085
    %v3943 = vunpack.c.l.b16 %v1086
    %v3944 = vunpack.c.l.b16 %v1087
    %v3945 = vunpack.c.l.b16 %v1088
    %v3946 = vunpack.c.l.b16 %v1089
    %v3947 = vunpack.c.l.b16 %v1090
    %v3948 = vunpack.c.l.b16 %v1091
    %v3949 = vunpack.c.l.b16 %v1092
    %v3950 = vunpack.c.l.b16 %v1093
    %v3951 = vunpack.c.l.b16 %v1094
    %v3952 = vunpack.c.l.b16 %v1095
    %v3953 = vunpack.c.l.b16 %v1096
    %v3954 = vunpack.c.l.b16 %v1097
    %v3955 = vunpack.c.l.b16 %v1098
    %v3956 = vunpack.c.l.b16 %v1099
    %v3957 = vunpack.c.l.b16 %v1100
    %v3958 = vunpack.c.l.b16 %v1101
    %v3959 = vunpack.c.l.b16 %v1102
    %v3960 = vunpack.c.l.b16 %v1103
    %v3961 = vunpack.c.l.b16 %v1104
    %v3962 = vunpack.c.l.b16 %v1105
    %v3963 = vunpack.c.l.b16 %v1106
    %v3964 = vunpack.c.l.b16 %v1107
    %v3965 = vunpack.c.l.b16 %v1108
    %v3966 = vunpack.c.l.b16 %v1109
    %v3967 = vunpack.c.l.b16 %v1110
    %v3968 = vunpack.c.l.b16 %v1111
    %v3969 = vunpack.c.l.b16 %v1112
    %v3970 = vunpack.c.l.b16 %v1113
    %v3971 = vunpack.c.l.b16 %v1114
    %v3972 = vunpack.c.l.b16 %v1115
    %v3973 = vunpack.c.l.b16 %v1116
    %v3974 = vunpack.c.l.b16 %v1117
    %v3975 = vunpack.c.l.b16 %v1118
    %v3976 = vunpack.c.l.b16 %v1119
    %v3977 = vunpack.c.l.b16 %v1120
    %v3978 = vunpack.c.l.b16 %v1121
    %v3979 = vunpack.c.l.b16 %v1122
    %v3980 = vunpack.c.l.b16 %v1123
    %v3981 = vunpack.c.l.b16 %v1124
    %v3982 = vunpack.c.l.b16 %v1125
    %v3983 = vunpack.c.l.b16 %v1126
    %v3984 = vunpack.c.l.b16 %v1127
    %v3985 = vunpack.c.l.b16 %v1128
    %v3986 = vunpack.c.l.b16 %v1129
    %v3987 = vunpack.c.l.b16 %v1130
    %v3988 = vunpack.c.l.b16 %v1131
    %v3989 = vunpack.c.l.b16 %v1132
    %v3990 = vunpack.c.l.b16 %v1133
    %v3991 = vunpack.c.l.b16 %v1134
    %v3992 = vunpack.c.l.b16 %v1135
    %v3993 = vunpack.c.l.b16 %v1136
    %v3994 = vunpack.c.l.b16 %v1137
    %v3995 = vunpack.c.l.b16 %v1138
    %v3996 = vunpack.c.l.b16 %v1139
    %v3997 = vunpack.c.l.b16 %v1140
    %v3998 = vunpack.c.l.b16 %v1141
    %v3999 = vunpack.c.l.b16 %v1142
    %v4000 = vunpack.c.l.b16 %v1143
    %v4001 = vunpack.c.l.b16 %v1144
    %v4002 = vunpack.c.l.b16 %v1145
    %v4003 = vunpack.c.l.b16 %v1146
    %v4004 = vunpack.c.l.b16 %v1147
    %v4005 = vunpack.c.l.b16 %v1148
    %v4006 = vunpack.c.l.b16 %v1149
    %v4007 = vunpack.c.l.b16 %v1150
    %v4008 = vunpack.c.l.b16 %v1151
    %v4009 = vunpack.c.l.b16 %v1152
    %v4010 = vunpack.c.l.b16 %v1153
    %v4011 = vunpack.c.l.b16 %v1154
    %v4012 = vunpack.c.l.b16 %v1155
    %v4013 = vunpack.c.l.b16 %v1156
    %v4014 = vunpack.c.l.b16 %v1157
    %v4015 = vunpack.c.l.b16 %v1158
    %v4016 = vunpack.c.l.b16 %v1159
    %v4017 = vunpack.c.l.b16 %v1160
    %v4018 = vunpack.c.l.b16 %v1161
    %v4019 = vunpack.c.l.b16 %v1162
    %v4020 = vunpack.c.l.b16 %v1163
    %v4021 = vunpack.c.l.b16 %v1164
    %v4022 = vunpack.c.l.b16 %v1165
    %v4023 = vunpack.c.l.b16 %v1166
    %v4024 = vunpack.c.l.b16 %v1167
    %v4025 = vunpack.c.l.b16 %v1168
    %v4026 = vunpack.c.l.b16 %v1169
    %v4027 = vunpack.c.l.b16 %v1170
    %v4028 = vunpack.c.l.b16 %v1171
    %v4029 = vunpack.c.l.b16 %v1172
    %v4030 = vunpack.c.l.b16 %v1173
    %v4031 = vunpack.c.l.b16 %v1174
    %v4032 = vunpack.c.l.b16 %v1175
    %v4033 = vunpack.c.l.b16 %v1176
    %v4034 = vunpack.c.l.b16 %v1177
    %v4035 = vunpack.c.l.b16 %v1178
    %v4036 = vunpack.c.l.b16 %v1179
    %v4037 = vunpack.c.l.b16 %v1180
    %v4038 = vunpack.c.l.b16 %v1181
    %v4039 = vunpack.c.l.b16 %v1182
    %v4040 = vunpack.c.l.b16 %v1183
    %v4041 = vunpack.c.l.b16 %v1184
    %v4042 = vunpack.c.l.b16 %v1185
    %v4043 = vunpack.c.l.b16 %v1186
    %v4044 = vunpack.c.l.b16 %v1187
    %v4045 = vunpack.c.l.b16 %v1188
    %v4046 = vunpack.c.l.b16 %v1189
    %v4047 = vunpack.c.l.b16 %v1190
    %v4048 = vunpack.c.l.b16 %v1191
    %v4049 = vunpack.c.l.b16 %v1192
    %v4050 = vunpack.c.l.b16 %v1193
    %v4051 = vunpack.c.l.b16 %v1194
    %v4052 = vunpack.c.l.b16 %v1195
    %v4053 = vunpack.c.l.b16 %v1196
    %v4054 = vunpack.c.l.b16 %v1197
    %v4055 = vunpack.c.l.b16 %v1198
    %v4056 = vunpack.c.l.b16 %v1199
    %v4057 = vunpack.c.l.b16 %v1200
    %v4058 = vunpack.c.l.b16 %v1201
    %v4059 = vunpack.c.l.b16 %v1202
    %v4060 = vunpack.c.l.b16 %v1203
    %v4061 = vunpack.c.l.b16 %v1204
    %v4062 = vunpack.c.l.b16 %v1205
    %v4063 = vunpack.c.l.b16 %v1206
    %v4064 = vunpack.c.l.b16 %v1207
    %v4065 = vunpack.c.l.b16 %v1208
    %v4066 = vunpack.c.l.b16 %v1209
    %v4067 = vunpack.c.l.b16 %v1210
    %v4068 = vunpack.c.l.b16 %v1211
    %v4069 = vunpack.c.l.b16 %v1212
    %v4070 = vunpack.c.l.b16 %v1213
    %v4071 = vunpack.c.l.b16 %v1214
    %v4072 = vunpack.c.l.b16 %v1215
    %v4073 = vunpack.c.l.b16 %v1216
    %v4074 = vunpack.c.l.b16 %v1217
    %v4075 = vunpack.c.l.b16 %v1218
    %v4076 = vunpack.c.l.b16 %v1219
    %v4077 = vunpack.c.l.b16 %v1220
    %v4078 = vunpack.c.l.b16 %v1221
    %v4079 = vunpack.c.l.b16 %v1222
    %v4080 = vunpack.c.l.b16 %v1223
    %v4081 = vunpack.c.l.b16 %v1224
    %v4082 = vunpack.c.l.b16 %v1225
    %v4083 = vunpack.c.l.b16 %v1226
    %v4084 = vunpack.c.l.b16 %v1227
    %v4085 = vunpack.c.l.b16 %v1228
    %v4086 = vunpack.c.l.b16 %v1229
    %v4087 = vunpack.c.l.b16 %v1230
    %v4088 = vunpack.c.l.b16 %v1231
    %v4089 = vunpack.c.l.b16 %v1232
    %v4090 = vunpack.c.l.b16 %v1233
    %v4091 = vunpack.c.l.b16 %v1234
    %v4092 = vunpack.c.l.b16 %v1235
    %v4093 = vunpack.c.l.b16 %v1236
    %v4094 = vunpack.c.l.b16 %v1237
    %v4095 = vunpack.c.l.b16 %v1238
    %v4096 = vunpack.c.l.b16 %v1239
    %v4097 = vunpack.c.l.b16 %v1240
    %v4098 = vunpack.c.l.b16 %v1241
    %v4099 = vunpack.c.l.b16 %v1242
    %v4100 = vunpack.c.l.b16 %v1243
    %v4101 = vunpack.c.l.b16 %v1244
    %v4102 = vunpack.c.l.b16 %v1245
    %v4103 = vunpack.c.l.b16 %v1246
    %v4104 = vunpack.c.l.b16 %v1247
    %v4105 = vunpack.c.l.b16 %v1248
    %v4106 = vunpack.c.l.b16 %v1249
    %v4107 = vunpack.c.l.b16 %v1250
    %v4108 = vunpack.c.l.b16 %v1251
    %v4109 = vunpack.c.l.b16 %v1252
    %v4110 = vunpack.c.l.b16 %v1253
    %v4111 = vunpack.c.l.b16 %v1254
    %v4112 = vunpack.c.l.b16 %v1255
    %v4113 = vunpack.c.l.b16 %v1256
    %v4114 = vunpack.c.l.b16 %v1257
    %v4115 = vunpack.c.l.b16 %v1258
    %v4116 = vunpack.c.l.b16 %v1259
    %v4117 = vunpack.c.l.b16 %v1260
    %v4118 = vunpack.c.l.b16 %v1261
    %v4119 = vunpack.c.l.b16 %v1262
    %v4120 = vunpack.c.l.b16 %v1263
    %v4121 = vunpack.c.l.b16 %v1264
    %v4122 = vunpack.c.l.b16 %v1265
    %v4123 = vunpack.c.l.b16 %v1266
    %v4124 = vunpack.c.l.b16 %v1267
    %v4125 = vunpack.c.l.b16 %v1268
    %v4126 = vunpack.c.l.b16 %v1269
    %v4127 = vunpack.c.l.b16 %v1270
    %v4128 = vunpack.c.l.b16 %v1271
    %v4129 = vunpack.c.l.b16 %v1272
    %v4130 = vunpack.c.l.b16 %v1273
    %v4131 = vunpack.c.l.b16 %v1274
    %v4132 = vunpack.c.l.b16 %v1275
    %v4133 = vunpack.c.l.b16 %v1276
    %v4134 = vunpack.c.l.b16 %v1277
    %v4135 = vunpack.c.l.b16 %v1278
    %v4136 = vunpack.c.l.b16 %v1279
    %v4137 = vunpack.c.l.b16 %v1280
    %v4138 = vunpack.c.l.b16 %v1281
    %v4139 = vunpack.c.l.b16 %v1282
    %v4140 = vunpack.c.l.b16 %v1283
    %v4141 = vunpack.c.l.b16 %v1284
    %v4142 = vunpack.c.l.b16 %v1285
    %v4143 = vunpack.c.l.b16 %v1286
    %v4144 = vunpack.c.l.b16 %v1287
    %v4145 = vunpack.c.l.b16 %v1288
    %v4146 = vunpack.c.l.b16 %v1289
    %v4147 = vunpack.c.l.b16 %v1290
    %v4148 = vunpack.c.l.b16 %v1291
    %v4149 = vunpack.c.l.b16 %v1292
    %v4150 = vunpack.c.l.b16 %v1293
    %v4151 = vunpack.c.l.b16 %v1294
    %v4152 = vunpack.c.l.b16 %v1295
    %v4153 = vunpack.c.l.b16 %v1296
    %v4154 = vunpack.c.l.b16 %v1297
    %v4155 = vunpack.c.l.b16 %v1298
    %v4156 = vunpack.c.l.b16 %v1299
    %v4157 = vunpack.c.l.b16 %v1300
    %v4158 = vunpack.c.l.b16 %v1301
    %v4159 = vunpack.c.l.b16 %v1302
    %v4160 = vunpack.c.l.b16 %v1303
    %v4161 = vunpack.c.l.b16 %v1304
    %v4162 = vunpack.c.l.b16 %v1305
    %v4163 = vunpack.c.l.b16 %v1306
    %v4164 = vunpack.c.l.b16 %v1307
    %v4165 = vunpack.c.l.b16 %v1308
    %v4166 = vunpack.c.l.b16 %v1309
    %v4167 = vunpack.c.l.b16 %v1310
    %v4168 = vunpack.c.l.b16 %v1311
    %v4169 = vunpack.c.l.b16 %v1312
    %v4170 = vunpack.c.l.b16 %v1313
    %v4171 = vunpack.c.l.b16 %v1314
    %v4172 = vunpack.c.l.b16 %v1315
    %v4173 = vunpack.c.l.b16 %v1316
    %v4174 = vunpack.c.l.b16 %v1317
    %v4175 = vunpack.c.l.b16 %v1318
    %v4176 = vunpack.c.l.b16 %v1319
    %v4177 = vunpack.c.l.b16 %v1320
    %v4178 = vunpack.c.l.b16 %v1321
    %v4179 = vunpack.c.l.b16 %v1322
    %v4180 = vunpack.c.l.b16 %v1323
    %v4181 = vunpack.c.l.b16 %v1324
    %v4182 = vunpack.c.l.b16 %v1325
    %v4183 = vunpack.c.l.b16 %v1326
    %v4184 = vunpack.c.l.b16 %v1327
    %v4185 = vunpack.c.l.b16 %v1328
    %v4186 = vunpack.c.l.b16 %v1329
    %v4187 = vunpack.c.l.b16 %v1330
    %v4188 = vunpack.c.l.b16 %v1331
    %v4189 = vunpack.c.l.b16 %v1332
    %v4190 = vunpack.c.l.b16 %v1333
    %v4191 = vunpack.c.l.b16 %v1334
    %v4192 = vunpack.c.l.b16 %v1335
    %v4193 = vunpack.c.l.b16 %v1336
    %v4194 = vunpack.c.l.b16 %v1337
    %v4195 = vunpack.c.l.b16 %v1338
    %v4196 = vunpack.c.l.b16 %v1339
    %v4197 = vunpack.c.l.b16 %v1340
    %v4198 = vunpack.c.l.b16 %v1341
    %v4199 = vunpack.c.l.b16 %v1342
    %v4200 = vunpack.c.l.b16 %v1343
    %v4201 = vunpack.c.l.b16 %v1344
    %v4202 = vunpack.c.l.b16 %v1345
    %v4203 = vunpack.c.l.b16 %v1346
    %v4204 = vunpack.c.l.b16 %v1347
    %v4205 = vunpack.c.l.b16 %v1348
    %v4206 = vunpack.c.l.b16 %v1349
    %v4207 = vunpack.c.l.b16 %v1350
    %v4208 = vunpack.c.l.b16 %v1351
    %v4209 = vunpack.c.l.b16 %v1352
    %v4210 = vunpack.c.l.b16 %v1353
    %v4211 = vunpack.c.l.b16 %v1354
    %v4212 = vunpack.c.l.b16 %v1355
    %v4213 = vunpack.c.l.b16 %v1356
    %v4214 = vunpack.c.l.b16 %v1357
    %v4215 = vunpack.c.l.b16 %v1358
    %v4216 = vunpack.c.l.b16 %v1359
    %v4217 = vunpack.c.l.b16 %v1360
    %v4218 = vunpack.c.l.b16 %v1361
    %v4219 = vunpack.c.l.b16 %v1362
    %v4220 = vunpack.c.l.b16 %v1363
    %v4221 = vunpack.c.l.b16 %v1364
    %v4222 = vunpack.c.l.b16 %v1365
    %v4223 = vunpack.c.l.b16 %v1366
    %v4224 = vpack.c.b16 %v2993, %v2992
    %v4225 = vpack.c.b16 %v2995, %v2994
    %v4226 = vpack.c.b16 %v2997, %v2996
    %v4227 = vpack.c.b16 %v2999, %v2998
    %v4228 = vpack.c.b16 %v3001, %v3000
    %v4229 = vpack.c.b16 %v3003, %v3002
    %v4230 = vpack.c.b16 %v3005, %v3004
    %v4231 = vpack.c.b16 %v3007, %v3006
    %v4232 = vpack.c.b16 %v3009, %v3008
    %v4233 = vpack.c.b16 %v3011, %v3010
    %v4234 = vpack.c.b16 %v3013, %v3012
    %v4235 = vpack.c.b16 %v3015, %v3014
    %v4236 = vpack.c.b16 %v3017, %v3016
    %v4237 = vpack.c.b16 %v3019, %v3018
    %v4238 = vpack.c.b16 %v3021, %v3020
    %v4239 = vpack.c.b16 %v3023, %v3022
    %v4240 = vpack.c.b16 %v3025, %v3024
    %v4241 = vpack.c.b16 %v3027, %v3026
    %v4242 = vpack.c.b16 %v3029, %v3028
    %v4243 = vpack.c.b16 %v3031, %v3030
    %v4244 = vpack.c.b16 %v3033, %v3032
    %v4245 = vpack.c.b16 %v3035, %v3034
    %v4246 = vpack.c.b16 %v3037, %v3036
    %v4247 = vpack.c.b16 %v3039, %v3038
    %v4248 = vpack.c.b16 %v3041, %v3040
    %v4249 = vpack.c.b16 %v3043, %v3042
    %v4250 = vpack.c.b16 %v3045, %v3044
    %v4251 = vpack.c.b16 %v3047, %v3046
    %v4252 = vpack.c.b16 %v3049, %v3048
    %v4253 = vpack.c.b16 %v3051, %v3050
    %v4254 = vpack.c.b16 %v3053, %v3052
    %v4255 = vpack.c.b16 %v3055, %v3054
    %v4256 = vpack.c.b16 %v3057, %v3056
    %v4257 = vpack.c.b16 %v3059, %v3058
    %v4258 = vpack.c.b16 %v3061, %v3060
    %v4259 = vpack.c.b16 %v3063, %v3062
    %v4260 = vpack.c.b16 %v3065, %v3064
    %v4261 = vpack.c.b16 %v3067, %v3066
    %v4262 = vpack.c.b16 %v3069, %v3068
    %v4263 = vpack.c.b16 %v3071, %v3070
    %v4264 = vpack.c.b16 %v3073, %v3072
    %v4265 = vpack.c.b16 %v3075, %v3074
    %v4266 = vpack.c.b16 %v3077, %v3076
    %v4267 = vpack.c.b16 %v3079, %v3078
    %v4268 = vpack.c.b16 %v3081, %v3080
    %v4269 = vpack.c.b16 %v3083, %v3082
    %v4270 = vpack.c.b16 %v3085, %v3084
    %v4271 = vpack.c.b16 %v3087, %v3086
    %v4272 = vpack.c.b16 %v3089, %v3088
    %v4273 = vpack.c.b16 %v3091, %v3090
    %v4274 = vpack.c.b16 %v3093, %v3092
    %v4275 = vpack.c.b16 %v3095, %v3094
    %v4276 = vpack.c.b16 %v3097, %v3096
    %v4277 = vpack.c.b16 %v3099, %v3098
    %v4278 = vpack.c.b16 %v3101, %v3100
    %v4279 = vpack.c.b16 %v3103, %v3102
    %v4280 = vpack.c.b16 %v3105, %v3104
    %v4281 = vpack.c.b16 %v3107, %v3106
    %v4282 = vpack.c.b16 %v3109, %v3108
    %v4283 = vpack.c.b16 %v3111, %v3110
    %v4284 = vpack.c.b16 %v3113, %v3112
    %v4285 = vpack.c.b16 %v3115, %v3114
    %v4286 = vpack.c.b16 %v3117, %v3116
    %v4287 = vpack.c.b16 %v3119, %v3118
    %v4288 = vpack.c.b16 %v3121, %v3120
    %v4289 = vpack.c.b16 %v3123, %v3122
    %v4290 = vpack.c.b16 %v3125, %v3124
    %v4291 = vpack.c.b16 %v3127, %v3126
    %v4292 = vpack.c.b16 %v3129, %v3128
    %v4293 = vpack.c.b16 %v3131, %v3130
    %v4294 = vpack.c.b16 %v3133, %v3132
    %v4295 = vpack.c.b16 %v3135, %v3134
    %v4296 = vpack.c.b16 %v3137, %v3136
    %v4297 = vpack.c.b16 %v3139, %v3138
    %v4298 = vpack.c.b16 %v3141, %v3140
    %v4299 = vpack.c.b16 %v3143, %v3142
    %v4300 = vpack.c.b16 %v3145, %v3144
    %v4301 = vpack.c.b16 %v3147, %v3146
    %v4302 = vpack.c.b16 %v3149, %v3148
    %v4303 = vpack.c.b16 %v3151, %v3150
    %v4304 = vpack.c.b16 %v3153, %v3152
    %v4305 = vpack.c.b16 %v3155, %v3154
    %v4306 = vpack.c.b16 %v3157, %v3156
    %v4307 = vpack.c.b16 %v3159, %v3158
    %v4308 = vpack.c.b16 %v3161, %v3160
    %v4309 = vpack.c.b16 %v3163, %v3162
    %v4310 = vpack.c.b16 %v3165, %v3164
    %v4311 = vpack.c.b16 %v3167, %v3166
    %v4312 = vpack.c.b16 %v3169, %v3168
    %v4313 = vpack.c.b16 %v3171, %v3170
    %v4314 = vpack.c.b16 %v3173, %v3172
    %v4315 = vpack.c.b16 %v3175, %v3174
    %v4316 = vpack.c.b16 %v3177, %v3176
    %v4317 = vpack.c.b16 %v3179, %v3178
    %v4318 = vpack.c.b16 %v3181, %v3180
    %v4319 = vpack.c.b16 %v3183, %v3182
    %v4320 = vpack.c.b16 %v3185, %v3184
    %v4321 = vpack.c.b16 %v3187, %v3186
    %v4322 = vpack.c.b16 %v3189, %v3188
    %v4323 = vpack.c.b16 %v3191, %v3190
    %v4324 = vpack.c.b16 %v3193, %v3192
    %v4325 = vpack.c.b16 %v3195, %v3194
    %v4326 = vpack.c.b16 %v3197, %v3196
    %v4327 = vpack.c.b16 %v3199, %v3198
    %v4328 = vpack.c.b16 %v3201, %v3200
    %v4329 = vpack.c.b16 %v3203, %v3202
    %v4330 = vpack.c.b16 %v3205, %v3204
    %v4331 = vpack.c.b16 %v3207, %v3206
    %v4332 = vpack.c.b16 %v3209, %v3208
    %v4333 = vpack.c.b16 %v3211, %v3210
    %v4334 = vpack.c.b16 %v3213, %v3212
    %v4335 = vpack.c.b16 %v3215, %v3214
    %v4336 = vpack.c.b16 %v3217, %v3216
    %v4337 = vpack.c.b16 %v3219, %v3218
    %v4338 = vpack.c.b16 %v3221, %v3220
    %v4339 = vpack.c.b16 %v3223, %v3222
    %v4340 = vpack.c.b16 %v3225, %v3224
    %v4341 = vpack.c.b16 %v3227, %v3226
    %v4342 = vpack.c.b16 %v3229, %v3228
    %v4343 = vpack.c.b16 %v3231, %v3230
    %v4344 = vpack.c.b16 %v3233, %v3232
    %v4345 = vpack.c.b16 %v3235, %v3234
    %v4346 = vpack.c.b16 %v3237, %v3236
    %v4347 = vpack.c.b16 %v3239, %v3238
    %v4348 = vpack.c.b16 %v3241, %v3240
    %v4349 = vpack.c.b16 %v3243, %v3242
    %v4350 = vpack.c.b16 %v3245, %v3244
    %v4351 = vpack.c.b16 %v3247, %v3246
    %v4352 = vpack.c.b16 %v3249, %v3248
    %v4353 = vpack.c.b16 %v3251, %v3250
    %v4354 = vpack.c.b16 %v3253, %v3252
    %v4355 = vpack.c.b16 %v3255, %v3254
    %v4356 = vpack.c.b16 %v3257, %v3256
    %v4357 = vpack.c.b16 %v3259, %v3258
    %v4358 = vpack.c.b16 %v3261, %v3260
    %v4359 = vpack.c.b16 %v3263, %v3262
    %v4360 = vpack.c.b16 %v3265, %v3264
    %v4361 = vpack.c.b16 %v3267, %v3266
    %v4362 = vpack.c.b16 %v3269, %v3268
    %v4363 = vpack.c.b16 %v3271, %v3270
    %v4364 = vpack.c.b16 %v3273, %v3272
    %v4365 = vpack.c.b16 %v3275, %v3274
    %v4366 = vpack.c.b16 %v3277, %v3276
    %v4367 = vpack.c.b16 %v3279, %v3278
    %v4368 = vpack.c.b16 %v3281, %v3280
    %v4369 = vpack.c.b16 %v3283, %v3282
    %v4370 = vpack.c.b16 %v3285, %v3284
    %v4371 = vpack.c.b16 %v3287, %v3286
    %v4372 = vpack.c.b16 %v3289, %v3288
    %v4373 = vpack.c.b16 %v3291, %v3290
    %v4374 = vpack.c.b16 %v3293, %v3292
    %v4375 = vpack.c.b16 %v3295, %v3294
    %v4376 = vpack.c.b16 %v3297, %v3296
    %v4377 = vpack.c.b16 %v3299, %v3298
    %v4378 = vpack.c.b16 %v3301, %v3300
    %v4379 = vpack.c.b16 %v3303, %v3302
    %v4380 = vpack.c.b16 %v3305, %v3304
    %v4381 = vpack.c.b16 %v3307, %v3306
    %v4382 = vpack.c.b16 %v3309, %v3308
    %v4383 = vpack.c.b16 %v3311, %v3310
    %v4384 = vpack.c.b16 %v3313, %v3312
    %v4385 = vpack.c.b16 %v3315, %v3314
    %v4386 = vpack.c.b16 %v3317, %v3316
    %v4387 = vpack.c.b16 %v3319, %v3318
    %v4388 = vpack.c.b16 %v3321, %v3320
    %v4389 = vpack.c.b16 %v3323, %v3322
    %v4390 = vpack.c.b16 %v3325, %v3324
    %v4391 = vpack.c.b16 %v3327, %v3326
    %v4392 = vpack.c.b16 %v3329, %v3328
    %v4393 = vpack.c.b16 %v3331, %v3330
    %v4394 = vpack.c.b16 %v3333, %v3332
    %v4395 = vpack.c.b16 %v3335, %v3334
    %v4396 = vpack.c.b16 %v3337, %v3336
    %v4397 = vpack.c.b16 %v3339, %v3338
    %v4398 = vpack.c.b16 %v3341, %v3340
    %v4399 = vpack.c.b16 %v3343, %v3342
    %v4400 = vpack.c.b16 %v3345, %v3344
    %v4401 = vpack.c.b16 %v3347, %v3346
    %v4402 = vpack.c.b16 %v3349, %v3348
    %v4403 = vpack.c.b16 %v3351, %v3350
    %v4404 = vpack.c.b16 %v3353, %v3352
    %v4405 = vpack.c.b16 %v3355, %v3354
    %v4406 = vpack.c.b16 %v3357, %v3356
    %v4407 = vpack.c.b16 %v3359, %v3358
    %v4408 = vpack.c.b16 %v3361, %v3360
    %v4409 = vpack.c.b16 %v3363, %v3362
    %v4410 = vpack.c.b16 %v3365, %v3364
    %v4411 = vpack.c.b16 %v3367, %v3366
    %v4412 = vpack.c.b16 %v3369, %v3368
    %v4413 = vpack.c.b16 %v3371, %v3370
    %v4414 = vpack.c.b16 %v3373, %v3372
    %v4415 = vpack.c.b16 %v3375, %v3374
    %v4416 = vpack.c.b16 %v3377, %v3376
    %v4417 = vpack.c.b16 %v3379, %v3378
    %v4418 = vpack.c.b16 %v3381, %v3380
    %v4419 = vpack.c.b16 %v3383, %v3382
    %v4420 = vpack.c.b16 %v3385, %v3384
    %v4421 = vpack.c.b16 %v3387, %v3386
    %v4422 = vpack.c.b16 %v3389, %v3388
    %v4423 = vpack.c.b16 %v3391, %v3390
    %v4424 = vpack.c.b16 %v3393, %v3392
    %v4425 = vpack.c.b16 %v3395, %v3394
    %v4426 = vpack.c.b16 %v3397, %v3396
    %v4427 = vpack.c.b16 %v3399, %v3398
    %v4428 = vpack.c.b16 %v3401, %v3400
    %v4429 = vpack.c.b16 %v3403, %v3402
    %v4430 = vpack.c.b16 %v3405, %v3404
    %v4431 = vpack.c.b16 %v3407, %v3406
    %v4432 = vpack.c.b16 %v3409, %v3408
    %v4433 = vpack.c.b16 %v3411, %v3410
    %v4434 = vpack.c.b16 %v3413, %v3412
    %v4435 = vpack.c.b16 %v3415, %v3414
    %v4436 = vpack.c.b16 %v3417, %v3416
    %v4437 = vpack.c.b16 %v3419, %v3418
    %v4438 = vpack.c.b16 %v3421, %v3420
    %v4439 = vpack.c.b16 %v3423, %v3422
    %v4440 = vpack.c.b16 %v3425, %v3424
    %v4441 = vpack.c.b16 %v3427, %v3426
    %v4442 = vpack.c.b16 %v3429, %v3428
    %v4443 = vpack.c.b16 %v3431, %v3430
    %v4444 = vpack.c.b16 %v3433, %v3432
    %v4445 = vpack.c.b16 %v3435, %v3434
    %v4446 = vpack.c.b16 %v3437, %v3436
    %v4447 = vpack.c.b16 %v3439, %v3438
    %v4448 = vpack.c.b16 %v3441, %v3440
    %v4449 = vpack.c.b16 %v3443, %v3442
    %v4450 = vpack.c.b16 %v3445, %v3444
    %v4451 = vpack.c.b16 %v3447, %v3446
    %v4452 = vpack.c.b16 %v3449, %v3448
    %v4453 = vpack.c.b16 %v3451, %v3450
    %v4454 = vpack.c.b16 %v3453, %v3452
    %v4455 = vpack.c.b16 %v3455, %v3454
    %v4456 = vpack.c.b16 %v3457, %v3456
    %v4457 = vpack.c.b16 %v3459, %v3458
    %v4458 = vpack.c.b16 %v3461, %v3460
    %v4459 = vpack.c.b16 %v3463, %v3462
    %v4460 = vpack.c.b16 %v3465, %v3464
    %v4461 = vpack.c.b16 %v3467, %v3466
    %v4462 = vpack.c.b16 %v3469, %v3468
    %v4463 = vpack.c.b16 %v3471, %v3470
    %v4464 = vpack.c.b16 %v3473, %v3472
    %v4465 = vpack.c.b16 %v3475, %v3474
    %v4466 = vpack.c.b16 %v3477, %v3476
    %v4467 = vpack.c.b16 %v3479, %v3478
    %v4468 = vpack.c.b16 %v3481, %v3480
    %v4469 = vpack.c.b16 %v3483, %v3482
    %v4470 = vpack.c.b16 %v3485, %v3484
    %v4471 = vpack.c.b16 %v3487, %v3486
    %v4472 = vpack.c.b16 %v3489, %v3488
    %v4473 = vpack.c.b16 %v3491, %v3490
    %v4474 = vpack.c.b16 %v3493, %v3492
    %v4475 = vpack.c.b16 %v3495, %v3494
    %v4476 = vpack.c.b16 %v3497, %v3496
    %v4477 = vpack.c.b16 %v3499, %v3498
    %v4478 = vpack.c.b16 %v3501, %v3500
    %v4479 = vpack.c.b16 %v3503, %v3502
    %v4480 = vpack.c.b16 %v3505, %v3504
    %v4481 = vpack.c.b16 %v3507, %v3506
    %v4482 = vpack.c.b16 %v3509, %v3508
    %v4483 = vpack.c.b16 %v3511, %v3510
    %v4484 = vpack.c.b16 %v3513, %v3512
    %v4485 = vpack.c.b16 %v3515, %v3514
    %v4486 = vpack.c.b16 %v3517, %v3516
    %v4487 = vpack.c.b16 %v3519, %v3518
    %v4488 = vpack.c.b16 %v3521, %v3520
    %v4489 = vpack.c.b16 %v3523, %v3522
    %v4490 = vpack.c.b16 %v3525, %v3524
    %v4491 = vpack.c.b16 %v3527, %v3526
    %v4492 = vpack.c.b16 %v3529, %v3528
    %v4493 = vpack.c.b16 %v3531, %v3530
    %v4494 = vpack.c.b16 %v3533, %v3532
    %v4495 = vpack.c.b16 %v3535, %v3534
    %v4496 = vpack.c.b16 %v3537, %v3536
    %v4497 = vpack.c.b16 %v3539, %v3538
    %v4498 = vpack.c.b16 %v3541, %v3540
    %v4499 = vpack.c.b16 %v3543, %v3542
    %v4500 = vpack.c.b16 %v3545, %v3544
    %v4501 = vpack.c.b16 %v3547, %v3546
    %v4502 = vpack.c.b16 %v3549, %v3548
    %v4503 = vpack.c.b16 %v3551, %v3550
    %v4504 = vpack.c.b16 %v3553, %v3552
    %v4505 = vpack.c.b16 %v3555, %v3554
    %v4506 = vpack.c.b16 %v3557, %v3556
    %v4507 = vpack.c.b16 %v3559, %v3558
    %v4508 = vpack.c.b16 %v3561, %v3560
    %v4509 = vpack.c.b16 %v3563, %v3562
    %v4510 = vpack.c.b16 %v3565, %v3564
    %v4511 = vpack.c.b16 %v3567, %v3566
    %v4512 = vpack.c.b16 %v3569, %v3568
    %v4513 = vpack.c.b16 %v3571, %v3570
    %v4514 = vpack.c.b16 %v3573, %v3572
    %v4515 = vpack.c.b16 %v3575, %v3574
    %v4516 = vpack.c.b16 %v3577, %v3576
    %v4517 = vpack.c.b16 %v3579, %v3578
    %v4518 = vpack.c.b16 %v3581, %v3580
    %v4519 = vpack.c.b16 %v3583, %v3582
    %v4520 = vpack.c.b16 %v3585, %v3584
    %v4521 = vpack.c.b16 %v3587, %v3586
    %v4522 = vpack.c.b16 %v3589, %v3588
    %v4523 = vpack.c.b16 %v3591, %v3590
    %v4524 = vpack.c.b16 %v3593, %v3592
    %v4525 = vpack.c.b16 %v3595, %v3594
    %v4526 = vpack.c.b16 %v3597, %v3596
    %v4527 = vpack.c.b16 %v3599, %v3598
    %v4528 = vpack.c.b16 %v3601, %v3600
    %v4529 = vpack.c.b16 %v3603, %v3602
    %v4530 = vpack.c.b16 %v3605, %v3604
    %v4531 = vpack.c.b16 %v3607, %v3606
    %v4532 = vpack.c.b16 %v3609, %v3608
    %v4533 = vpack.c.b16 %v3611, %v3610
    %v4534 = vpack.c.b16 %v3613, %v3612
    %v4535 = vpack.c.b16 %v3615, %v3614
    %v4536 = vpack.c.b16 %v3617, %v3616
    %v4537 = vpack.c.b16 %v3619, %v3618
    %v4538 = vpack.c.b16 %v3621, %v3620
    %v4539 = vpack.c.b16 %v3623, %v3622
    %v4540 = vpack.c.b16 %v3625, %v3624
    %v4541 = vpack.c.b16 %v3627, %v3626
    %v4542 = vpack.c.b16 %v3629, %v3628
    %v4543 = vpack.c.b16 %v3631, %v3630
    %v4544 = vpack.c.b16 %v3633, %v3632
    %v4545 = vpack.c.b16 %v3635, %v3634
    %v4546 = vpack.c.b16 %v3637, %v3636
    %v4547 = vpack.c.b16 %v3639, %v3638
    %v4548 = vpack.c.b16 %v3641, %v3640
    %v4549 = vpack.c.b16 %v3643, %v3642
    %v4550 = vpack.c.b16 %v3645, %v3644
    %v4551 = vpack.c.b16 %v3647, %v3646
    %v4552 = vpack.c.b16 %v3649, %v3648
    %v4553 = vpack.c.b16 %v3651, %v3650
    %v4554 = vpack.c.b16 %v3653, %v3652
    %v4555 = vpack.c.b16 %v3655, %v3654
    %v4556 = vpack.c.b16 %v3657, %v3656
    %v4557 = vpack.c.b16 %v3659, %v3658
    %v4558 = vpack.c.b16 %v3661, %v3660
    %v4559 = vpack.c.b16 %v3663, %v3662
    %v4560 = vpack.c.b16 %v3665, %v3664
    %v4561 = vpack.c.b16 %v3667, %v3666
    %v4562 = vpack.c.b16 %v3669, %v3668
    %v4563 = vpack.c.b16 %v3671, %v3670
    %v4564 = vpack.c.b16 %v3673, %v3672
    %v4565 = vpack.c.b16 %v3675, %v3674
    %v4566 = vpack.c.b16 %v3677, %v3676
    %v4567 = vpack.c.b16 %v3679, %v3678
    %v4568 = vpack.c.b16 %v3681, %v3680
    %v4569 = vpack.c.b16 %v3683, %v3682
    %v4570 = vpack.c.b16 %v3685, %v3684
    %v4571 = vpack.c.b16 %v3687, %v3686
    %v4572 = vpack.c.b16 %v3689, %v3688
    %v4573 = vpack.c.b16 %v3691, %v3690
    %v4574 = vpack.c.b16 %v3693, %v3692
    %v4575 = vpack.c.b16 %v3695, %v3694
    %v4576 = vpack.c.b16 %v3697, %v3696
    %v4577 = vpack.c.b16 %v3699, %v3698
    %v4578 = vpack.c.b16 %v3701, %v3700
    %v4579 = vpack.c.b16 %v3703, %v3702
    %v4580 = vpack.c.b16 %v3705, %v3704
    %v4581 = vpack.c.b16 %v3707, %v3706
    %v4582 = vpack.c.b16 %v3709, %v3708
    %v4583 = vpack.c.b16 %v3711, %v3710
    %v4584 = vpack.c.b16 %v3713, %v3712
    %v4585 = vpack.c.b16 %v3715, %v3714
    %v4586 = vpack.c.b16 %v3717, %v3716
    %v4587 = vpack.c.b16 %v3719, %v3718
    %v4588 = vpack.c.b16 %v3721, %v3720
    %v4589 = vpack.c.b16 %v3723, %v3722
    %v4590 = vpack.c.b16 %v3725, %v3724
    %v4591 = vpack.c.b16 %v3727, %v3726
    %v4592 = vpack.c.b16 %v3729, %v3728
    %v4593 = vpack.c.b16 %v3731, %v3730
    %v4594 = vpack.c.b16 %v3733, %v3732
    %v4595 = vpack.c.b16 %v3735, %v3734
    %v4596 = vpack.c.b16 %v3737, %v3736
    %v4597 = vpack.c.b16 %v3739, %v3738
    %v4598 = vpack.c.b16 %v3741, %v3740
    %v4599 = vpack.c.b16 %v3743, %v3742
    %v4600 = vpack.c.b16 %v3745, %v3744
    %v4601 = vpack.c.b16 %v3747, %v3746
    %v4602 = vpack.c.b16 %v3749, %v3748
    %v4603 = vpack.c.b16 %v3751, %v3750
    %v4604 = vpack.c.b16 %v3753, %v3752
    %v4605 = vpack.c.b16 %v3755, %v3754
    %v4606 = vpack.c.b16 %v3757, %v3756
    %v4607 = vpack.c.b16 %v3759, %v3758
    %v4608 = vpack.c.b16 %v3761, %v3760
    %v4609 = vpack.c.b16 %v3763, %v3762
    %v4610 = vpack.c.b16 %v3765, %v3764
    %v4611 = vpack.c.b16 %v3767, %v3766
    %v4612 = vpack.c.b16 %v3769, %v3768
    %v4613 = vpack.c.b16 %v3771, %v3770
    %v4614 = vpack.c.b16 %v3773, %v3772
    %v4615 = vpack.c.b16 %v3775, %v3774
    %v4616 = vpack.c.b16 %v3777, %v3776
    %v4617 = vpack.c.b16 %v3779, %v3778
    %v4618 = vpack.c.b16 %v3781, %v3780
    %v4619 = vpack.c.b16 %v3783, %v3782
    %v4620 = vpack.c.b16 %v3785, %v3784
    %v4621 = vpack.c.b16 %v3787, %v3786
    %v4622 = vpack.c.b16 %v3789, %v3788
    %v4623 = vpack.c.b16 %v3791, %v3790
    %v4624 = vpack.c.b16 %v3793, %v3792
    %v4625 = vpack.c.b16 %v3795, %v3794
    %v4626 = vpack.c.b16 %v3797, %v3796
    %v4627 = vpack.c.b16 %v3799, %v3798
    %v4628 = vpack.c.b16 %v3801, %v3800
    %v4629 = vpack.c.b16 %v3803, %v3802
    %v4630 = vpack.c.b16 %v3805, %v3804
    %v4631 = vpack.c.b16 %v3807, %v3806
    %v4632 = vpack.c.b16 %v3809, %v3808
    %v4633 = vpack.c.b16 %v3811, %v3810
    %v4634 = vpack.c.b16 %v3813, %v3812
    %v4635 = vpack.c.b16 %v3815, %v3814
    %v4636 = vpack.c.b16 %v3817, %v3816
    %v4637 = vpack.c.b16 %v3819, %v3818
    %v4638 = vpack.c.b16 %v3821, %v3820
    %v4639 = vpack.c.b16 %v3823, %v3822
    %v4640 = vpack.c.b16 %v3825, %v3824
    %v4641 = vpack.c.b16 %v3827, %v3826
    %v4642 = vpack.c.b16 %v3829, %v3828
    %v4643 = vpack.c.b16 %v3831, %v3830
    %v4644 = vpack.c.b16 %v3833, %v3832
    %v4645 = vpack.c.b16 %v3835, %v3834
    %v4646 = vpack.c.b16 %v3837, %v3836
    %v4647 = vpack.c.b16 %v3839, %v3838
    %v4648 = vpack.c.b16 %v3841, %v3840
    %v4649 = vpack.c.b16 %v3843, %v3842
    %v4650 = vpack.c.b16 %v3845, %v3844
    %v4651 = vpack.c.b16 %v3847, %v3846
    %v4652 = vpack.c.b16 %v3849, %v3848
    %v4653 = vpack.c.b16 %v3851, %v3850
    %v4654 = vpack.c.b16 %v3853, %v3852
    %v4655 = vpack.c.b16 %v3855, %v3854
    %v4656 = vpack.c.b16 %v3857, %v3856
    %v4657 = vpack.c.b16 %v3859, %v3858
    %v4658 = vpack.c.b16 %v3861, %v3860
    %v4659 = vpack.c.b16 %v3863, %v3862
    %v4660 = vpack.c.b16 %v3865, %v3864
    %v4661 = vpack.c.b16 %v3867, %v3866
    %v4662 = vpack.c.b16 %v3869, %v3868
    %v4663 = vpack.c.b16 %v3871, %v3870
    %v4664 = vpack.c.b16 %v3873, %v3872
    %v4665 = vpack.c.b16 %v3875, %v3874
    %v4666 = vpack.c.b16 %v3877, %v3876
    %v4667 = vpack.c.b16 %v3879, %v3878
    %v4668 = vpack.c.b16 %v3881, %v3880
    %v4669 = vpack.c.b16 %v3883, %v3882
    %v4670 = vpack.c.b16 %v3885, %v3884
    %v4671 = vpack.c.b16 %v3887, %v3886
    %v4672 = vpack.c.b16 %v3889, %v3888
    %v4673 = vpack.c.b16 %v3891, %v3890
    %v4674 = vpack.c.b16 %v3893, %v3892
    %v4675 = vpack.c.b16 %v3895, %v3894
    %v4676 = vpack.c.b16 %v3897, %v3896
    %v4677 = vpack.c.b16 %v3899, %v3898
    %v4678 = vpack.c.b16 %v3901, %v3900
    %v4679 = vpack.c.b16 %v3903, %v3902
    %v4680 = vpack.c.b16 %v3905, %v3904
    %v4681 = vpack.c.b16 %v3907, %v3906
    %v4682 = vpack.c.b16 %v3909, %v3908
    %v4683 = vpack.c.b16 %v3911, %v3910
    %v4684 = vpack.c.b16 %v3913, %v3912
    %v4685 = vpack.c.b16 %v3915, %v3914
    %v4686 = vpack.c.b16 %v3917, %v3916
    %v4687 = vpack.c.b16 %v3919, %v3918
    %v4688 = vpack.c.b16 %v3921, %v3920
    %v4689 = vpack.c.b16 %v3923, %v3922
    %v4690 = vpack.c.b16 %v3925, %v3924
    %v4691 = vpack.c.b16 %v3927, %v3926
    %v4692 = vpack.c.b16 %v3929, %v3928
    %v4693 = vpack.c.b16 %v3931, %v3930
    %v4694 = vpack.c.b16 %v3933, %v3932
    %v4695 = vpack.c.b16 %v3935, %v3934
    %v4696 = vpack.c.b16 %v3937, %v3936
    %v4697 = vpack.c.b16 %v3939, %v3938
    %v4698 = vpack.c.b16 %v3941, %v3940
    %v4699 = vpack.c.b16 %v3943, %v3942
    %v4700 = vpack.c.b16 %v3945, %v3944
    %v4701 = vpack.c.b16 %v3947, %v3946
    %v4702 = vpack.c.b16 %v3949, %v3948
    %v4703 = vpack.c.b16 %v3951, %v3950
    %v4704 = vpack.c.b16 %v3953, %v3952
    %v4705 = vpack.c.b16 %v3955, %v3954
    %v4706 = vpack.c.b16 %v3957, %v3956
    %v4707 = vpack.c.b16 %v3959, %v3958
    %v4708 = vpack.c.b16 %v3961, %v3960
    %v4709 = vpack.c.b16 %v3963, %v3962
    %v4710 = vpack.c.b16 %v3965, %v3964
    %v4711 = vpack.c.b16 %v3967, %v3966
    %v4712 = vpack.c.b16 %v3969, %v3968
    %v4713 = vpack.c.b16 %v3971, %v3970
    %v4714 = vpack.c.b16 %v3973, %v3972
    %v4715 = vpack.c.b16 %v3975, %v3974
    %v4716 = vpack.c.b16 %v3977, %v3976
    %v4717 = vpack.c.b16 %v3979, %v3978
    %v4718 = vpack.c.b16 %v3981, %v3980
    %v4719 = vpack.c.b16 %v3983, %v3982
    %v4720 = vpack.c.b16 %v3985, %v3984
    %v4721 = vpack.c.b16 %v3987, %v3986
    %v4722 = vpack.c.b16 %v3989, %v3988
    %v4723 = vpack.c.b16 %v3991, %v3990
    %v4724 = vpack.c.b16 %v3993, %v3992
    %v4725 = vpack.c.b16 %v3995, %v3994
    %v4726 = vpack.c.b16 %v3997, %v3996
    %v4727 = vpack.c.b16 %v3999, %v3998
    %v4728 = vpack.c.b16 %v4001, %v4000
    %v4729 = vpack.c.b16 %v4003, %v4002
    %v4730 = vpack.c.b16 %v4005, %v4004
    %v4731 = vpack.c.b16 %v4007, %v4006
    %v4732 = vpack.c.b16 %v4009, %v4008
    %v4733 = vpack.c.b16 %v4011, %v4010
    %v4734 = vpack.c.b16 %v4013, %v4012
    %v4735 = vpack.c.b16 %v4015, %v4014
    %v4736 = vpack.c.b16 %v4017, %v4016
    %v4737 = vpack.c.b16 %v4019, %v4018
    %v4738 = vpack.c.b16 %v4021, %v4020
    %v4739 = vpack.c.b16 %v4023, %v4022
    %v4740 = vpack.c.b16 %v4025, %v4024
    %v4741 = vpack.c.b16 %v4027, %v4026
    %v4742 = vpack.c.b16 %v4029, %v4028
    %v4743 = vpack.c.b16 %v4031, %v4030
    %v4744 = vpack.c.b16 %v4033, %v4032
    %v4745 = vpack.c.b16 %v4035, %v4034
    %v4746 = vpack.c.b16 %v4037, %v4036
    %v4747 = vpack.c.b16 %v4039, %v4038
    %v4748 = vpack.c.b16 %v4041, %v4040
    %v4749 = vpack.c.b16 %v4043, %v4042
    %v4750 = vpack.c.b16 %v4045, %v4044
    %v4751 = vpack.c.b16 %v4047, %v4046
    %v4752 = vpack.c.b16 %v4049, %v4048
    %v4753 = vpack.c.b16 %v4051, %v4050
    %v4754 = vpack.c.b16 %v4053, %v4052
    %v4755 = vpack.c.b16 %v4055, %v4054
    %v4756 = vpack.c.b16 %v4057, %v4056
    %v4757 = vpack.c.b16 %v4059, %v4058
    %v4758 = vpack.c.b16 %v4061, %v4060
    %v4759 = vpack.c.b16 %v4063, %v4062
    %v4760 = vpack.c.b16 %v4065, %v4064
    %v4761 = vpack.c.b16 %v4067, %v4066
    %v4762 = vpack.c.b16 %v4069, %v4068
    %v4763 = vpack.c.b16 %v4071, %v4070
    %v4764 = vpack.c.b16 %v4073, %v4072
    %v4765 = vpack.c.b16 %v4075, %v4074
    %v4766 = vpack.c.b16 %v4077, %v4076
    %v4767 = vpack.c.b16 %v4079, %v4078
    %v4768 = vpack.c.b16 %v4081, %v4080
    %v4769 = vpack.c.b16 %v4083, %v4082
    %v4770 = vpack.c.b16 %v4085, %v4084
    %v4771 = vpack.c.b16 %v4087, %v4086
    %v4772 = vpack.c.b16 %v4089, %v4088
    %v4773 = vpack.c.b16 %v4091, %v4090
    %v4774 = vpack.c.b16 %v4093, %v4092
    %v4775 = vpack.c.b16 %v4095, %v4094
    %v4776 = vpack.c.b16 %v4097, %v4096
    %v4777 = vpack.c.b16 %v4099, %v4098
    %v4778 = vpack.c.b16 %v4101, %v4100
    %v4779 = vpack.c.b16 %v4103, %v4102
    %v4780 = vpack.c.b16 %v4105, %v4104
    %v4781 = vpack.c.b16 %v4107, %v4106
    %v4782 = vpack.c.b16 %v4109, %v4108
    %v4783 = vpack.c.b16 %v4111, %v4110
    %v4784 = vpack.c.b16 %v4113, %v4112
    %v4785 = vpack.c.b16 %v4115, %v4114
    %v4786 = vpack.c.b16 %v4117, %v4116
    %v4787 = vpack.c.b16 %v4119, %v4118
    %v4788 = vpack.c.b16 %v4121, %v4120
    %v4789 = vpack.c.b16 %v4123, %v4122
    %v4790 = vpack.c.b16 %v4125, %v4124
    %v4791 = vpack.c.b16 %v4127, %v4126
    %v4792 = vpack.c.b16 %v4129, %v4128
    %v4793 = vpack.c.b16 %v4131, %v4130
    %v4794 = vpack.c.b16 %v4133, %v4132
    %v4795 = vpack.c.b16 %v4135, %v4134
    %v4796 = vpack.c.b16 %v4137, %v4136
    %v4797 = vpack.c.b16 %v4139, %v4138
    %v4798 = vpack.c.b16 %v4141, %v4140
    %v4799 = vpack.c.b16 %v4143, %v4142
    %v4800 = vpack.c.b16 %v4145, %v4144
    %v4801 = vpack.c.b16 %v4147, %v4146
    %v4802 = vpack.c.b16 %v4149, %v4148
    %v4803 = vpack.c.b16 %v4151, %v4150
    %v4804 = vpack.c.b16 %v4153, %v4152
    %v4805 = vpack.c.b16 %v4155, %v4154
    %v4806 = vpack.c.b16 %v4157, %v4156
    %v4807 = vpack.c.b16 %v4159, %v4158
    %v4808 = vpack.c.b16 %v4161, %v4160
    %v4809 = vpack.c.b16 %v4163, %v4162
    %v4810 = vpack.c.b16 %v4165, %v4164
    %v4811 = vpack.c.b16 %v4167, %v4166
    %v4812 = vpack.c.b16 %v4169, %v4168
    %v4813 = vpack.c.b16 %v4171, %v4170
    %v4814 = vpack.c.b16 %v4173, %v4172
    %v4815 = vpack.c.b16 %v4175, %v4174
    %v4816 = vpack.c.b16 %v4177, %v4176
    %v4817 = vpack.c.b16 %v4179, %v4178
    %v4818 = vpack.c.b16 %v4181, %v4180
    %v4819 = vpack.c.b16 %v4183, %v4182
    %v4820 = vpack.c.b16 %v4185, %v4184
    %v4821 = vpack.c.b16 %v4187, %v4186
    %v4822 = vpack.c.b16 %v4189, %v4188
    %v4823 = vpack.c.b16 %v4191, %v4190
    %v4824 = vpack.c.b16 %v4193, %v4192
    %v4825 = vpack.c.b16 %v4195, %v4194
    %v4826 = vpack.c.b16 %v4197, %v4196
    %v4827 = vpack.c.b16 %v4199, %v4198
    %v4828 = vpack.c.b16 %v4201, %v4200
    %v4829 = vpack.c.b16 %v4203, %v4202
    %v4830 = vpack.c.b16 %v4205, %v4204
    %v4831 = vpack.c.b16 %v4207, %v4206
    %v4832 = vpack.c.b16 %v4209, %v4208
    %v4833 = vpack.c.b16 %v4211, %v4210
    %v4834 = vpack.c.b16 %v4213, %v4212
    %v4835 = vpack.c.b16 %v4215, %v4214
    %v4836 = vpack.c.b16 %v4217, %v4216
    %v4837 = vpack.c.b16 %v4219, %v4218
    %v4838 = vpack.c.b16 %v4221, %v4220
    %v4839 = vpack.c.b16 %v4223, %v4222
    %5456 = vmatprep.subr.bf16.mxu0 0
    %5457 = vmatpush1.bf16.msra.mxu0 %v4231
    %5458 = vmatprep.subr.bf16.mxu0 0
    %5459 = vmatpush1.bf16.msra.mxu0 %v4230
    %5460 = vmatprep.subr.bf16.mxu0 0
    %5461 = vmatpush1.bf16.msra.mxu0 %v4229
    %5462 = vmatprep.subr.bf16.mxu0 0
    %5463 = vmatpush1.bf16.msra.mxu0 %v4228
    %5464 = vmatprep.subr.bf16.mxu0 0
    %5465 = vmatpush1.bf16.msra.mxu0 %v4227
    %5466 = vmatprep.subr.bf16.mxu0 0
    %5467 = vmatpush1.bf16.msra.mxu0 %v4226
    %5468 = vmatprep.subr.bf16.mxu0 0
    %5469 = vmatpush1.bf16.msra.mxu0 %v4225
    %5470 = vmatprep.subr.bf16.mxu0 0
    %5471 = vmatpush1.bf16.msra.mxu0 %v4224
    %5472 = vmatprep.subr.bf16.mxu0 0
    %5473 = vmatpush2.bf16.msra.mxu0 %v4239
    %5474 = vmatprep.subr.bf16.mxu0 0
    %5475 = vmatpush2.bf16.msra.mxu0 %v4238
    %5476 = vmatprep.subr.bf16.mxu0 0
    %5477 = vmatpush2.bf16.msra.mxu0 %v4237
    %5478 = vmatprep.subr.bf16.mxu0 0
    %5479 = vmatpush2.bf16.msra.mxu0 %v4236
    %5480 = vmatprep.subr.bf16.mxu0 0
    %5481 = vmatpush2.bf16.msra.mxu0 %v4235
    %5482 = vmatprep.subr.bf16.mxu0 0
    %5483 = vmatpush2.bf16.msra.mxu0 %v4234
    %5484 = vmatprep.subr.bf16.mxu0 0
    %5485 = vmatpush2.bf16.msra.mxu0 %v4233
    %5486 = vmatprep.subr.bf16.mxu0 0
    %5487 = vmatpush2.bf16.msra.mxu0 %v4232
    %5488 = vmatprep.mubr.bf16.mxu0 %v1607
    %5489 = vmatmul.mubr.bf16.gmra.mxu0 %v1606
    %v5490 = vpop.f32.mrf.mxu0
    %v5491 = vadd.f32 %v1372, %v5490
    %v5492 = vpop.f32.mrf.mxu0
    %v5493 = vpop.f32.mrf.mxu0
    %v5494 = vadd.f32 %v1372, %v5493
    %v5495 = vpop.f32.mrf.mxu0
    %5496 = vdwg.mxu0
    %5497 = vmatprep.subr.bf16.mxu0 0
    %5498 = vmatpush1.bf16.msra.mxu0 %v4247
    %5499 = vmatprep.subr.bf16.mxu0 0
    %5500 = vmatpush1.bf16.msra.mxu0 %v4246
    %5501 = vmatprep.subr.bf16.mxu0 0
    %5502 = vmatpush1.bf16.msra.mxu0 %v4245
    %5503 = vmatprep.subr.bf16.mxu0 0
    %5504 = vmatpush1.bf16.msra.mxu0 %v4244
    %5505 = vmatprep.subr.bf16.mxu0 0
    %5506 = vmatpush1.bf16.msra.mxu0 %v4243
    %5507 = vmatprep.subr.bf16.mxu0 0
    %5508 = vmatpush1.bf16.msra.mxu0 %v4242
    %5509 = vmatprep.subr.bf16.mxu0 0
    %5510 = vmatpush1.bf16.msra.mxu0 %v4241
    %5511 = vmatprep.subr.bf16.mxu0 0
    %5512 = vmatpush1.bf16.msra.mxu0 %v4240
    %5513 = vmatprep.subr.bf16.mxu0 0
    %5514 = vmatpush2.bf16.msra.mxu0 %v4255
    %5515 = vmatprep.subr.bf16.mxu0 0
    %5516 = vmatpush2.bf16.msra.mxu0 %v4254
    %5517 = vmatprep.subr.bf16.mxu0 0
    %5518 = vmatpush2.bf16.msra.mxu0 %v4253
    %5519 = vmatprep.subr.bf16.mxu0 0
    %5520 = vmatpush2.bf16.msra.mxu0 %v4252
    %5521 = vmatprep.subr.bf16.mxu0 0
    %5522 = vmatpush2.bf16.msra.mxu0 %v4251
    %5523 = vmatprep.subr.bf16.mxu0 0
    %5524 = vmatpush2.bf16.msra.mxu0 %v4250
    %5525 = vmatprep.subr.bf16.mxu0 0
    %5526 = vmatpush2.bf16.msra.mxu0 %v4249
    %5527 = vmatprep.subr.bf16.mxu0 0
    %5528 = vmatpush2.bf16.msra.mxu0 %v4248
    %5529 = vmatprep.mubr.bf16.mxu0 %v1609
    %5530 = vmatmul.mubr.bf16.gmra.mxu0 %v1608
    %v5531 = vpop.f32.mrf.mxu0
    %v5532 = vadd.f32 %v5491, %v5531
    %v5533 = vpop.f32.mrf.mxu0
    %v5534 = vpop.f32.mrf.mxu0
    %v5535 = vadd.f32 %v5494, %v5534
    %v5536 = vpop.f32.mrf.mxu0
    %5537 = vdwg.mxu0
    %5538 = vmatprep.subr.bf16.mxu0 0
    %5539 = vmatpush1.bf16.msra.mxu0 %v4263
    %5540 = vmatprep.subr.bf16.mxu0 0
    %5541 = vmatpush1.bf16.msra.mxu0 %v4262
    %5542 = vmatprep.subr.bf16.mxu0 0
    %5543 = vmatpush1.bf16.msra.mxu0 %v4261
    %5544 = vmatprep.subr.bf16.mxu0 0
    %5545 = vmatpush1.bf16.msra.mxu0 %v4260
    %5546 = vmatprep.subr.bf16.mxu0 0
    %5547 = vmatpush1.bf16.msra.mxu0 %v4259
    %5548 = vmatprep.subr.bf16.mxu0 0
    %5549 = vmatpush1.bf16.msra.mxu0 %v4258
    %5550 = vmatprep.subr.bf16.mxu0 0
    %5551 = vmatpush1.bf16.msra.mxu0 %v4257
    %5552 = vmatprep.subr.bf16.mxu0 0
    %5553 = vmatpush1.bf16.msra.mxu0 %v4256
    %5554 = vmatprep.subr.bf16.mxu0 0
    %5555 = vmatpush2.bf16.msra.mxu0 %v4271
    %5556 = vmatprep.subr.bf16.mxu0 0
    %5557 = vmatpush2.bf16.msra.mxu0 %v4270
    %5558 = vmatprep.subr.bf16.mxu0 0
    %5559 = vmatpush2.bf16.msra.mxu0 %v4269
    %5560 = vmatprep.subr.bf16.mxu0 0
    %5561 = vmatpush2.bf16.msra.mxu0 %v4268
    %5562 = vmatprep.subr.bf16.mxu0 0
    %5563 = vmatpush2.bf16.msra.mxu0 %v4267
    %5564 = vmatprep.subr.bf16.mxu0 0
    %5565 = vmatpush2.bf16.msra.mxu0 %v4266
    %5566 = vmatprep.subr.bf16.mxu0 0
    %5567 = vmatpush2.bf16.msra.mxu0 %v4265
    %5568 = vmatprep.subr.bf16.mxu0 0
    %5569 = vmatpush2.bf16.msra.mxu0 %v4264
    %5570 = vmatprep.mubr.bf16.mxu0 %v1611
    %5571 = vmatmul.mubr.bf16.gmra.mxu0 %v1610
    %v5572 = vpop.f32.mrf.mxu0
    %v5573 = vadd.f32 %v5532, %v5572
    %v5574 = vpop.f32.mrf.mxu0
    %v5575 = vpop.f32.mrf.mxu0
    %v5576 = vadd.f32 %v5535, %v5575
    %v5577 = vpop.f32.mrf.mxu0
    %5578 = vdwg.mxu0
    %5579 = vmatprep.subr.bf16.mxu0 0
    %5580 = vmatpush1.bf16.msra.mxu0 %v4279
    %5581 = vmatprep.subr.bf16.mxu0 0
    %5582 = vmatpush1.bf16.msra.mxu0 %v4278
    %5583 = vmatprep.subr.bf16.mxu0 0
    %5584 = vmatpush1.bf16.msra.mxu0 %v4277
    %5585 = vmatprep.subr.bf16.mxu0 0
    %5586 = vmatpush1.bf16.msra.mxu0 %v4276
    %5587 = vmatprep.subr.bf16.mxu0 0
    %5588 = vmatpush1.bf16.msra.mxu0 %v4275
    %5589 = vmatprep.subr.bf16.mxu0 0
    %5590 = vmatpush1.bf16.msra.mxu0 %v4274
    %5591 = vmatprep.subr.bf16.mxu0 0
    %5592 = vmatpush1.bf16.msra.mxu0 %v4273
    %5593 = vmatprep.subr.bf16.mxu0 0
    %5594 = vmatpush1.bf16.msra.mxu0 %v4272
    %5595 = vmatprep.subr.bf16.mxu0 0
    %5596 = vmatpush2.bf16.msra.mxu0 %v4287
    %5597 = vmatprep.subr.bf16.mxu0 0
    %5598 = vmatpush2.bf16.msra.mxu0 %v4286
    %5599 = vmatprep.subr.bf16.mxu0 0
    %5600 = vmatpush2.bf16.msra.mxu0 %v4285
    %5601 = vmatprep.subr.bf16.mxu0 0
    %5602 = vmatpush2.bf16.msra.mxu0 %v4284
    %5603 = vmatprep.subr.bf16.mxu0 0
    %5604 = vmatpush2.bf16.msra.mxu0 %v4283
    %5605 = vmatprep.subr.bf16.mxu0 0
    %5606 = vmatpush2.bf16.msra.mxu0 %v4282
    %5607 = vmatprep.subr.bf16.mxu0 0
    %5608 = vmatpush2.bf16.msra.mxu0 %v4281
    %5609 = vmatprep.subr.bf16.mxu0 0
    %5610 = vmatpush2.bf16.msra.mxu0 %v4280
    %5611 = vmatprep.mubr.bf16.mxu0 %v1613
    %5612 = vmatmul.mubr.bf16.gmra.mxu0 %v1612
    %v5613 = vpop.f32.mrf.mxu0
    %v5614 = vadd.f32 %v5573, %v5613
    %v5615 = vpop.f32.mrf.mxu0
    %v5616 = vpop.f32.mrf.mxu0
    %v5617 = vadd.f32 %v5576, %v5616
    %v5618 = vpop.f32.mrf.mxu0
    %5619 = vdwg.mxu0
    %5620 = vmatprep.subr.bf16.mxu0 0
    %5621 = vmatpush1.bf16.msra.mxu0 %v4295
    %5622 = vmatprep.subr.bf16.mxu0 0
    %5623 = vmatpush1.bf16.msra.mxu0 %v4294
    %5624 = vmatprep.subr.bf16.mxu0 0
    %5625 = vmatpush1.bf16.msra.mxu0 %v4293
    %5626 = vmatprep.subr.bf16.mxu0 0
    %5627 = vmatpush1.bf16.msra.mxu0 %v4292
    %5628 = vmatprep.subr.bf16.mxu0 0
    %5629 = vmatpush1.bf16.msra.mxu0 %v4291
    %5630 = vmatprep.subr.bf16.mxu0 0
    %5631 = vmatpush1.bf16.msra.mxu0 %v4290
    %5632 = vmatprep.subr.bf16.mxu0 0
    %5633 = vmatpush1.bf16.msra.mxu0 %v4289
    %5634 = vmatprep.subr.bf16.mxu0 0
    %5635 = vmatpush1.bf16.msra.mxu0 %v4288
    %5636 = vmatprep.subr.bf16.mxu0 0
    %5637 = vmatpush2.bf16.msra.mxu0 %v4303
    %5638 = vmatprep.subr.bf16.mxu0 0
    %5639 = vmatpush2.bf16.msra.mxu0 %v4302
    %5640 = vmatprep.subr.bf16.mxu0 0
    %5641 = vmatpush2.bf16.msra.mxu0 %v4301
    %5642 = vmatprep.subr.bf16.mxu0 0
    %5643 = vmatpush2.bf16.msra.mxu0 %v4300
    %5644 = vmatprep.subr.bf16.mxu0 0
    %5645 = vmatpush2.bf16.msra.mxu0 %v4299
    %5646 = vmatprep.subr.bf16.mxu0 0
    %5647 = vmatpush2.bf16.msra.mxu0 %v4298
    %5648 = vmatprep.subr.bf16.mxu0 0
    %5649 = vmatpush2.bf16.msra.mxu0 %v4297
    %5650 = vmatprep.subr.bf16.mxu0 0
    %5651 = vmatpush2.bf16.msra.mxu0 %v4296
    %5652 = vmatprep.mubr.bf16.mxu0 %v1615
    %5653 = vmatmul.mubr.bf16.gmra.mxu0 %v1614
    %v5654 = vpop.f32.mrf.mxu0
    %v5655 = vadd.f32 %v5614, %v5654
    %v5656 = vpop.f32.mrf.mxu0
    %v5657 = vpop.f32.mrf.mxu0
    %v5658 = vadd.f32 %v5617, %v5657
    %v5659 = vpop.f32.mrf.mxu0
    %5660 = vdwg.mxu0
    %5661 = vmatprep.subr.bf16.mxu0 0
    %5662 = vmatpush1.bf16.msra.mxu0 %v4311
    %5663 = vmatprep.subr.bf16.mxu0 0
    %5664 = vmatpush1.bf16.msra.mxu0 %v4310
    %5665 = vmatprep.subr.bf16.mxu0 0
    %5666 = vmatpush1.bf16.msra.mxu0 %v4309
    %5667 = vmatprep.subr.bf16.mxu0 0
    %5668 = vmatpush1.bf16.msra.mxu0 %v4308
    %5669 = vmatprep.subr.bf16.mxu0 0
    %5670 = vmatpush1.bf16.msra.mxu0 %v4307
    %5671 = vmatprep.subr.bf16.mxu0 0
    %5672 = vmatpush1.bf16.msra.mxu0 %v4306
    %5673 = vmatprep.subr.bf16.mxu0 0
    %5674 = vmatpush1.bf16.msra.mxu0 %v4305
    %5675 = vmatprep.subr.bf16.mxu0 0
    %5676 = vmatpush1.bf16.msra.mxu0 %v4304
    %5677 = vmatprep.subr.bf16.mxu0 0
    %5678 = vmatpush2.bf16.msra.mxu0 %v4319
    %5679 = vmatprep.subr.bf16.mxu0 0
    %5680 = vmatpush2.bf16.msra.mxu0 %v4318
    %5681 = vmatprep.subr.bf16.mxu0 0
    %5682 = vmatpush2.bf16.msra.mxu0 %v4317
    %5683 = vmatprep.subr.bf16.mxu0 0
    %5684 = vmatpush2.bf16.msra.mxu0 %v4316
    %5685 = vmatprep.subr.bf16.mxu0 0
    %5686 = vmatpush2.bf16.msra.mxu0 %v4315
    %5687 = vmatprep.subr.bf16.mxu0 0
    %5688 = vmatpush2.bf16.msra.mxu0 %v4314
    %5689 = vmatprep.subr.bf16.mxu0 0
    %5690 = vmatpush2.bf16.msra.mxu0 %v4313
    %5691 = vmatprep.subr.bf16.mxu0 0
    %5692 = vmatpush2.bf16.msra.mxu0 %v4312
    %5693 = vmatprep.mubr.bf16.mxu0 %v1617
    %5694 = vmatmul.mubr.bf16.gmra.mxu0 %v1616
    %v5695 = vpop.f32.mrf.mxu0
    %v5696 = vadd.f32 %v5655, %v5695
    %v5697 = vpop.f32.mrf.mxu0
    %v5698 = vpop.f32.mrf.mxu0
    %v5699 = vadd.f32 %v5658, %v5698
    %v5700 = vpop.f32.mrf.mxu0
    %5701 = vdwg.mxu0
    %5702 = vmatprep.subr.bf16.mxu0 0
    %5703 = vmatpush1.bf16.msra.mxu0 %v4327
    %5704 = vmatprep.subr.bf16.mxu0 0
    %5705 = vmatpush1.bf16.msra.mxu0 %v4326
    %5706 = vmatprep.subr.bf16.mxu0 0
    %5707 = vmatpush1.bf16.msra.mxu0 %v4325
    %5708 = vmatprep.subr.bf16.mxu0 0
    %5709 = vmatpush1.bf16.msra.mxu0 %v4324
    %5710 = vmatprep.subr.bf16.mxu0 0
    %5711 = vmatpush1.bf16.msra.mxu0 %v4323
    %5712 = vmatprep.subr.bf16.mxu0 0
    %5713 = vmatpush1.bf16.msra.mxu0 %v4322
    %5714 = vmatprep.subr.bf16.mxu0 0
    %5715 = vmatpush1.bf16.msra.mxu0 %v4321
    %5716 = vmatprep.subr.bf16.mxu0 0
    %5717 = vmatpush1.bf16.msra.mxu0 %v4320
    %5718 = vmatprep.subr.bf16.mxu0 0
    %5719 = vmatpush2.bf16.msra.mxu0 %v4335
    %5720 = vmatprep.subr.bf16.mxu0 0
    %5721 = vmatpush2.bf16.msra.mxu0 %v4334
    %5722 = vmatprep.subr.bf16.mxu0 0
    %5723 = vmatpush2.bf16.msra.mxu0 %v4333
    %5724 = vmatprep.subr.bf16.mxu0 0
    %5725 = vmatpush2.bf16.msra.mxu0 %v4332
    %5726 = vmatprep.subr.bf16.mxu0 0
    %5727 = vmatpush2.bf16.msra.mxu0 %v4331
    %5728 = vmatprep.subr.bf16.mxu0 0
    %5729 = vmatpush2.bf16.msra.mxu0 %v4330
    %5730 = vmatprep.subr.bf16.mxu0 0
    %5731 = vmatpush2.bf16.msra.mxu0 %v4329
    %5732 = vmatprep.subr.bf16.mxu0 0
    %5733 = vmatpush2.bf16.msra.mxu0 %v4328
    %5734 = vmatprep.mubr.bf16.mxu0 %v1619
    %5735 = vmatmul.mubr.bf16.gmra.mxu0 %v1618
    %v5736 = vpop.f32.mrf.mxu0
    %v5737 = vadd.f32 %v5696, %v5736
    %v5738 = vpop.f32.mrf.mxu0
    %v5739 = vpop.f32.mrf.mxu0
    %v5740 = vadd.f32 %v5699, %v5739
    %v5741 = vpop.f32.mrf.mxu0
    %5742 = vdwg.mxu0
    %5743 = vmatprep.subr.bf16.mxu0 0
    %5744 = vmatpush1.bf16.msra.mxu0 %v4343
    %5745 = vmatprep.subr.bf16.mxu0 0
    %5746 = vmatpush1.bf16.msra.mxu0 %v4342
    %5747 = vmatprep.subr.bf16.mxu0 0
    %5748 = vmatpush1.bf16.msra.mxu0 %v4341
    %5749 = vmatprep.subr.bf16.mxu0 0
    %5750 = vmatpush1.bf16.msra.mxu0 %v4340
    %5751 = vmatprep.subr.bf16.mxu0 0
    %5752 = vmatpush1.bf16.msra.mxu0 %v4339
    %5753 = vmatprep.subr.bf16.mxu0 0
    %5754 = vmatpush1.bf16.msra.mxu0 %v4338
    %5755 = vmatprep.subr.bf16.mxu0 0
    %5756 = vmatpush1.bf16.msra.mxu0 %v4337
    %5757 = vmatprep.subr.bf16.mxu0 0
    %5758 = vmatpush1.bf16.msra.mxu0 %v4336
    %5759 = vmatprep.subr.bf16.mxu0 0
    %5760 = vmatpush2.bf16.msra.mxu0 %v4351
    %5761 = vmatprep.subr.bf16.mxu0 0
    %5762 = vmatpush2.bf16.msra.mxu0 %v4350
    %5763 = vmatprep.subr.bf16.mxu0 0
    %5764 = vmatpush2.bf16.msra.mxu0 %v4349
    %5765 = vmatprep.subr.bf16.mxu0 0
    %5766 = vmatpush2.bf16.msra.mxu0 %v4348
    %5767 = vmatprep.subr.bf16.mxu0 0
    %5768 = vmatpush2.bf16.msra.mxu0 %v4347
    %5769 = vmatprep.subr.bf16.mxu0 0
    %5770 = vmatpush2.bf16.msra.mxu0 %v4346
    %5771 = vmatprep.subr.bf16.mxu0 0
    %5772 = vmatpush2.bf16.msra.mxu0 %v4345
    %5773 = vmatprep.subr.bf16.mxu0 0
    %5774 = vmatpush2.bf16.msra.mxu0 %v4344
    %5775 = vmatprep.mubr.bf16.mxu0 %v1621
    %5776 = vmatmul.mubr.bf16.gmra.mxu0 %v1620
    %v5777 = vpop.f32.mrf.mxu0
    %v5778 = vadd.f32 %v5737, %v5777
    %v5779 = vpop.f32.mrf.mxu0
    %v5780 = vpop.f32.mrf.mxu0
    %v5781 = vadd.f32 %v5740, %v5780
    %v5782 = vpop.f32.mrf.mxu0
    %5783 = vdwg.mxu0
    %5784 = vmatprep.subr.bf16.mxu0 0
    %5785 = vmatpush1.bf16.msra.mxu0 %v4359
    %5786 = vmatprep.subr.bf16.mxu0 0
    %5787 = vmatpush1.bf16.msra.mxu0 %v4358
    %5788 = vmatprep.subr.bf16.mxu0 0
    %5789 = vmatpush1.bf16.msra.mxu0 %v4357
    %5790 = vmatprep.subr.bf16.mxu0 0
    %5791 = vmatpush1.bf16.msra.mxu0 %v4356
    %5792 = vmatprep.subr.bf16.mxu0 0
    %5793 = vmatpush1.bf16.msra.mxu0 %v4355
    %5794 = vmatprep.subr.bf16.mxu0 0
    %5795 = vmatpush1.bf16.msra.mxu0 %v4354
    %5796 = vmatprep.subr.bf16.mxu0 0
    %5797 = vmatpush1.bf16.msra.mxu0 %v4353
    %5798 = vmatprep.subr.bf16.mxu0 0
    %5799 = vmatpush1.bf16.msra.mxu0 %v4352
    %5800 = vmatprep.subr.bf16.mxu0 0
    %5801 = vmatpush2.bf16.msra.mxu0 %v4367
    %5802 = vmatprep.subr.bf16.mxu0 0
    %5803 = vmatpush2.bf16.msra.mxu0 %v4366
    %5804 = vmatprep.subr.bf16.mxu0 0
    %5805 = vmatpush2.bf16.msra.mxu0 %v4365
    %5806 = vmatprep.subr.bf16.mxu0 0
    %5807 = vmatpush2.bf16.msra.mxu0 %v4364
    %5808 = vmatprep.subr.bf16.mxu0 0
    %5809 = vmatpush2.bf16.msra.mxu0 %v4363
    %5810 = vmatprep.subr.bf16.mxu0 0
    %5811 = vmatpush2.bf16.msra.mxu0 %v4362
    %5812 = vmatprep.subr.bf16.mxu0 0
    %5813 = vmatpush2.bf16.msra.mxu0 %v4361
    %5814 = vmatprep.subr.bf16.mxu0 0
    %5815 = vmatpush2.bf16.msra.mxu0 %v4360
    %5816 = vmatprep.mubr.bf16.mxu0 %v1623
    %5817 = vmatmul.mubr.bf16.gmra.mxu0 %v1622
    %v5818 = vpop.f32.mrf.mxu0
    %v5819 = vadd.f32 %v5778, %v5818
    %v5820 = vpop.f32.mrf.mxu0
    %v5821 = vpop.f32.mrf.mxu0
    %v5822 = vadd.f32 %v5781, %v5821
    %v5823 = vpop.f32.mrf.mxu0
    %5824 = vdwg.mxu0
    %5825 = vmatprep.subr.bf16.mxu0 0
    %5826 = vmatpush1.bf16.msra.mxu0 %v4375
    %5827 = vmatprep.subr.bf16.mxu0 0
    %5828 = vmatpush1.bf16.msra.mxu0 %v4374
    %5829 = vmatprep.subr.bf16.mxu0 0
    %5830 = vmatpush1.bf16.msra.mxu0 %v4373
    %5831 = vmatprep.subr.bf16.mxu0 0
    %5832 = vmatpush1.bf16.msra.mxu0 %v4372
    %5833 = vmatprep.subr.bf16.mxu0 0
    %5834 = vmatpush1.bf16.msra.mxu0 %v4371
    %5835 = vmatprep.subr.bf16.mxu0 0
    %5836 = vmatpush1.bf16.msra.mxu0 %v4370
    %5837 = vmatprep.subr.bf16.mxu0 0
    %5838 = vmatpush1.bf16.msra.mxu0 %v4369
    %5839 = vmatprep.subr.bf16.mxu0 0
    %5840 = vmatpush1.bf16.msra.mxu0 %v4368
    %5841 = vmatprep.subr.bf16.mxu0 0
    %5842 = vmatpush2.bf16.msra.mxu0 %v4383
    %5843 = vmatprep.subr.bf16.mxu0 0
    %5844 = vmatpush2.bf16.msra.mxu0 %v4382
    %5845 = vmatprep.subr.bf16.mxu0 0
    %5846 = vmatpush2.bf16.msra.mxu0 %v4381
    %5847 = vmatprep.subr.bf16.mxu0 0
    %5848 = vmatpush2.bf16.msra.mxu0 %v4380
    %5849 = vmatprep.subr.bf16.mxu0 0
    %5850 = vmatpush2.bf16.msra.mxu0 %v4379
    %5851 = vmatprep.subr.bf16.mxu0 0
    %5852 = vmatpush2.bf16.msra.mxu0 %v4378
    %5853 = vmatprep.subr.bf16.mxu0 0
    %5854 = vmatpush2.bf16.msra.mxu0 %v4377
    %5855 = vmatprep.subr.bf16.mxu0 0
    %5856 = vmatpush2.bf16.msra.mxu0 %v4376
    %5857 = vmatprep.mubr.bf16.mxu0 %v1625
    %5858 = vmatmul.mubr.bf16.gmra.mxu0 %v1624
    %v5859 = vpop.f32.mrf.mxu0
    %v5860 = vadd.f32 %v5819, %v5859
    %v5861 = vpop.f32.mrf.mxu0
    %v5862 = vpop.f32.mrf.mxu0
    %v5863 = vadd.f32 %v5822, %v5862
    %v5864 = vpop.f32.mrf.mxu0
    %5865 = vdwg.mxu0
    %5866 = vmatprep.subr.bf16.mxu0 0
    %5867 = vmatpush1.bf16.msra.mxu0 %v4391
    %5868 = vmatprep.subr.bf16.mxu0 0
    %5869 = vmatpush1.bf16.msra.mxu0 %v4390
    %5870 = vmatprep.subr.bf16.mxu0 0
    %5871 = vmatpush1.bf16.msra.mxu0 %v4389
    %5872 = vmatprep.subr.bf16.mxu0 0
    %5873 = vmatpush1.bf16.msra.mxu0 %v4388
    %5874 = vmatprep.subr.bf16.mxu0 0
    %5875 = vmatpush1.bf16.msra.mxu0 %v4387
    %5876 = vmatprep.subr.bf16.mxu0 0
    %5877 = vmatpush1.bf16.msra.mxu0 %v4386
    %5878 = vmatprep.subr.bf16.mxu0 0
    %5879 = vmatpush1.bf16.msra.mxu0 %v4385
    %5880 = vmatprep.subr.bf16.mxu0 0
    %5881 = vmatpush1.bf16.msra.mxu0 %v4384
    %5882 = vmatprep.subr.bf16.mxu0 0
    %5883 = vmatpush2.bf16.msra.mxu0 %v4399
    %5884 = vmatprep.subr.bf16.mxu0 0
    %5885 = vmatpush2.bf16.msra.mxu0 %v4398
    %5886 = vmatprep.subr.bf16.mxu0 0
    %5887 = vmatpush2.bf16.msra.mxu0 %v4397
    %5888 = vmatprep.subr.bf16.mxu0 0
    %5889 = vmatpush2.bf16.msra.mxu0 %v4396
    %5890 = vmatprep.subr.bf16.mxu0 0
    %5891 = vmatpush2.bf16.msra.mxu0 %v4395
    %5892 = vmatprep.subr.bf16.mxu0 0
    %5893 = vmatpush2.bf16.msra.mxu0 %v4394
    %5894 = vmatprep.subr.bf16.mxu0 0
    %5895 = vmatpush2.bf16.msra.mxu0 %v4393
    %5896 = vmatprep.subr.bf16.mxu0 0
    %5897 = vmatpush2.bf16.msra.mxu0 %v4392
    %5898 = vmatprep.mubr.bf16.mxu0 %v1627
    %5899 = vmatmul.mubr.bf16.gmra.mxu0 %v1626
    %v5900 = vpop.f32.mrf.mxu0
    %v5901 = vadd.f32 %v5860, %v5900
    %v5902 = vpop.f32.mrf.mxu0
    %v5903 = vpop.f32.mrf.mxu0
    %v5904 = vadd.f32 %v5863, %v5903
    %v5905 = vpop.f32.mrf.mxu0
    %5906 = vdwg.mxu0
    %5907 = vmatprep.subr.bf16.mxu0 0
    %5908 = vmatpush1.bf16.msra.mxu0 %v4407
    %5909 = vmatprep.subr.bf16.mxu0 0
    %5910 = vmatpush1.bf16.msra.mxu0 %v4406
    %5911 = vmatprep.subr.bf16.mxu0 0
    %5912 = vmatpush1.bf16.msra.mxu0 %v4405
    %5913 = vmatprep.subr.bf16.mxu0 0
    %5914 = vmatpush1.bf16.msra.mxu0 %v4404
    %5915 = vmatprep.subr.bf16.mxu0 0
    %5916 = vmatpush1.bf16.msra.mxu0 %v4403
    %5917 = vmatprep.subr.bf16.mxu0 0
    %5918 = vmatpush1.bf16.msra.mxu0 %v4402
    %5919 = vmatprep.subr.bf16.mxu0 0
    %5920 = vmatpush1.bf16.msra.mxu0 %v4401
    %5921 = vmatprep.subr.bf16.mxu0 0
    %5922 = vmatpush1.bf16.msra.mxu0 %v4400
    %5923 = vmatprep.subr.bf16.mxu0 0
    %5924 = vmatpush2.bf16.msra.mxu0 %v4415
    %5925 = vmatprep.subr.bf16.mxu0 0
    %5926 = vmatpush2.bf16.msra.mxu0 %v4414
    %5927 = vmatprep.subr.bf16.mxu0 0
    %5928 = vmatpush2.bf16.msra.mxu0 %v4413
    %5929 = vmatprep.subr.bf16.mxu0 0
    %5930 = vmatpush2.bf16.msra.mxu0 %v4412
    %5931 = vmatprep.subr.bf16.mxu0 0
    %5932 = vmatpush2.bf16.msra.mxu0 %v4411
    %5933 = vmatprep.subr.bf16.mxu0 0
    %5934 = vmatpush2.bf16.msra.mxu0 %v4410
    %5935 = vmatprep.subr.bf16.mxu0 0
    %5936 = vmatpush2.bf16.msra.mxu0 %v4409
    %5937 = vmatprep.subr.bf16.mxu0 0
    %5938 = vmatpush2.bf16.msra.mxu0 %v4408
    %5939 = vmatprep.mubr.bf16.mxu0 %v1629
    %5940 = vmatmul.mubr.bf16.gmra.mxu0 %v1628
    %v5941 = vpop.f32.mrf.mxu0
    %v5942 = vadd.f32 %v5901, %v5941
    %v5943 = vpop.f32.mrf.mxu0
    %v5944 = vpop.f32.mrf.mxu0
    %v5945 = vadd.f32 %v5904, %v5944
    %v5946 = vpop.f32.mrf.mxu0
    %5947 = vdwg.mxu0
    %5948 = vmatprep.subr.bf16.mxu0 0
    %5949 = vmatpush1.bf16.msra.mxu0 %v4423
    %5950 = vmatprep.subr.bf16.mxu0 0
    %5951 = vmatpush1.bf16.msra.mxu0 %v4422
    %5952 = vmatprep.subr.bf16.mxu0 0
    %5953 = vmatpush1.bf16.msra.mxu0 %v4421
    %5954 = vmatprep.subr.bf16.mxu0 0
    %5955 = vmatpush1.bf16.msra.mxu0 %v4420
    %5956 = vmatprep.subr.bf16.mxu0 0
    %5957 = vmatpush1.bf16.msra.mxu0 %v4419
    %5958 = vmatprep.subr.bf16.mxu0 0
    %5959 = vmatpush1.bf16.msra.mxu0 %v4418
    %5960 = vmatprep.subr.bf16.mxu0 0
    %5961 = vmatpush1.bf16.msra.mxu0 %v4417
    %5962 = vmatprep.subr.bf16.mxu0 0
    %5963 = vmatpush1.bf16.msra.mxu0 %v4416
    %5964 = vmatprep.subr.bf16.mxu0 0
    %5965 = vmatpush2.bf16.msra.mxu0 %v4431
    %5966 = vmatprep.subr.bf16.mxu0 0
    %5967 = vmatpush2.bf16.msra.mxu0 %v4430
    %5968 = vmatprep.subr.bf16.mxu0 0
    %5969 = vmatpush2.bf16.msra.mxu0 %v4429
    %5970 = vmatprep.subr.bf16.mxu0 0
    %5971 = vmatpush2.bf16.msra.mxu0 %v4428
    %5972 = vmatprep.subr.bf16.mxu0 0
    %5973 = vmatpush2.bf16.msra.mxu0 %v4427
    %5974 = vmatprep.subr.bf16.mxu0 0
    %5975 = vmatpush2.bf16.msra.mxu0 %v4426
    %5976 = vmatprep.subr.bf16.mxu0 0
    %5977 = vmatpush2.bf16.msra.mxu0 %v4425
    %5978 = vmatprep.subr.bf16.mxu0 0
    %5979 = vmatpush2.bf16.msra.mxu0 %v4424
    %5980 = vmatprep.mubr.bf16.mxu0 %v1631
    %5981 = vmatmul.mubr.bf16.gmra.mxu0 %v1630
    %v5982 = vpop.f32.mrf.mxu0
    %v5983 = vadd.f32 %v5942, %v5982
    %v5984 = vpop.f32.mrf.mxu0
    %v5985 = vpop.f32.mrf.mxu0
    %v5986 = vadd.f32 %v5945, %v5985
    %v5987 = vpop.f32.mrf.mxu0
    %5988 = vdwg.mxu0
    %5989 = vmatprep.subr.bf16.mxu0 0
    %5990 = vmatpush1.bf16.msra.mxu0 %v4439
    %5991 = vmatprep.subr.bf16.mxu0 0
    %5992 = vmatpush1.bf16.msra.mxu0 %v4438
    %5993 = vmatprep.subr.bf16.mxu0 0
    %5994 = vmatpush1.bf16.msra.mxu0 %v4437
    %5995 = vmatprep.subr.bf16.mxu0 0
    %5996 = vmatpush1.bf16.msra.mxu0 %v4436
    %5997 = vmatprep.subr.bf16.mxu0 0
    %5998 = vmatpush1.bf16.msra.mxu0 %v4435
    %5999 = vmatprep.subr.bf16.mxu0 0
    %6000 = vmatpush1.bf16.msra.mxu0 %v4434
    %6001 = vmatprep.subr.bf16.mxu0 0
    %6002 = vmatpush1.bf16.msra.mxu0 %v4433
    %6003 = vmatprep.subr.bf16.mxu0 0
    %6004 = vmatpush1.bf16.msra.mxu0 %v4432
    %6005 = vmatprep.subr.bf16.mxu0 0
    %6006 = vmatpush2.bf16.msra.mxu0 %v4447
    %6007 = vmatprep.subr.bf16.mxu0 0
    %6008 = vmatpush2.bf16.msra.mxu0 %v4446
    %6009 = vmatprep.subr.bf16.mxu0 0
    %6010 = vmatpush2.bf16.msra.mxu0 %v4445
    %6011 = vmatprep.subr.bf16.mxu0 0
    %6012 = vmatpush2.bf16.msra.mxu0 %v4444
    %6013 = vmatprep.subr.bf16.mxu0 0
    %6014 = vmatpush2.bf16.msra.mxu0 %v4443
    %6015 = vmatprep.subr.bf16.mxu0 0
    %6016 = vmatpush2.bf16.msra.mxu0 %v4442
    %6017 = vmatprep.subr.bf16.mxu0 0
    %6018 = vmatpush2.bf16.msra.mxu0 %v4441
    %6019 = vmatprep.subr.bf16.mxu0 0
    %6020 = vmatpush2.bf16.msra.mxu0 %v4440
    %6021 = vmatprep.mubr.bf16.mxu0 %v1633
    %6022 = vmatmul.mubr.bf16.gmra.mxu0 %v1632
    %v6023 = vpop.f32.mrf.mxu0
    %v6024 = vadd.f32 %v5983, %v6023
    %v6025 = vpop.f32.mrf.mxu0
    %v6026 = vpop.f32.mrf.mxu0
    %v6027 = vadd.f32 %v5986, %v6026
    %v6028 = vpop.f32.mrf.mxu0
    %6029 = vdwg.mxu0
    %6030 = vmatprep.subr.bf16.mxu0 0
    %6031 = vmatpush1.bf16.msra.mxu0 %v4455
    %6032 = vmatprep.subr.bf16.mxu0 0
    %6033 = vmatpush1.bf16.msra.mxu0 %v4454
    %6034 = vmatprep.subr.bf16.mxu0 0
    %6035 = vmatpush1.bf16.msra.mxu0 %v4453
    %6036 = vmatprep.subr.bf16.mxu0 0
    %6037 = vmatpush1.bf16.msra.mxu0 %v4452
    %6038 = vmatprep.subr.bf16.mxu0 0
    %6039 = vmatpush1.bf16.msra.mxu0 %v4451
    %6040 = vmatprep.subr.bf16.mxu0 0
    %6041 = vmatpush1.bf16.msra.mxu0 %v4450
    %6042 = vmatprep.subr.bf16.mxu0 0
    %6043 = vmatpush1.bf16.msra.mxu0 %v4449
    %6044 = vmatprep.subr.bf16.mxu0 0
    %6045 = vmatpush1.bf16.msra.mxu0 %v4448
    %6046 = vmatprep.subr.bf16.mxu0 0
    %6047 = vmatpush2.bf16.msra.mxu0 %v4463
    %6048 = vmatprep.subr.bf16.mxu0 0
    %6049 = vmatpush2.bf16.msra.mxu0 %v4462
    %6050 = vmatprep.subr.bf16.mxu0 0
    %6051 = vmatpush2.bf16.msra.mxu0 %v4461
    %6052 = vmatprep.subr.bf16.mxu0 0
    %6053 = vmatpush2.bf16.msra.mxu0 %v4460
    %6054 = vmatprep.subr.bf16.mxu0 0
    %6055 = vmatpush2.bf16.msra.mxu0 %v4459
    %6056 = vmatprep.subr.bf16.mxu0 0
    %6057 = vmatpush2.bf16.msra.mxu0 %v4458
    %6058 = vmatprep.subr.bf16.mxu0 0
    %6059 = vmatpush2.bf16.msra.mxu0 %v4457
    %6060 = vmatprep.subr.bf16.mxu0 0
    %6061 = vmatpush2.bf16.msra.mxu0 %v4456
    %6062 = vmatprep.mubr.bf16.mxu0 %v1635
    %6063 = vmatmul.mubr.bf16.gmra.mxu0 %v1634
    %v6064 = vpop.f32.mrf.mxu0
    %v6065 = vadd.f32 %v6024, %v6064
    %v6066 = vpop.f32.mrf.mxu0
    %v6067 = vpop.f32.mrf.mxu0
    %v6068 = vadd.f32 %v6027, %v6067
    %v6069 = vpop.f32.mrf.mxu0
    %6070 = vdwg.mxu0
    %6071 = vmatprep.subr.bf16.mxu0 0
    %6072 = vmatpush1.bf16.msra.mxu0 %v4471
    %6073 = vmatprep.subr.bf16.mxu0 0
    %6074 = vmatpush1.bf16.msra.mxu0 %v4470
    %6075 = vmatprep.subr.bf16.mxu0 0
    %6076 = vmatpush1.bf16.msra.mxu0 %v4469
    %6077 = vmatprep.subr.bf16.mxu0 0
    %6078 = vmatpush1.bf16.msra.mxu0 %v4468
    %6079 = vmatprep.subr.bf16.mxu0 0
    %6080 = vmatpush1.bf16.msra.mxu0 %v4467
    %6081 = vmatprep.subr.bf16.mxu0 0
    %6082 = vmatpush1.bf16.msra.mxu0 %v4466
    %6083 = vmatprep.subr.bf16.mxu0 0
    %6084 = vmatpush1.bf16.msra.mxu0 %v4465
    %6085 = vmatprep.subr.bf16.mxu0 0
    %6086 = vmatpush1.bf16.msra.mxu0 %v4464
    %6087 = vmatprep.subr.bf16.mxu0 0
    %6088 = vmatpush2.bf16.msra.mxu0 %v4479
    %6089 = vmatprep.subr.bf16.mxu0 0
    %6090 = vmatpush2.bf16.msra.mxu0 %v4478
    %6091 = vmatprep.subr.bf16.mxu0 0
    %6092 = vmatpush2.bf16.msra.mxu0 %v4477
    %6093 = vmatprep.subr.bf16.mxu0 0
    %6094 = vmatpush2.bf16.msra.mxu0 %v4476
    %6095 = vmatprep.subr.bf16.mxu0 0
    %6096 = vmatpush2.bf16.msra.mxu0 %v4475
    %6097 = vmatprep.subr.bf16.mxu0 0
    %6098 = vmatpush2.bf16.msra.mxu0 %v4474
    %6099 = vmatprep.subr.bf16.mxu0 0
    %6100 = vmatpush2.bf16.msra.mxu0 %v4473
    %6101 = vmatprep.subr.bf16.mxu0 0
    %6102 = vmatpush2.bf16.msra.mxu0 %v4472
    %6103 = vmatprep.mubr.bf16.mxu0 %v1637
    %6104 = vmatmul.mubr.bf16.gmra.mxu0 %v1636
    %v6105 = vpop.f32.mrf.mxu0
    %v6106 = vadd.f32 %v6065, %v6105
    %v6107 = vpop.f32.mrf.mxu0
    %v6108 = vpop.f32.mrf.mxu0
    %v6109 = vadd.f32 %v6068, %v6108
    %v6110 = vpop.f32.mrf.mxu0
    %6111 = vdwg.mxu0
    %6112 = vmatprep.subr.bf16.mxu0 0
    %6113 = vmatpush1.bf16.msra.mxu0 %v4487
    %6114 = vmatprep.subr.bf16.mxu0 0
    %6115 = vmatpush1.bf16.msra.mxu0 %v4486
    %6116 = vmatprep.subr.bf16.mxu0 0
    %6117 = vmatpush1.bf16.msra.mxu0 %v4485
    %6118 = vmatprep.subr.bf16.mxu0 0
    %6119 = vmatpush1.bf16.msra.mxu0 %v4484
    %6120 = vmatprep.subr.bf16.mxu0 0
    %6121 = vmatpush1.bf16.msra.mxu0 %v4483
    %6122 = vmatprep.subr.bf16.mxu0 0
    %6123 = vmatpush1.bf16.msra.mxu0 %v4482
    %6124 = vmatprep.subr.bf16.mxu0 0
    %6125 = vmatpush1.bf16.msra.mxu0 %v4481
    %6126 = vmatprep.subr.bf16.mxu0 0
    %6127 = vmatpush1.bf16.msra.mxu0 %v4480
    %6128 = vmatprep.subr.bf16.mxu0 0
    %6129 = vmatpush2.bf16.msra.mxu0 %v4495
    %6130 = vmatprep.subr.bf16.mxu0 0
    %6131 = vmatpush2.bf16.msra.mxu0 %v4494
    %6132 = vmatprep.subr.bf16.mxu0 0
    %6133 = vmatpush2.bf16.msra.mxu0 %v4493
    %6134 = vmatprep.subr.bf16.mxu0 0
    %6135 = vmatpush2.bf16.msra.mxu0 %v4492
    %6136 = vmatprep.subr.bf16.mxu0 0
    %6137 = vmatpush2.bf16.msra.mxu0 %v4491
    %6138 = vmatprep.subr.bf16.mxu0 0
    %6139 = vmatpush2.bf16.msra.mxu0 %v4490
    %6140 = vmatprep.subr.bf16.mxu0 0
    %6141 = vmatpush2.bf16.msra.mxu0 %v4489
    %6142 = vmatprep.subr.bf16.mxu0 0
    %6143 = vmatpush2.bf16.msra.mxu0 %v4488
    %6144 = vmatprep.mubr.bf16.mxu0 %v1639
    %6145 = vmatmul.mubr.bf16.gmra.mxu0 %v1638
    %v6146 = vpop.f32.mrf.mxu0
    %v6147 = vadd.f32 %v6106, %v6146
    %v6148 = vpop.f32.mrf.mxu0
    %v6149 = vpop.f32.mrf.mxu0
    %v6150 = vadd.f32 %v6109, %v6149
    %v6151 = vpop.f32.mrf.mxu0
    %6152 = vdwg.mxu0
    %6153 = vmatprep.subr.bf16.mxu0 0
    %6154 = vmatpush1.bf16.msra.mxu0 %v4503
    %6155 = vmatprep.subr.bf16.mxu0 0
    %6156 = vmatpush1.bf16.msra.mxu0 %v4502
    %6157 = vmatprep.subr.bf16.mxu0 0
    %6158 = vmatpush1.bf16.msra.mxu0 %v4501
    %6159 = vmatprep.subr.bf16.mxu0 0
    %6160 = vmatpush1.bf16.msra.mxu0 %v4500
    %6161 = vmatprep.subr.bf16.mxu0 0
    %6162 = vmatpush1.bf16.msra.mxu0 %v4499
    %6163 = vmatprep.subr.bf16.mxu0 0
    %6164 = vmatpush1.bf16.msra.mxu0 %v4498
    %6165 = vmatprep.subr.bf16.mxu0 0
    %6166 = vmatpush1.bf16.msra.mxu0 %v4497
    %6167 = vmatprep.subr.bf16.mxu0 0
    %6168 = vmatpush1.bf16.msra.mxu0 %v4496
    %6169 = vmatprep.subr.bf16.mxu0 0
    %6170 = vmatpush2.bf16.msra.mxu0 %v4511
    %6171 = vmatprep.subr.bf16.mxu0 0
    %6172 = vmatpush2.bf16.msra.mxu0 %v4510
    %6173 = vmatprep.subr.bf16.mxu0 0
    %6174 = vmatpush2.bf16.msra.mxu0 %v4509
    %6175 = vmatprep.subr.bf16.mxu0 0
    %6176 = vmatpush2.bf16.msra.mxu0 %v4508
    %6177 = vmatprep.subr.bf16.mxu0 0
    %6178 = vmatpush2.bf16.msra.mxu0 %v4507
    %6179 = vmatprep.subr.bf16.mxu0 0
    %6180 = vmatpush2.bf16.msra.mxu0 %v4506
    %6181 = vmatprep.subr.bf16.mxu0 0
    %6182 = vmatpush2.bf16.msra.mxu0 %v4505
    %6183 = vmatprep.subr.bf16.mxu0 0
    %6184 = vmatpush2.bf16.msra.mxu0 %v4504
    %6185 = vmatprep.mubr.bf16.mxu0 %v1641
    %6186 = vmatmul.mubr.bf16.gmra.mxu0 %v1640
    %v6187 = vpop.f32.mrf.mxu0
    %v6188 = vadd.f32 %v6147, %v6187
    %v6189 = vpop.f32.mrf.mxu0
    %v6190 = vpop.f32.mrf.mxu0
    %v6191 = vadd.f32 %v6150, %v6190
    %v6192 = vpop.f32.mrf.mxu0
    %6193 = vdwg.mxu0
    %6194 = vmatprep.subr.bf16.mxu0 0
    %6195 = vmatpush1.bf16.msra.mxu0 %v4519
    %6196 = vmatprep.subr.bf16.mxu0 0
    %6197 = vmatpush1.bf16.msra.mxu0 %v4518
    %6198 = vmatprep.subr.bf16.mxu0 0
    %6199 = vmatpush1.bf16.msra.mxu0 %v4517
    %6200 = vmatprep.subr.bf16.mxu0 0
    %6201 = vmatpush1.bf16.msra.mxu0 %v4516
    %6202 = vmatprep.subr.bf16.mxu0 0
    %6203 = vmatpush1.bf16.msra.mxu0 %v4515
    %6204 = vmatprep.subr.bf16.mxu0 0
    %6205 = vmatpush1.bf16.msra.mxu0 %v4514
    %6206 = vmatprep.subr.bf16.mxu0 0
    %6207 = vmatpush1.bf16.msra.mxu0 %v4513
    %6208 = vmatprep.subr.bf16.mxu0 0
    %6209 = vmatpush1.bf16.msra.mxu0 %v4512
    %6210 = vmatprep.subr.bf16.mxu0 0
    %6211 = vmatpush2.bf16.msra.mxu0 %v4527
    %6212 = vmatprep.subr.bf16.mxu0 0
    %6213 = vmatpush2.bf16.msra.mxu0 %v4526
    %6214 = vmatprep.subr.bf16.mxu0 0
    %6215 = vmatpush2.bf16.msra.mxu0 %v4525
    %6216 = vmatprep.subr.bf16.mxu0 0
    %6217 = vmatpush2.bf16.msra.mxu0 %v4524
    %6218 = vmatprep.subr.bf16.mxu0 0
    %6219 = vmatpush2.bf16.msra.mxu0 %v4523
    %6220 = vmatprep.subr.bf16.mxu0 0
    %6221 = vmatpush2.bf16.msra.mxu0 %v4522
    %6222 = vmatprep.subr.bf16.mxu0 0
    %6223 = vmatpush2.bf16.msra.mxu0 %v4521
    %6224 = vmatprep.subr.bf16.mxu0 0
    %6225 = vmatpush2.bf16.msra.mxu0 %v4520
    %6226 = vmatprep.mubr.bf16.mxu0 %v1643
    %6227 = vmatmul.mubr.bf16.gmra.mxu0 %v1642
    %v6228 = vpop.f32.mrf.mxu0
    %v6229 = vadd.f32 %v6188, %v6228
    %v6230 = vpop.f32.mrf.mxu0
    %v6231 = vpop.f32.mrf.mxu0
    %v6232 = vadd.f32 %v6191, %v6231
    %v6233 = vpop.f32.mrf.mxu0
    %6234 = vdwg.mxu0
    %6235 = vmatprep.subr.bf16.mxu0 0
    %6236 = vmatpush1.bf16.msra.mxu0 %v4535
    %6237 = vmatprep.subr.bf16.mxu0 0
    %6238 = vmatpush1.bf16.msra.mxu0 %v4534
    %6239 = vmatprep.subr.bf16.mxu0 0
    %6240 = vmatpush1.bf16.msra.mxu0 %v4533
    %6241 = vmatprep.subr.bf16.mxu0 0
    %6242 = vmatpush1.bf16.msra.mxu0 %v4532
    %6243 = vmatprep.subr.bf16.mxu0 0
    %6244 = vmatpush1.bf16.msra.mxu0 %v4531
    %6245 = vmatprep.subr.bf16.mxu0 0
    %6246 = vmatpush1.bf16.msra.mxu0 %v4530
    %6247 = vmatprep.subr.bf16.mxu0 0
    %6248 = vmatpush1.bf16.msra.mxu0 %v4529
    %6249 = vmatprep.subr.bf16.mxu0 0
    %6250 = vmatpush1.bf16.msra.mxu0 %v4528
    %6251 = vmatprep.subr.bf16.mxu0 0
    %6252 = vmatpush2.bf16.msra.mxu0 %v4543
    %6253 = vmatprep.subr.bf16.mxu0 0
    %6254 = vmatpush2.bf16.msra.mxu0 %v4542
    %6255 = vmatprep.subr.bf16.mxu0 0
    %6256 = vmatpush2.bf16.msra.mxu0 %v4541
    %6257 = vmatprep.subr.bf16.mxu0 0
    %6258 = vmatpush2.bf16.msra.mxu0 %v4540
    %6259 = vmatprep.subr.bf16.mxu0 0
    %6260 = vmatpush2.bf16.msra.mxu0 %v4539
    %6261 = vmatprep.subr.bf16.mxu0 0
    %6262 = vmatpush2.bf16.msra.mxu0 %v4538
    %6263 = vmatprep.subr.bf16.mxu0 0
    %6264 = vmatpush2.bf16.msra.mxu0 %v4537
    %6265 = vmatprep.subr.bf16.mxu0 0
    %6266 = vmatpush2.bf16.msra.mxu0 %v4536
    %6267 = vmatprep.mubr.bf16.mxu0 %v1645
    %6268 = vmatmul.mubr.bf16.gmra.mxu0 %v1644
    %v6269 = vpop.f32.mrf.mxu0
    %v6270 = vadd.f32 %v6229, %v6269
    %v6271 = vpop.f32.mrf.mxu0
    %v6272 = vpop.f32.mrf.mxu0
    %v6273 = vadd.f32 %v6232, %v6272
    %v6274 = vpop.f32.mrf.mxu0
    %6275 = vdwg.mxu0
    %6276 = vmatprep.subr.bf16.mxu0 0
    %6277 = vmatpush1.bf16.msra.mxu0 %v4551
    %6278 = vmatprep.subr.bf16.mxu0 0
    %6279 = vmatpush1.bf16.msra.mxu0 %v4550
    %6280 = vmatprep.subr.bf16.mxu0 0
    %6281 = vmatpush1.bf16.msra.mxu0 %v4549
    %6282 = vmatprep.subr.bf16.mxu0 0
    %6283 = vmatpush1.bf16.msra.mxu0 %v4548
    %6284 = vmatprep.subr.bf16.mxu0 0
    %6285 = vmatpush1.bf16.msra.mxu0 %v4547
    %6286 = vmatprep.subr.bf16.mxu0 0
    %6287 = vmatpush1.bf16.msra.mxu0 %v4546
    %6288 = vmatprep.subr.bf16.mxu0 0
    %6289 = vmatpush1.bf16.msra.mxu0 %v4545
    %6290 = vmatprep.subr.bf16.mxu0 0
    %6291 = vmatpush1.bf16.msra.mxu0 %v4544
    %6292 = vmatprep.subr.bf16.mxu0 0
    %6293 = vmatpush2.bf16.msra.mxu0 %v4559
    %6294 = vmatprep.subr.bf16.mxu0 0
    %6295 = vmatpush2.bf16.msra.mxu0 %v4558
    %6296 = vmatprep.subr.bf16.mxu0 0
    %6297 = vmatpush2.bf16.msra.mxu0 %v4557
    %6298 = vmatprep.subr.bf16.mxu0 0
    %6299 = vmatpush2.bf16.msra.mxu0 %v4556
    %6300 = vmatprep.subr.bf16.mxu0 0
    %6301 = vmatpush2.bf16.msra.mxu0 %v4555
    %6302 = vmatprep.subr.bf16.mxu0 0
    %6303 = vmatpush2.bf16.msra.mxu0 %v4554
    %6304 = vmatprep.subr.bf16.mxu0 0
    %6305 = vmatpush2.bf16.msra.mxu0 %v4553
    %6306 = vmatprep.subr.bf16.mxu0 0
    %6307 = vmatpush2.bf16.msra.mxu0 %v4552
    %6308 = vmatprep.mubr.bf16.mxu0 %v1647
    %6309 = vmatmul.mubr.bf16.gmra.mxu0 %v1646
    %v6310 = vpop.f32.mrf.mxu0
    %v6311 = vadd.f32 %v6270, %v6310
    %v6312 = vpop.f32.mrf.mxu0
    %v6313 = vpop.f32.mrf.mxu0
    %v6314 = vadd.f32 %v6273, %v6313
    %v6315 = vpop.f32.mrf.mxu0
    %6316 = vdwg.mxu0
    %6317 = vmatprep.subr.bf16.mxu0 0
    %6318 = vmatpush1.bf16.msra.mxu0 %v4567
    %6319 = vmatprep.subr.bf16.mxu0 0
    %6320 = vmatpush1.bf16.msra.mxu0 %v4566
    %6321 = vmatprep.subr.bf16.mxu0 0
    %6322 = vmatpush1.bf16.msra.mxu0 %v4565
    %6323 = vmatprep.subr.bf16.mxu0 0
    %6324 = vmatpush1.bf16.msra.mxu0 %v4564
    %6325 = vmatprep.subr.bf16.mxu0 0
    %6326 = vmatpush1.bf16.msra.mxu0 %v4563
    %6327 = vmatprep.subr.bf16.mxu0 0
    %6328 = vmatpush1.bf16.msra.mxu0 %v4562
    %6329 = vmatprep.subr.bf16.mxu0 0
    %6330 = vmatpush1.bf16.msra.mxu0 %v4561
    %6331 = vmatprep.subr.bf16.mxu0 0
    %6332 = vmatpush1.bf16.msra.mxu0 %v4560
    %6333 = vmatprep.subr.bf16.mxu0 0
    %6334 = vmatpush2.bf16.msra.mxu0 %v4575
    %6335 = vmatprep.subr.bf16.mxu0 0
    %6336 = vmatpush2.bf16.msra.mxu0 %v4574
    %6337 = vmatprep.subr.bf16.mxu0 0
    %6338 = vmatpush2.bf16.msra.mxu0 %v4573
    %6339 = vmatprep.subr.bf16.mxu0 0
    %6340 = vmatpush2.bf16.msra.mxu0 %v4572
    %6341 = vmatprep.subr.bf16.mxu0 0
    %6342 = vmatpush2.bf16.msra.mxu0 %v4571
    %6343 = vmatprep.subr.bf16.mxu0 0
    %6344 = vmatpush2.bf16.msra.mxu0 %v4570
    %6345 = vmatprep.subr.bf16.mxu0 0
    %6346 = vmatpush2.bf16.msra.mxu0 %v4569
    %6347 = vmatprep.subr.bf16.mxu0 0
    %6348 = vmatpush2.bf16.msra.mxu0 %v4568
    %6349 = vmatprep.mubr.bf16.mxu0 %v1649
    %6350 = vmatmul.mubr.bf16.gmra.mxu0 %v1648
    %v6351 = vpop.f32.mrf.mxu0
    %v6352 = vadd.f32 %v6311, %v6351
    %v6353 = vpop.f32.mrf.mxu0
    %v6354 = vpop.f32.mrf.mxu0
    %v6355 = vadd.f32 %v6314, %v6354
    %v6356 = vpop.f32.mrf.mxu0
    %6357 = vdwg.mxu0
    %6358 = vmatprep.subr.bf16.mxu0 0
    %6359 = vmatpush1.bf16.msra.mxu0 %v4583
    %6360 = vmatprep.subr.bf16.mxu0 0
    %6361 = vmatpush1.bf16.msra.mxu0 %v4582
    %6362 = vmatprep.subr.bf16.mxu0 0
    %6363 = vmatpush1.bf16.msra.mxu0 %v4581
    %6364 = vmatprep.subr.bf16.mxu0 0
    %6365 = vmatpush1.bf16.msra.mxu0 %v4580
    %6366 = vmatprep.subr.bf16.mxu0 0
    %6367 = vmatpush1.bf16.msra.mxu0 %v4579
    %6368 = vmatprep.subr.bf16.mxu0 0
    %6369 = vmatpush1.bf16.msra.mxu0 %v4578
    %6370 = vmatprep.subr.bf16.mxu0 0
    %6371 = vmatpush1.bf16.msra.mxu0 %v4577
    %6372 = vmatprep.subr.bf16.mxu0 0
    %6373 = vmatpush1.bf16.msra.mxu0 %v4576
    %6374 = vmatprep.subr.bf16.mxu0 0
    %6375 = vmatpush2.bf16.msra.mxu0 %v4591
    %6376 = vmatprep.subr.bf16.mxu0 0
    %6377 = vmatpush2.bf16.msra.mxu0 %v4590
    %6378 = vmatprep.subr.bf16.mxu0 0
    %6379 = vmatpush2.bf16.msra.mxu0 %v4589
    %6380 = vmatprep.subr.bf16.mxu0 0
    %6381 = vmatpush2.bf16.msra.mxu0 %v4588
    %6382 = vmatprep.subr.bf16.mxu0 0
    %6383 = vmatpush2.bf16.msra.mxu0 %v4587
    %6384 = vmatprep.subr.bf16.mxu0 0
    %6385 = vmatpush2.bf16.msra.mxu0 %v4586
    %6386 = vmatprep.subr.bf16.mxu0 0
    %6387 = vmatpush2.bf16.msra.mxu0 %v4585
    %6388 = vmatprep.subr.bf16.mxu0 0
    %6389 = vmatpush2.bf16.msra.mxu0 %v4584
    %6390 = vmatprep.mubr.bf16.mxu0 %v1651
    %6391 = vmatmul.mubr.bf16.gmra.mxu0 %v1650
    %v6392 = vpop.f32.mrf.mxu0
    %v6393 = vadd.f32 %v6352, %v6392
    %v6394 = vpop.f32.mrf.mxu0
    %v6395 = vpop.f32.mrf.mxu0
    %v6396 = vadd.f32 %v6355, %v6395
    %v6397 = vpop.f32.mrf.mxu0
    %6398 = vdwg.mxu0
    %6399 = vmatprep.subr.bf16.mxu0 0
    %6400 = vmatpush1.bf16.msra.mxu0 %v4599
    %6401 = vmatprep.subr.bf16.mxu0 0
    %6402 = vmatpush1.bf16.msra.mxu0 %v4598
    %6403 = vmatprep.subr.bf16.mxu0 0
    %6404 = vmatpush1.bf16.msra.mxu0 %v4597
    %6405 = vmatprep.subr.bf16.mxu0 0
    %6406 = vmatpush1.bf16.msra.mxu0 %v4596
    %6407 = vmatprep.subr.bf16.mxu0 0
    %6408 = vmatpush1.bf16.msra.mxu0 %v4595
    %6409 = vmatprep.subr.bf16.mxu0 0
    %6410 = vmatpush1.bf16.msra.mxu0 %v4594
    %6411 = vmatprep.subr.bf16.mxu0 0
    %6412 = vmatpush1.bf16.msra.mxu0 %v4593
    %6413 = vmatprep.subr.bf16.mxu0 0
    %6414 = vmatpush1.bf16.msra.mxu0 %v4592
    %6415 = vmatprep.subr.bf16.mxu0 0
    %6416 = vmatpush2.bf16.msra.mxu0 %v4607
    %6417 = vmatprep.subr.bf16.mxu0 0
    %6418 = vmatpush2.bf16.msra.mxu0 %v4606
    %6419 = vmatprep.subr.bf16.mxu0 0
    %6420 = vmatpush2.bf16.msra.mxu0 %v4605
    %6421 = vmatprep.subr.bf16.mxu0 0
    %6422 = vmatpush2.bf16.msra.mxu0 %v4604
    %6423 = vmatprep.subr.bf16.mxu0 0
    %6424 = vmatpush2.bf16.msra.mxu0 %v4603
    %6425 = vmatprep.subr.bf16.mxu0 0
    %6426 = vmatpush2.bf16.msra.mxu0 %v4602
    %6427 = vmatprep.subr.bf16.mxu0 0
    %6428 = vmatpush2.bf16.msra.mxu0 %v4601
    %6429 = vmatprep.subr.bf16.mxu0 0
    %6430 = vmatpush2.bf16.msra.mxu0 %v4600
    %6431 = vmatprep.mubr.bf16.mxu0 %v1653
    %6432 = vmatmul.mubr.bf16.gmra.mxu0 %v1652
    %v6433 = vpop.f32.mrf.mxu0
    %v6434 = vadd.f32 %v6393, %v6433
    %v6435 = vpop.f32.mrf.mxu0
    %v6436 = vpop.f32.mrf.mxu0
    %v6437 = vadd.f32 %v6396, %v6436
    %v6438 = vpop.f32.mrf.mxu0
    %6439 = vdwg.mxu0
    %6440 = vmatprep.subr.bf16.mxu0 0
    %6441 = vmatpush1.bf16.msra.mxu0 %v4615
    %6442 = vmatprep.subr.bf16.mxu0 0
    %6443 = vmatpush1.bf16.msra.mxu0 %v4614
    %6444 = vmatprep.subr.bf16.mxu0 0
    %6445 = vmatpush1.bf16.msra.mxu0 %v4613
    %6446 = vmatprep.subr.bf16.mxu0 0
    %6447 = vmatpush1.bf16.msra.mxu0 %v4612
    %6448 = vmatprep.subr.bf16.mxu0 0
    %6449 = vmatpush1.bf16.msra.mxu0 %v4611
    %6450 = vmatprep.subr.bf16.mxu0 0
    %6451 = vmatpush1.bf16.msra.mxu0 %v4610
    %6452 = vmatprep.subr.bf16.mxu0 0
    %6453 = vmatpush1.bf16.msra.mxu0 %v4609
    %6454 = vmatprep.subr.bf16.mxu0 0
    %6455 = vmatpush1.bf16.msra.mxu0 %v4608
    %6456 = vmatprep.subr.bf16.mxu0 0
    %6457 = vmatpush2.bf16.msra.mxu0 %v4623
    %6458 = vmatprep.subr.bf16.mxu0 0
    %6459 = vmatpush2.bf16.msra.mxu0 %v4622
    %6460 = vmatprep.subr.bf16.mxu0 0
    %6461 = vmatpush2.bf16.msra.mxu0 %v4621
    %6462 = vmatprep.subr.bf16.mxu0 0
    %6463 = vmatpush2.bf16.msra.mxu0 %v4620
    %6464 = vmatprep.subr.bf16.mxu0 0
    %6465 = vmatpush2.bf16.msra.mxu0 %v4619
    %6466 = vmatprep.subr.bf16.mxu0 0
    %6467 = vmatpush2.bf16.msra.mxu0 %v4618
    %6468 = vmatprep.subr.bf16.mxu0 0
    %6469 = vmatpush2.bf16.msra.mxu0 %v4617
    %6470 = vmatprep.subr.bf16.mxu0 0
    %6471 = vmatpush2.bf16.msra.mxu0 %v4616
    %6472 = vmatprep.mubr.bf16.mxu0 %v1655
    %6473 = vmatmul.mubr.bf16.gmra.mxu0 %v1654
    %v6474 = vpop.f32.mrf.mxu0
    %v6475 = vadd.f32 %v6434, %v6474
    %v6476 = vpop.f32.mrf.mxu0
    %v6477 = vpop.f32.mrf.mxu0
    %v6478 = vadd.f32 %v6437, %v6477
    %v6479 = vpop.f32.mrf.mxu0
    %6480 = vdwg.mxu0
    %6481 = vmatprep.subr.bf16.mxu0 0
    %6482 = vmatpush1.bf16.msra.mxu0 %v4631
    %6483 = vmatprep.subr.bf16.mxu0 0
    %6484 = vmatpush1.bf16.msra.mxu0 %v4630
    %6485 = vmatprep.subr.bf16.mxu0 0
    %6486 = vmatpush1.bf16.msra.mxu0 %v4629
    %6487 = vmatprep.subr.bf16.mxu0 0
    %6488 = vmatpush1.bf16.msra.mxu0 %v4628
    %6489 = vmatprep.subr.bf16.mxu0 0
    %6490 = vmatpush1.bf16.msra.mxu0 %v4627
    %6491 = vmatprep.subr.bf16.mxu0 0
    %6492 = vmatpush1.bf16.msra.mxu0 %v4626
    %6493 = vmatprep.subr.bf16.mxu0 0
    %6494 = vmatpush1.bf16.msra.mxu0 %v4625
    %6495 = vmatprep.subr.bf16.mxu0 0
    %6496 = vmatpush1.bf16.msra.mxu0 %v4624
    %6497 = vmatprep.subr.bf16.mxu0 0
    %6498 = vmatpush2.bf16.msra.mxu0 %v4639
    %6499 = vmatprep.subr.bf16.mxu0 0
    %6500 = vmatpush2.bf16.msra.mxu0 %v4638
    %6501 = vmatprep.subr.bf16.mxu0 0
    %6502 = vmatpush2.bf16.msra.mxu0 %v4637
    %6503 = vmatprep.subr.bf16.mxu0 0
    %6504 = vmatpush2.bf16.msra.mxu0 %v4636
    %6505 = vmatprep.subr.bf16.mxu0 0
    %6506 = vmatpush2.bf16.msra.mxu0 %v4635
    %6507 = vmatprep.subr.bf16.mxu0 0
    %6508 = vmatpush2.bf16.msra.mxu0 %v4634
    %6509 = vmatprep.subr.bf16.mxu0 0
    %6510 = vmatpush2.bf16.msra.mxu0 %v4633
    %6511 = vmatprep.subr.bf16.mxu0 0
    %6512 = vmatpush2.bf16.msra.mxu0 %v4632
    %6513 = vmatprep.mubr.bf16.mxu0 %v1657
    %6514 = vmatmul.mubr.bf16.gmra.mxu0 %v1656
    %v6515 = vpop.f32.mrf.mxu0
    %v6516 = vadd.f32 %v6475, %v6515
    %v6517 = vpop.f32.mrf.mxu0
    %v6518 = vpop.f32.mrf.mxu0
    %v6519 = vadd.f32 %v6478, %v6518
    %v6520 = vpop.f32.mrf.mxu0
    %6521 = vdwg.mxu0
    %6522 = vmatprep.subr.bf16.mxu0 0
    %6523 = vmatpush1.bf16.msra.mxu0 %v4647
    %6524 = vmatprep.subr.bf16.mxu0 0
    %6525 = vmatpush1.bf16.msra.mxu0 %v4646
    %6526 = vmatprep.subr.bf16.mxu0 0
    %6527 = vmatpush1.bf16.msra.mxu0 %v4645
    %6528 = vmatprep.subr.bf16.mxu0 0
    %6529 = vmatpush1.bf16.msra.mxu0 %v4644
    %6530 = vmatprep.subr.bf16.mxu0 0
    %6531 = vmatpush1.bf16.msra.mxu0 %v4643
    %6532 = vmatprep.subr.bf16.mxu0 0
    %6533 = vmatpush1.bf16.msra.mxu0 %v4642
    %6534 = vmatprep.subr.bf16.mxu0 0
    %6535 = vmatpush1.bf16.msra.mxu0 %v4641
    %6536 = vmatprep.subr.bf16.mxu0 0
    %6537 = vmatpush1.bf16.msra.mxu0 %v4640
    %6538 = vmatprep.subr.bf16.mxu0 0
    %6539 = vmatpush2.bf16.msra.mxu0 %v4655
    %6540 = vmatprep.subr.bf16.mxu0 0
    %6541 = vmatpush2.bf16.msra.mxu0 %v4654
    %6542 = vmatprep.subr.bf16.mxu0 0
    %6543 = vmatpush2.bf16.msra.mxu0 %v4653
    %6544 = vmatprep.subr.bf16.mxu0 0
    %6545 = vmatpush2.bf16.msra.mxu0 %v4652
    %6546 = vmatprep.subr.bf16.mxu0 0
    %6547 = vmatpush2.bf16.msra.mxu0 %v4651
    %6548 = vmatprep.subr.bf16.mxu0 0
    %6549 = vmatpush2.bf16.msra.mxu0 %v4650
    %6550 = vmatprep.subr.bf16.mxu0 0
    %6551 = vmatpush2.bf16.msra.mxu0 %v4649
    %6552 = vmatprep.subr.bf16.mxu0 0
    %6553 = vmatpush2.bf16.msra.mxu0 %v4648
    %6554 = vmatprep.mubr.bf16.mxu0 %v1659
    %6555 = vmatmul.mubr.bf16.gmra.mxu0 %v1658
    %v6556 = vpop.f32.mrf.mxu0
    %v6557 = vadd.f32 %v6516, %v6556
    %v6558 = vpop.f32.mrf.mxu0
    %v6559 = vpop.f32.mrf.mxu0
    %v6560 = vadd.f32 %v6519, %v6559
    %v6561 = vpop.f32.mrf.mxu0
    %6562 = vdwg.mxu0
    %6563 = vmatprep.subr.bf16.mxu0 0
    %6564 = vmatpush1.bf16.msra.mxu0 %v4663
    %6565 = vmatprep.subr.bf16.mxu0 0
    %6566 = vmatpush1.bf16.msra.mxu0 %v4662
    %6567 = vmatprep.subr.bf16.mxu0 0
    %6568 = vmatpush1.bf16.msra.mxu0 %v4661
    %6569 = vmatprep.subr.bf16.mxu0 0
    %6570 = vmatpush1.bf16.msra.mxu0 %v4660
    %6571 = vmatprep.subr.bf16.mxu0 0
    %6572 = vmatpush1.bf16.msra.mxu0 %v4659
    %6573 = vmatprep.subr.bf16.mxu0 0
    %6574 = vmatpush1.bf16.msra.mxu0 %v4658
    %6575 = vmatprep.subr.bf16.mxu0 0
    %6576 = vmatpush1.bf16.msra.mxu0 %v4657
    %6577 = vmatprep.subr.bf16.mxu0 0
    %6578 = vmatpush1.bf16.msra.mxu0 %v4656
    %6579 = vmatprep.subr.bf16.mxu0 0
    %6580 = vmatpush2.bf16.msra.mxu0 %v4671
    %6581 = vmatprep.subr.bf16.mxu0 0
    %6582 = vmatpush2.bf16.msra.mxu0 %v4670
    %6583 = vmatprep.subr.bf16.mxu0 0
    %6584 = vmatpush2.bf16.msra.mxu0 %v4669
    %6585 = vmatprep.subr.bf16.mxu0 0
    %6586 = vmatpush2.bf16.msra.mxu0 %v4668
    %6587 = vmatprep.subr.bf16.mxu0 0
    %6588 = vmatpush2.bf16.msra.mxu0 %v4667
    %6589 = vmatprep.subr.bf16.mxu0 0
    %6590 = vmatpush2.bf16.msra.mxu0 %v4666
    %6591 = vmatprep.subr.bf16.mxu0 0
    %6592 = vmatpush2.bf16.msra.mxu0 %v4665
    %6593 = vmatprep.subr.bf16.mxu0 0
    %6594 = vmatpush2.bf16.msra.mxu0 %v4664
    %6595 = vmatprep.mubr.bf16.mxu0 %v1661
    %6596 = vmatmul.mubr.bf16.gmra.mxu0 %v1660
    %v6597 = vpop.f32.mrf.mxu0
    %v6598 = vadd.f32 %v6557, %v6597
    %v6599 = vpop.f32.mrf.mxu0
    %v6600 = vpop.f32.mrf.mxu0
    %v6601 = vadd.f32 %v6560, %v6600
    %v6602 = vpop.f32.mrf.mxu0
    %6603 = vdwg.mxu0
    %6604 = vmatprep.subr.bf16.mxu0 0
    %6605 = vmatpush1.bf16.msra.mxu0 %v4679
    %6606 = vmatprep.subr.bf16.mxu0 0
    %6607 = vmatpush1.bf16.msra.mxu0 %v4678
    %6608 = vmatprep.subr.bf16.mxu0 0
    %6609 = vmatpush1.bf16.msra.mxu0 %v4677
    %6610 = vmatprep.subr.bf16.mxu0 0
    %6611 = vmatpush1.bf16.msra.mxu0 %v4676
    %6612 = vmatprep.subr.bf16.mxu0 0
    %6613 = vmatpush1.bf16.msra.mxu0 %v4675
    %6614 = vmatprep.subr.bf16.mxu0 0
    %6615 = vmatpush1.bf16.msra.mxu0 %v4674
    %6616 = vmatprep.subr.bf16.mxu0 0
    %6617 = vmatpush1.bf16.msra.mxu0 %v4673
    %6618 = vmatprep.subr.bf16.mxu0 0
    %6619 = vmatpush1.bf16.msra.mxu0 %v4672
    %6620 = vmatprep.subr.bf16.mxu0 0
    %6621 = vmatpush2.bf16.msra.mxu0 %v4687
    %6622 = vmatprep.subr.bf16.mxu0 0
    %6623 = vmatpush2.bf16.msra.mxu0 %v4686
    %6624 = vmatprep.subr.bf16.mxu0 0
    %6625 = vmatpush2.bf16.msra.mxu0 %v4685
    %6626 = vmatprep.subr.bf16.mxu0 0
    %6627 = vmatpush2.bf16.msra.mxu0 %v4684
    %6628 = vmatprep.subr.bf16.mxu0 0
    %6629 = vmatpush2.bf16.msra.mxu0 %v4683
    %6630 = vmatprep.subr.bf16.mxu0 0
    %6631 = vmatpush2.bf16.msra.mxu0 %v4682
    %6632 = vmatprep.subr.bf16.mxu0 0
    %6633 = vmatpush2.bf16.msra.mxu0 %v4681
    %6634 = vmatprep.subr.bf16.mxu0 0
    %6635 = vmatpush2.bf16.msra.mxu0 %v4680
    %6636 = vmatprep.mubr.bf16.mxu0 %v1663
    %6637 = vmatmul.mubr.bf16.gmra.mxu0 %v1662
    %v6638 = vpop.f32.mrf.mxu0
    %v6639 = vadd.f32 %v6598, %v6638
    %v6640 = vpop.f32.mrf.mxu0
    %v6641 = vpop.f32.mrf.mxu0
    %v6642 = vadd.f32 %v6601, %v6641
    %v6643 = vpop.f32.mrf.mxu0
    %6644 = vdwg.mxu0
    %6645 = vmatprep.subr.bf16.mxu0 0
    %6646 = vmatpush1.bf16.msra.mxu0 %v4695
    %6647 = vmatprep.subr.bf16.mxu0 0
    %6648 = vmatpush1.bf16.msra.mxu0 %v4694
    %6649 = vmatprep.subr.bf16.mxu0 0
    %6650 = vmatpush1.bf16.msra.mxu0 %v4693
    %6651 = vmatprep.subr.bf16.mxu0 0
    %6652 = vmatpush1.bf16.msra.mxu0 %v4692
    %6653 = vmatprep.subr.bf16.mxu0 0
    %6654 = vmatpush1.bf16.msra.mxu0 %v4691
    %6655 = vmatprep.subr.bf16.mxu0 0
    %6656 = vmatpush1.bf16.msra.mxu0 %v4690
    %6657 = vmatprep.subr.bf16.mxu0 0
    %6658 = vmatpush1.bf16.msra.mxu0 %v4689
    %6659 = vmatprep.subr.bf16.mxu0 0
    %6660 = vmatpush1.bf16.msra.mxu0 %v4688
    %6661 = vmatprep.subr.bf16.mxu0 0
    %6662 = vmatpush2.bf16.msra.mxu0 %v4703
    %6663 = vmatprep.subr.bf16.mxu0 0
    %6664 = vmatpush2.bf16.msra.mxu0 %v4702
    %6665 = vmatprep.subr.bf16.mxu0 0
    %6666 = vmatpush2.bf16.msra.mxu0 %v4701
    %6667 = vmatprep.subr.bf16.mxu0 0
    %6668 = vmatpush2.bf16.msra.mxu0 %v4700
    %6669 = vmatprep.subr.bf16.mxu0 0
    %6670 = vmatpush2.bf16.msra.mxu0 %v4699
    %6671 = vmatprep.subr.bf16.mxu0 0
    %6672 = vmatpush2.bf16.msra.mxu0 %v4698
    %6673 = vmatprep.subr.bf16.mxu0 0
    %6674 = vmatpush2.bf16.msra.mxu0 %v4697
    %6675 = vmatprep.subr.bf16.mxu0 0
    %6676 = vmatpush2.bf16.msra.mxu0 %v4696
    %6677 = vmatprep.mubr.bf16.mxu0 %v1665
    %6678 = vmatmul.mubr.bf16.gmra.mxu0 %v1664
    %v6679 = vpop.f32.mrf.mxu0
    %v6680 = vadd.f32 %v6639, %v6679
    %v6681 = vpop.f32.mrf.mxu0
    %v6682 = vpop.f32.mrf.mxu0
    %v6683 = vadd.f32 %v6642, %v6682
    %v6684 = vpop.f32.mrf.mxu0
    %6685 = vdwg.mxu0
    %6686 = vmatprep.subr.bf16.mxu0 0
    %6687 = vmatpush1.bf16.msra.mxu0 %v4711
    %6688 = vmatprep.subr.bf16.mxu0 0
    %6689 = vmatpush1.bf16.msra.mxu0 %v4710
    %6690 = vmatprep.subr.bf16.mxu0 0
    %6691 = vmatpush1.bf16.msra.mxu0 %v4709
    %6692 = vmatprep.subr.bf16.mxu0 0
    %6693 = vmatpush1.bf16.msra.mxu0 %v4708
    %6694 = vmatprep.subr.bf16.mxu0 0
    %6695 = vmatpush1.bf16.msra.mxu0 %v4707
    %6696 = vmatprep.subr.bf16.mxu0 0
    %6697 = vmatpush1.bf16.msra.mxu0 %v4706
    %6698 = vmatprep.subr.bf16.mxu0 0
    %6699 = vmatpush1.bf16.msra.mxu0 %v4705
    %6700 = vmatprep.subr.bf16.mxu0 0
    %6701 = vmatpush1.bf16.msra.mxu0 %v4704
    %6702 = vmatprep.subr.bf16.mxu0 0
    %6703 = vmatpush2.bf16.msra.mxu0 %v4719
    %6704 = vmatprep.subr.bf16.mxu0 0
    %6705 = vmatpush2.bf16.msra.mxu0 %v4718
    %6706 = vmatprep.subr.bf16.mxu0 0
    %6707 = vmatpush2.bf16.msra.mxu0 %v4717
    %6708 = vmatprep.subr.bf16.mxu0 0
    %6709 = vmatpush2.bf16.msra.mxu0 %v4716
    %6710 = vmatprep.subr.bf16.mxu0 0
    %6711 = vmatpush2.bf16.msra.mxu0 %v4715
    %6712 = vmatprep.subr.bf16.mxu0 0
    %6713 = vmatpush2.bf16.msra.mxu0 %v4714
    %6714 = vmatprep.subr.bf16.mxu0 0
    %6715 = vmatpush2.bf16.msra.mxu0 %v4713
    %6716 = vmatprep.subr.bf16.mxu0 0
    %6717 = vmatpush2.bf16.msra.mxu0 %v4712
    %6718 = vmatprep.mubr.bf16.mxu0 %v1667
    %6719 = vmatmul.mubr.bf16.gmra.mxu0 %v1666
    %v6720 = vpop.f32.mrf.mxu0
    %v6721 = vadd.f32 %v6680, %v6720
    %v6722 = vpop.f32.mrf.mxu0
    %v6723 = vpop.f32.mrf.mxu0
    %v6724 = vadd.f32 %v6683, %v6723
    %v6725 = vpop.f32.mrf.mxu0
    %6726 = vdwg.mxu0
    %6727 = vmatprep.subr.bf16.mxu0 0
    %6728 = vmatpush1.bf16.msra.mxu0 %v4727
    %6729 = vmatprep.subr.bf16.mxu0 0
    %6730 = vmatpush1.bf16.msra.mxu0 %v4726
    %6731 = vmatprep.subr.bf16.mxu0 0
    %6732 = vmatpush1.bf16.msra.mxu0 %v4725
    %6733 = vmatprep.subr.bf16.mxu0 0
    %6734 = vmatpush1.bf16.msra.mxu0 %v4724
    %6735 = vmatprep.subr.bf16.mxu0 0
    %6736 = vmatpush1.bf16.msra.mxu0 %v4723
    %6737 = vmatprep.subr.bf16.mxu0 0
    %6738 = vmatpush1.bf16.msra.mxu0 %v4722
    %6739 = vmatprep.subr.bf16.mxu0 0
    %6740 = vmatpush1.bf16.msra.mxu0 %v4721
    %6741 = vmatprep.subr.bf16.mxu0 0
    %6742 = vmatpush1.bf16.msra.mxu0 %v4720
    %6743 = vmatprep.subr.bf16.mxu0 0
    %6744 = vmatpush2.bf16.msra.mxu0 %v4735
    %6745 = vmatprep.subr.bf16.mxu0 0
    %6746 = vmatpush2.bf16.msra.mxu0 %v4734
    %6747 = vmatprep.subr.bf16.mxu0 0
    %6748 = vmatpush2.bf16.msra.mxu0 %v4733
    %6749 = vmatprep.subr.bf16.mxu0 0
    %6750 = vmatpush2.bf16.msra.mxu0 %v4732
    %6751 = vmatprep.subr.bf16.mxu0 0
    %6752 = vmatpush2.bf16.msra.mxu0 %v4731
    %6753 = vmatprep.subr.bf16.mxu0 0
    %6754 = vmatpush2.bf16.msra.mxu0 %v4730
    %6755 = vmatprep.subr.bf16.mxu0 0
    %6756 = vmatpush2.bf16.msra.mxu0 %v4729
    %6757 = vmatprep.subr.bf16.mxu0 0
    %6758 = vmatpush2.bf16.msra.mxu0 %v4728
    %6759 = vmatprep.mubr.bf16.mxu0 %v1669
    %6760 = vmatmul.mubr.bf16.gmra.mxu0 %v1668
    %v6761 = vpop.f32.mrf.mxu0
    %v6762 = vadd.f32 %v6721, %v6761
    %v6763 = vpop.f32.mrf.mxu0
    %v6764 = vpop.f32.mrf.mxu0
    %v6765 = vadd.f32 %v6724, %v6764
    %v6766 = vpop.f32.mrf.mxu0
    %6767 = vdwg.mxu0
    %6768 = vmatprep.subr.bf16.mxu0 0
    %6769 = vmatpush1.bf16.msra.mxu0 %v4743
    %6770 = vmatprep.subr.bf16.mxu0 0
    %6771 = vmatpush1.bf16.msra.mxu0 %v4742
    %6772 = vmatprep.subr.bf16.mxu0 0
    %6773 = vmatpush1.bf16.msra.mxu0 %v4741
    %6774 = vmatprep.subr.bf16.mxu0 0
    %6775 = vmatpush1.bf16.msra.mxu0 %v4740
    %6776 = vmatprep.subr.bf16.mxu0 0
    %6777 = vmatpush1.bf16.msra.mxu0 %v4739
    %6778 = vmatprep.subr.bf16.mxu0 0
    %6779 = vmatpush1.bf16.msra.mxu0 %v4738
    %6780 = vmatprep.subr.bf16.mxu0 0
    %6781 = vmatpush1.bf16.msra.mxu0 %v4737
    %6782 = vmatprep.subr.bf16.mxu0 0
    %6783 = vmatpush1.bf16.msra.mxu0 %v4736
    %6784 = vmatprep.subr.bf16.mxu0 0
    %6785 = vmatpush2.bf16.msra.mxu0 %v4751
    %6786 = vmatprep.subr.bf16.mxu0 0
    %6787 = vmatpush2.bf16.msra.mxu0 %v4750
    %6788 = vmatprep.subr.bf16.mxu0 0
    %6789 = vmatpush2.bf16.msra.mxu0 %v4749
    %6790 = vmatprep.subr.bf16.mxu0 0
    %6791 = vmatpush2.bf16.msra.mxu0 %v4748
    %6792 = vmatprep.subr.bf16.mxu0 0
    %6793 = vmatpush2.bf16.msra.mxu0 %v4747
    %6794 = vmatprep.subr.bf16.mxu0 0
    %6795 = vmatpush2.bf16.msra.mxu0 %v4746
    %6796 = vmatprep.subr.bf16.mxu0 0
    %6797 = vmatpush2.bf16.msra.mxu0 %v4745
    %6798 = vmatprep.subr.bf16.mxu0 0
    %6799 = vmatpush2.bf16.msra.mxu0 %v4744
    %6800 = vmatprep.mubr.bf16.mxu0 %v1671
    %6801 = vmatmul.mubr.bf16.gmra.mxu0 %v1670
    %v6802 = vpop.f32.mrf.mxu0
    %v6803 = vadd.f32 %v6762, %v6802
    %v6804 = vpop.f32.mrf.mxu0
    %v6805 = vpop.f32.mrf.mxu0
    %v6806 = vadd.f32 %v6765, %v6805
    %v6807 = vpop.f32.mrf.mxu0
    %6808 = vdwg.mxu0
    %6809 = vmatprep.subr.bf16.mxu0 0
    %6810 = vmatpush1.bf16.msra.mxu0 %v4759
    %6811 = vmatprep.subr.bf16.mxu0 0
    %6812 = vmatpush1.bf16.msra.mxu0 %v4758
    %6813 = vmatprep.subr.bf16.mxu0 0
    %6814 = vmatpush1.bf16.msra.mxu0 %v4757
    %6815 = vmatprep.subr.bf16.mxu0 0
    %6816 = vmatpush1.bf16.msra.mxu0 %v4756
    %6817 = vmatprep.subr.bf16.mxu0 0
    %6818 = vmatpush1.bf16.msra.mxu0 %v4755
    %6819 = vmatprep.subr.bf16.mxu0 0
    %6820 = vmatpush1.bf16.msra.mxu0 %v4754
    %6821 = vmatprep.subr.bf16.mxu0 0
    %6822 = vmatpush1.bf16.msra.mxu0 %v4753
    %6823 = vmatprep.subr.bf16.mxu0 0
    %6824 = vmatpush1.bf16.msra.mxu0 %v4752
    %6825 = vmatprep.subr.bf16.mxu0 0
    %6826 = vmatpush2.bf16.msra.mxu0 %v4767
    %6827 = vmatprep.subr.bf16.mxu0 0
    %6828 = vmatpush2.bf16.msra.mxu0 %v4766
    %6829 = vmatprep.subr.bf16.mxu0 0
    %6830 = vmatpush2.bf16.msra.mxu0 %v4765
    %6831 = vmatprep.subr.bf16.mxu0 0
    %6832 = vmatpush2.bf16.msra.mxu0 %v4764
    %6833 = vmatprep.subr.bf16.mxu0 0
    %6834 = vmatpush2.bf16.msra.mxu0 %v4763
    %6835 = vmatprep.subr.bf16.mxu0 0
    %6836 = vmatpush2.bf16.msra.mxu0 %v4762
    %6837 = vmatprep.subr.bf16.mxu0 0
    %6838 = vmatpush2.bf16.msra.mxu0 %v4761
    %6839 = vmatprep.subr.bf16.mxu0 0
    %6840 = vmatpush2.bf16.msra.mxu0 %v4760
    %6841 = vmatprep.mubr.bf16.mxu0 %v1673
    %6842 = vmatmul.mubr.bf16.gmra.mxu0 %v1672
    %v6843 = vpop.f32.mrf.mxu0
    %v6844 = vadd.f32 %v6803, %v6843
    %v6845 = vpop.f32.mrf.mxu0
    %v6846 = vpop.f32.mrf.mxu0
    %v6847 = vadd.f32 %v6806, %v6846
    %v6848 = vpop.f32.mrf.mxu0
    %6849 = vdwg.mxu0
    %6850 = vmatprep.subr.bf16.mxu0 0
    %6851 = vmatpush1.bf16.msra.mxu0 %v4775
    %6852 = vmatprep.subr.bf16.mxu0 0
    %6853 = vmatpush1.bf16.msra.mxu0 %v4774
    %6854 = vmatprep.subr.bf16.mxu0 0
    %6855 = vmatpush1.bf16.msra.mxu0 %v4773
    %6856 = vmatprep.subr.bf16.mxu0 0
    %6857 = vmatpush1.bf16.msra.mxu0 %v4772
    %6858 = vmatprep.subr.bf16.mxu0 0
    %6859 = vmatpush1.bf16.msra.mxu0 %v4771
    %6860 = vmatprep.subr.bf16.mxu0 0
    %6861 = vmatpush1.bf16.msra.mxu0 %v4770
    %6862 = vmatprep.subr.bf16.mxu0 0
    %6863 = vmatpush1.bf16.msra.mxu0 %v4769
    %6864 = vmatprep.subr.bf16.mxu0 0
    %6865 = vmatpush1.bf16.msra.mxu0 %v4768
    %6866 = vmatprep.subr.bf16.mxu0 0
    %6867 = vmatpush2.bf16.msra.mxu0 %v4783
    %6868 = vmatprep.subr.bf16.mxu0 0
    %6869 = vmatpush2.bf16.msra.mxu0 %v4782
    %6870 = vmatprep.subr.bf16.mxu0 0
    %6871 = vmatpush2.bf16.msra.mxu0 %v4781
    %6872 = vmatprep.subr.bf16.mxu0 0
    %6873 = vmatpush2.bf16.msra.mxu0 %v4780
    %6874 = vmatprep.subr.bf16.mxu0 0
    %6875 = vmatpush2.bf16.msra.mxu0 %v4779
    %6876 = vmatprep.subr.bf16.mxu0 0
    %6877 = vmatpush2.bf16.msra.mxu0 %v4778
    %6878 = vmatprep.subr.bf16.mxu0 0
    %6879 = vmatpush2.bf16.msra.mxu0 %v4777
    %6880 = vmatprep.subr.bf16.mxu0 0
    %6881 = vmatpush2.bf16.msra.mxu0 %v4776
    %6882 = vmatprep.mubr.bf16.mxu0 %v1675
    %6883 = vmatmul.mubr.bf16.gmra.mxu0 %v1674
    %v6884 = vpop.f32.mrf.mxu0
    %v6885 = vadd.f32 %v6844, %v6884
    %v6886 = vpop.f32.mrf.mxu0
    %v6887 = vpop.f32.mrf.mxu0
    %v6888 = vadd.f32 %v6847, %v6887
    %v6889 = vpop.f32.mrf.mxu0
    %6890 = vdwg.mxu0
    %6891 = vmatprep.subr.bf16.mxu0 0
    %6892 = vmatpush1.bf16.msra.mxu0 %v4791
    %6893 = vmatprep.subr.bf16.mxu0 0
    %6894 = vmatpush1.bf16.msra.mxu0 %v4790
    %6895 = vmatprep.subr.bf16.mxu0 0
    %6896 = vmatpush1.bf16.msra.mxu0 %v4789
    %6897 = vmatprep.subr.bf16.mxu0 0
    %6898 = vmatpush1.bf16.msra.mxu0 %v4788
    %6899 = vmatprep.subr.bf16.mxu0 0
    %6900 = vmatpush1.bf16.msra.mxu0 %v4787
    %6901 = vmatprep.subr.bf16.mxu0 0
    %6902 = vmatpush1.bf16.msra.mxu0 %v4786
    %6903 = vmatprep.subr.bf16.mxu0 0
    %6904 = vmatpush1.bf16.msra.mxu0 %v4785
    %6905 = vmatprep.subr.bf16.mxu0 0
    %6906 = vmatpush1.bf16.msra.mxu0 %v4784
    %6907 = vmatprep.subr.bf16.mxu0 0
    %6908 = vmatpush2.bf16.msra.mxu0 %v4799
    %6909 = vmatprep.subr.bf16.mxu0 0
    %6910 = vmatpush2.bf16.msra.mxu0 %v4798
    %6911 = vmatprep.subr.bf16.mxu0 0
    %6912 = vmatpush2.bf16.msra.mxu0 %v4797
    %6913 = vmatprep.subr.bf16.mxu0 0
    %6914 = vmatpush2.bf16.msra.mxu0 %v4796
    %6915 = vmatprep.subr.bf16.mxu0 0
    %6916 = vmatpush2.bf16.msra.mxu0 %v4795
    %6917 = vmatprep.subr.bf16.mxu0 0
    %6918 = vmatpush2.bf16.msra.mxu0 %v4794
    %6919 = vmatprep.subr.bf16.mxu0 0
    %6920 = vmatpush2.bf16.msra.mxu0 %v4793
    %6921 = vmatprep.subr.bf16.mxu0 0
    %6922 = vmatpush2.bf16.msra.mxu0 %v4792
    %6923 = vmatprep.mubr.bf16.mxu0 %v1677
    %6924 = vmatmul.mubr.bf16.gmra.mxu0 %v1676
    %v6925 = vpop.f32.mrf.mxu0
    %v6926 = vadd.f32 %v6885, %v6925
    %v6927 = vpop.f32.mrf.mxu0
    %v6928 = vpop.f32.mrf.mxu0
    %v6929 = vadd.f32 %v6888, %v6928
    %v6930 = vpop.f32.mrf.mxu0
    %6931 = vdwg.mxu0
    %6932 = vmatprep.subr.bf16.mxu0 0
    %6933 = vmatpush1.bf16.msra.mxu0 %v4807
    %6934 = vmatprep.subr.bf16.mxu0 0
    %6935 = vmatpush1.bf16.msra.mxu0 %v4806
    %6936 = vmatprep.subr.bf16.mxu0 0
    %6937 = vmatpush1.bf16.msra.mxu0 %v4805
    %6938 = vmatprep.subr.bf16.mxu0 0
    %6939 = vmatpush1.bf16.msra.mxu0 %v4804
    %6940 = vmatprep.subr.bf16.mxu0 0
    %6941 = vmatpush1.bf16.msra.mxu0 %v4803
    %6942 = vmatprep.subr.bf16.mxu0 0
    %6943 = vmatpush1.bf16.msra.mxu0 %v4802
    %6944 = vmatprep.subr.bf16.mxu0 0
    %6945 = vmatpush1.bf16.msra.mxu0 %v4801
    %6946 = vmatprep.subr.bf16.mxu0 0
    %6947 = vmatpush1.bf16.msra.mxu0 %v4800
    %6948 = vmatprep.subr.bf16.mxu0 0
    %6949 = vmatpush2.bf16.msra.mxu0 %v4815
    %6950 = vmatprep.subr.bf16.mxu0 0
    %6951 = vmatpush2.bf16.msra.mxu0 %v4814
    %6952 = vmatprep.subr.bf16.mxu0 0
    %6953 = vmatpush2.bf16.msra.mxu0 %v4813
    %6954 = vmatprep.subr.bf16.mxu0 0
    %6955 = vmatpush2.bf16.msra.mxu0 %v4812
    %6956 = vmatprep.subr.bf16.mxu0 0
    %6957 = vmatpush2.bf16.msra.mxu0 %v4811
    %6958 = vmatprep.subr.bf16.mxu0 0
    %6959 = vmatpush2.bf16.msra.mxu0 %v4810
    %6960 = vmatprep.subr.bf16.mxu0 0
    %6961 = vmatpush2.bf16.msra.mxu0 %v4809
    %6962 = vmatprep.subr.bf16.mxu0 0
    %6963 = vmatpush2.bf16.msra.mxu0 %v4808
    %6964 = vmatprep.mubr.bf16.mxu0 %v1679
    %6965 = vmatmul.mubr.bf16.gmra.mxu0 %v1678
    %v6966 = vpop.f32.mrf.mxu0
    %v6967 = vadd.f32 %v6926, %v6966
    %v6968 = vpop.f32.mrf.mxu0
    %v6969 = vpop.f32.mrf.mxu0
    %v6970 = vadd.f32 %v6929, %v6969
    %v6971 = vpop.f32.mrf.mxu0
    %6972 = vdwg.mxu0
    %6973 = vmatprep.subr.bf16.mxu0 0
    %6974 = vmatpush1.bf16.msra.mxu0 %v4823
    %6975 = vmatprep.subr.bf16.mxu0 0
    %6976 = vmatpush1.bf16.msra.mxu0 %v4822
    %6977 = vmatprep.subr.bf16.mxu0 0
    %6978 = vmatpush1.bf16.msra.mxu0 %v4821
    %6979 = vmatprep.subr.bf16.mxu0 0
    %6980 = vmatpush1.bf16.msra.mxu0 %v4820
    %6981 = vmatprep.subr.bf16.mxu0 0
    %6982 = vmatpush1.bf16.msra.mxu0 %v4819
    %6983 = vmatprep.subr.bf16.mxu0 0
    %6984 = vmatpush1.bf16.msra.mxu0 %v4818
    %6985 = vmatprep.subr.bf16.mxu0 0
    %6986 = vmatpush1.bf16.msra.mxu0 %v4817
    %6987 = vmatprep.subr.bf16.mxu0 0
    %6988 = vmatpush1.bf16.msra.mxu0 %v4816
    %6989 = vmatprep.subr.bf16.mxu0 0
    %6990 = vmatpush2.bf16.msra.mxu0 %v4831
    %6991 = vmatprep.subr.bf16.mxu0 0
    %6992 = vmatpush2.bf16.msra.mxu0 %v4830
    %6993 = vmatprep.subr.bf16.mxu0 0
    %6994 = vmatpush2.bf16.msra.mxu0 %v4829
    %6995 = vmatprep.subr.bf16.mxu0 0
    %6996 = vmatpush2.bf16.msra.mxu0 %v4828
    %6997 = vmatprep.subr.bf16.mxu0 0
    %6998 = vmatpush2.bf16.msra.mxu0 %v4827
    %6999 = vmatprep.subr.bf16.mxu0 0
    %7000 = vmatpush2.bf16.msra.mxu0 %v4826
    %7001 = vmatprep.subr.bf16.mxu0 0
    %7002 = vmatpush2.bf16.msra.mxu0 %v4825
    %7003 = vmatprep.subr.bf16.mxu0 0
    %7004 = vmatpush2.bf16.msra.mxu0 %v4824
    %7005 = vmatprep.mubr.bf16.mxu0 %v1681
    %7006 = vmatmul.mubr.bf16.gmra.mxu0 %v1680
    %v7007 = vpop.f32.mrf.mxu0
    %v7008 = vadd.f32 %v6967, %v7007
    %v7009 = vpop.f32.mrf.mxu0
    %v7010 = vpop.f32.mrf.mxu0
    %v7011 = vadd.f32 %v6970, %v7010
    %v7012 = vpop.f32.mrf.mxu0
    %7013 = vdwg.mxu0
    %7014 = vmatprep.subr.bf16.mxu0 0
    %7015 = vmatpush1.bf16.msra.mxu0 %v4839
    %7016 = vmatprep.subr.bf16.mxu0 0
    %7017 = vmatpush1.bf16.msra.mxu0 %v4838
    %7018 = vmatprep.subr.bf16.mxu0 0
    %7019 = vmatpush1.bf16.msra.mxu0 %v4837
    %7020 = vmatprep.subr.bf16.mxu0 0
    %7021 = vmatpush1.bf16.msra.mxu0 %v4836
    %7022 = vmatprep.subr.bf16.mxu0 0
    %7023 = vmatpush1.bf16.msra.mxu0 %v4835
    %7024 = vmatprep.subr.bf16.mxu0 0
    %7025 = vmatpush1.bf16.msra.mxu0 %v4834
    %7026 = vmatprep.subr.bf16.mxu0 0
    %7027 = vmatpush1.bf16.msra.mxu0 %v4833
    %7028 = vmatprep.subr.bf16.mxu0 0
    %7029 = vmatpush1.bf16.msra.mxu0 %v4832
    %7030 = vmatprep.subr.bf16.mxu0 0
    %7031 = vmatpush2.bf16.msra.mxu0 0
    %7032 = vmatprep.subr.bf16.mxu0 0
    %7033 = vmatpush2.bf16.msra.mxu0 0
    %7034 = vmatprep.subr.bf16.mxu0 0
    %7035 = vmatpush2.bf16.msra.mxu0 0
    %7036 = vmatprep.subr.bf16.mxu0 0
    %7037 = vmatpush2.bf16.msra.mxu0 0
    %7038 = vmatprep.subr.bf16.mxu0 0
    %7039 = vmatpush2.bf16.msra.mxu0 0
    %7040 = vmatprep.subr.bf16.mxu0 0
    %7041 = vmatpush2.bf16.msra.mxu0 0
    %7042 = vmatprep.subr.bf16.mxu0 0
    %7043 = vmatpush2.bf16.msra.mxu0 0
    %7044 = vmatprep.subr.bf16.mxu0 0
    %7045 = vmatpush2.bf16.msra.mxu0 0
    %7046 = vmatprep.mubr.bf16.mxu0 0
    %7047 = vmatmul.mubr.bf16.gmra.mxu0 %v1682
    %v7048 = vpop.f32.mrf.mxu0
    %v7049 = vadd.f32 %v7008, %v7048
    %v7050 = vpop.f32.mrf.mxu0
    %v7051 = vpop.f32.mrf.mxu0
    %v7052 = vadd.f32 %v7011, %v7051
    %v7053 = vpop.f32.mrf.mxu0
    %7054 = vdwg.mxu0
    %v7055 = vtanh.pop %v7049
    %v7056 = vtanh.pop %v7052
    %v7057 = vld [vmem:[%s4] sm:$0x1]
    %v7059 = vlaneseq
    %v7060 = vshrl.u32 %v7059, 7
    %v7061 = vsub.s32 0, %v7060
    %v7062 = vrot.slane %v7057, %v7061
    %v7064 = vmul.f32 %v7055, %v7062
    %v7065 = vmul.f32 %v7056, %v7062
    %vm7066 = vcmask 261120
    %v7067 = vsel %vm7066, %v7064, 0.0
    %7068 = vadd.xlane.f32.xlu0 %v7067
    %v7069 = vpop.xlane.xlu0 %7068
    %v7070 = vsel %vm7066, %v7065, 0.0
    %7071 = vadd.xlane.f32.xlu0 %v7070
    %v7072 = vpop.xlane.xlu0 %7071
    %v7073 = vld [vmem:[#allocation5] sm:$0x1]
    %v7075 = vlaneseq
    %v7076 = vshrl.u32 %v7075, 7
    %v7077 = vsub.s32 0, %v7076
    %v7078 = vrot.slane %v7073, %v7077
    %v7080 = vadd.f32 %v7069, %v7078
    %v7081 = vadd.f32 %v7072, %v7078
    %v7082 = vtanh.pop %v7080
    %v7083 = vtanh.pop %v7081
    %s7084 = sadd.s32 0, 0
    %s7085 = smul.u32 %s7084, 16
    %v7086 = vlaneseq
    %v7087 = vshrl.u32 %v7086, 7
    %v7088 = vadd.s32 %v7087, 8
    %v7089 = vstv %s7085
    %v7090 = vadd.s32 %v7089, %v7087
    %v7091 = vadd.s32 %v7089, %v7088
    %s7092 = sld [smem:[#allocation4]]
    %v7093 = vstv %s7092
    %vm7094 = vcmp.lt.s32.totalorder %v7090, %v7093
    %vm7095 = vcmp.lt.s32.totalorder %v7091, %v7093
    %v7096 = vsel %vm7094, 1, 0
    %v7097 = vsel %vm7095, 1, 0
    %v7098 = vcvt.s32.f32 %v7096
    %v7099 = vcvt.s32.f32 %v7097
    %v7100 = vld [vmem:[#allocation2] sm:$0x1]
    %v7101 = vmul.f32 %v7082, %v7098
    %v7102 = vmul.f32 %v7083, %v7099
    %vm7103 = vcmask 7168
    %v7104 = vsel %vm7103, %v7101, 0.0
    %v7105 = vsel %vm7103, %v7102, 0.0
    %v7106 = vadd.f32 %v7104, %v7105
    %7107 = vadd.xlane.f32.xlu0 %v7106
    %v7108 = vpop.xlane.xlu0 %7107
    %v7109 = vrot.slane %v7108, 4
    %v7110 = vadd.f32 %v7108, %v7109
    %v7111 = vrot.slane %v7110, 2
    %v7112 = vadd.f32 %v7110, %v7111
    %v7113 = vrot.slane %v7112, 1
    %v7114 = vadd.f32 %v7112, %v7113
    %s7115 = vtos %v7114
    %v7116 = vstv %s7115
    %v7117 = vadd.f32 %v7100, %v7116
    %vm7118 = vcmask 0
    %7119 = vst.msk [vmem:[#allocation2] sm:$0x1] %vm7118, %v7117
    // Predicated region
    $region26: #{tpu_custom_call.1} parent=1 // pred_check
      %p7120 = pneg %p51
    $region27: #{tpu_custom_call.1} parent=1 // pred_check_branch
      %7122 = sbr.rel (%p7120) target = $region29
    $region28: #{tpu_custom_call.1} parent=1 // pred_region
      %v7123 = vld [vmem:[#allocation2] sm:$0x1]
      %v7124 = vadd.f32 %v7123, 0.0
      %s7125 = vtos %v7124
      %v7126 = vstv %s7125
      %7127 = vst [vmem:[#allocation6] sm:$0xff] %v7126
    $region29: #{tpu_custom_call.1} parent=1 // pred_fallthru
      _
    // Predicated region
    $region30: #{tpu_custom_call.1} parent=1 // pred_check
      _
    $region31: #{tpu_custom_call.1} parent=1 // pred_check_branch
      %7129 = sbr.rel (0) target = $region33
    $region32: #{tpu_custom_call.1} parent=1 // pred_region
      %s7131 = ssub.s32 128, 128
      %7132 = vsyncadd [#allocation7], %s7131
      %s7134 = sshll.u32 [#allocation6], 4
      %s7135 = int_to_ptr.vmem [resolvable:$true] %s7134
      %7137 = dma.vmem_to_hbm [thread:$0]  %s7135, 128, %s6, [#allocation7]
    $region33: #{tpu_custom_call.1} parent=1 // pred_fallthru
      _
    // Predicated region
    $region34: #{tpu_custom_call.1} parent=1 // pred_check
      _
    $region35: #{tpu_custom_call.1} parent=1 // pred_check_branch
      %7139 = sbr.rel (0) target = $region37
    $region36: #{tpu_custom_call.1} parent=1 // pred_region
      %7140 = dma.done [#allocation7], 128
    $region37: #{tpu_custom_call.1} parent=1 // pred_fallthru
      _
    %7141 = vsyncpa [#allocation7], 1

</llo_original>
